<compile_context>
chip_gen: v6e
topology: v6e:2x2x1
jax: 0.10.0
libtpu: 0.0.40
codegen_flags: <defaults>
</compile_context>

<pallas_src>
import jax
import jax.numpy as jnp
import numpy as np
from jax import lax
from jax.experimental import pallas as pl
from jax.experimental.pallas import tpu as pltpu

K = 3       # kernel_size
KK = K * K
PAD = 1     # padding


def _round_up(v, m):
    return (v + m - 1) // m * m


def _pick_tile_rows(H, W):
    """Largest row count per tile with (rows*W) a multiple of 128 and <= 1024
    lanes; fall back to the full image (block == full array dim) otherwise."""
    best = None
    for th in range(1, H + 1):
        if H % th:
            continue
        lanes = th * W
        if lanes > 1024 and best is not None:
            break
        if lanes % 128 == 0 and lanes <= 1024:
            best = th
    return best if best is not None else H


def _make_kernel(W, Cin_p, Hp8, TH, T, max_offset, cd):
    """Kernel for one (batch, output-row-tile) grid step.

    Refs:
      xw_ref   : (1, 3*Cin, (H+2)*W)  width-unrolled, zero-padded input (cd)
      xrows_ref: (1, Cin_p*Hp8, W)    channel/row padded input rows (cd)
      omw_ref  : (27, 9*Cin)          fused offset(+y,+x)/modulator weights (cd)
      omb_ref  : (27, 1)              fused biases (f32)
      regw_ref : (Cout, 9*Cin_p)      regular conv weights, tap-major (cd)
      regb_ref : (Cout, 1)            regular conv bias (f32)
      out_ref  : (1, Cout, T)         output tile (f32)
      om_scr   : (27, T) f32 scratch  clamped offsets (y, x) and 2*sigmoid mask
      slab_ref : (9*Cin_p, T) cd scratch  modulated samples for all taps
    """

    def kernel(xw_ref, xrows_ref, omw_ref, omb_ref, regw_ref, regb_ref,
               out_ref, om_scr, slab_ref):
        tile = pl.program_id(1)
        r0 = tile * TH                      # first output row of this tile

        # ---- fused offset + modulator conv (single matmul) -------------------
        lane0 = tile * T
        if T % 128 == 0:
            lane0 = pl.multiple_of(lane0, 128)
        # rows [r0, r0+TH+2) of the H-padded, width-unrolled input.
        big = xw_ref[0, :, pl.ds(lane0, (TH + 2) * W)]        # (3*Cin, (TH+2)*W)
        # height tap ki is just a lane shift by ki*W of that window.
        patches = jnp.concatenate(
            [big[:, ki * W: ki * W + T] for ki in range(K)], axis=0)  # (9*Cin, T)
        om = jnp.dot(omw_ref[...], patches,
                     preferred_element_type=jnp.float32) + omb_ref[...]  # (27,T) f32
        off = jnp.clip(om[:2 * KK], -max_offset, max_offset)   # rows 0..8 dy, 9..17 dx
        mod = 2.0 * jax.nn.sigmoid(om[2 * KK:])                 # rows 18..26 mask
        om_scr[...] = jnp.concatenate([off, mod], axis=0)

        # ---- coordinate grids (once per tile) --------------------------------
        p_idx = lax.broadcasted_iota(jnp.int32, (1, T), 1).astype(jnp.float32)
        y_loc = jnp.floor(p_idx / float(W))
        xo = p_idx - y_loc * float(W)                            # (1, T)
        yo = y_loc + r0.astype(jnp.float32)                      # (1, T)
        yi = lax.broadcasted_iota(jnp.int32, (Hp8, 1), 0).astype(jnp.float32)
        xi = lax.broadcasted_iota(jnp.int32, (W, 1), 0).astype(jnp.float32)

        xrows = xrows_ref[0]                                     # (Cin_p*Hp8, W) cd

        # ---- per-tap separable bilinear sampling (statically unrolled) -------
        # Python-static loop: all slice starts are compile-time constants, so
        # the scheduler can interleave the 9 sample matmuls / reductions.
        for k in range(KK):
            ki, kj = k // K, k % K
            off_y = om_scr[k:k + 1, :]                           # (1, T)
            off_x = om_scr[KK + k:KK + k + 1, :]                 # (1, T)
            m_k = om_scr[2 * KK + k:2 * KK + k + 1, :]           # (1, T)
            py = yo + float(ki - PAD) + off_y
            px = xo + float(kj - PAD) + off_x
            # zero rows/cols outside the image get zero weight (or hit the
            # zero-padded rows of xrows), matching deform_conv2d zero padding.
            hat_y = jnp.maximum(0.0, 1.0 - jnp.abs(yi - py))     # (Hp8, T)
            hat_x = jnp.maximum(0.0, 1.0 - jnp.abs(xi - px))     # (W, T)
            rowsamp = jnp.dot(xrows, hat_x.astype(cd),
                              preferred_element_type=jnp.float32)  # (Cin_p*Hp8, T)
            samp = jnp.sum(rowsamp.reshape(Cin_p, Hp8, T) * hat_y[None, :, :],
                           axis=1)                                 # (Cin_p, T)
            slab_ref[k * Cin_p:(k + 1) * Cin_p, :] = (samp * m_k).astype(cd)

        # ---- single fused output matmul over all 9 taps ----------------------
        acc = jnp.dot(regw_ref[...], slab_ref[...],
                      preferred_element_type=jnp.float32)          # (Cout, T)
        out_ref[0] = acc + regb_ref[...]

    return kernel


def deformable_conv2d(x, off_w, off_b, mod_w, mod_b, reg_w, reg_b,
                      *, compute_dtype=jnp.bfloat16, tile_rows=None):
    """Forward pass of DeformableConv2d (kernel_size=3, stride=1, padding=1)."""
    B, Cin, H, W = x.shape
    Cout = reg_w.shape[0]
    HW = H * W
    max_offset = max(H, W) / 4.0
    cd = compute_dtype

    TH = _pick_tile_rows(H, W) if tile_rows is None else int(tile_rows)
    assert H % TH == 0, "tile_rows must divide H"
    NT = H // TH
    T = TH * W
    if NT > 1:
        assert T % 128 == 0, "tile lane count must be a multiple of 128"

    Cin_p = _round_up(Cin, 8)     # pad channels so the slab layout is 8-aligned
    Hp8 = _round_up(H, 8)         # pad rows so the (Cin, H, T) regroup is aligned

    x = x.astype(jnp.float32)

    # ---- glue: layout-only reshapes/pads in XLA (no compute) -----------------
    # (B, 3*Cin, (H+2)*W): width-tap unrolled + zero padded; row = c*3 + kj,
    # flat lane = (y+1)*W + x.  Height taps become pure lane shifts in-kernel.
    xw = jnp.pad(x, ((0, 0), (0, 0), (0, 0), (1, 1)))
    xw = jnp.stack([xw[..., kj:kj + W] for kj in range(K)], axis=2)  # (B,Cin,3,H,W)
    xw = jnp.pad(xw, ((0, 0), (0, 0), (0, 0), (1, 1), (0, 0)))       # (B,Cin,3,H+2,W)
    xw = xw.reshape(B, Cin * K, (H + 2) * W).astype(cd)

    # (B, Cin_p*Hp8, W): padded rows for the separable sampling matmul.
    xr = jnp.pad(x, ((0, 0), (0, Cin_p - Cin), (0, Hp8 - H), (0, 0)))
    xr = xr.reshape(B, Cin_p * Hp8, W).astype(cd)

    # Fused offset+modulator weights: rows = [dy taps 0..8, dx taps 0..8, mask],
    # columns ordered (ki, c, kj) to match the in-kernel patch layout.
    def _ocols(w):
        return jnp.transpose(w.astype(jnp.float32), (0, 2, 1, 3)).reshape(
            w.shape[0], K * Cin * K)
    offw_t = _ocols(off_w)
    modw_t = _ocols(mod_w)
    omw = jnp.concatenate([offw_t[0::2], offw_t[1::2], modw_t], axis=0).astype(cd)
    omb = jnp.concatenate([off_b[0::2], off_b[1::2], mod_b]).astype(jnp.float32)
    omb = omb.reshape(3 * KK, 1)

    # Regular conv weights: columns ordered (ki, kj, c_padded) to match the slab.
    regw = jnp.transpose(reg_w.astype(jnp.float32), (0, 2, 3, 1))    # (Cout,3,3,Cin)
    regw = jnp.pad(regw, ((0, 0), (0, 0), (0, 0), (0, Cin_p - Cin)))
    regw = regw.reshape(Cout, KK * Cin_p).astype(cd)
    regb = reg_b.reshape(Cout, 1).astype(jnp.float32)

    kernel = _make_kernel(W, Cin_p, Hp8, TH, T, max_offset, cd)

    # Advisory cost estimate (sampling matmuls dominate).
    itemsize = jnp.dtype(cd).itemsize
    flops = 2 * B * HW * (KK * Cin_p * Hp8 * W          # sampling matmuls
                          + KK * Cin_p * Hp8            # y-reduction
                          + Cout * KK * Cin_p           # output matmul
                          + 3 * KK * KK * Cin)          # offset/mod matmul
    cost = pl.CostEstimate(
        flops=int(flops),
        transcendentals=int(B * KK * HW),
        bytes_accessed=int(xw.size * itemsize + xr.size * itemsize
                           + B * Cout * HW * 4
                           + (omw.size + regw.size) * itemsize))

    out = pl.pallas_call(
        kernel,
        out_shape=jax.ShapeDtypeStruct((B, Cout, HW), jnp.float32),
        grid_spec=pltpu.PrefetchScalarGridSpec(
            num_scalar_prefetch=0,
            grid=(B, NT),
            in_specs=[
                pl.BlockSpec((1, Cin * K, (H + 2) * W), lambda b, t: (b, 0, 0)),
                pl.BlockSpec((1, Cin_p * Hp8, W), lambda b, t: (b, 0, 0)),
                pl.BlockSpec((3 * KK, K * Cin * K), lambda b, t: (0, 0)),
                pl.BlockSpec((3 * KK, 1), lambda b, t: (0, 0)),
                pl.BlockSpec((Cout, KK * Cin_p), lambda b, t: (0, 0)),
                pl.BlockSpec((Cout, 1), lambda b, t: (0, 0)),
            ],
            out_specs=pl.BlockSpec((1, Cout, T), lambda b, t: (b, 0, t)),
            scratch_shapes=[
                pltpu.VMEM((3 * KK, T), jnp.float32),   # offsets + mask
                pltpu.VMEM((KK * Cin_p, T), cd),        # modulated sample slab
            ],
        ),
        compiler_params=pltpu.CompilerParams(
            dimension_semantics=("parallel", "parallel")),
        cost_estimate=cost,
    )(xw, xr, omw, omb, regw, regb)

    return out.reshape(B, Cout, H, W)


# ----------------------------- references ------------------------------------
def _conv3x3_ref(x, w, b):
    return lax.conv_general_dilated(
        x, w, window_strides=(1, 1), padding=((PAD, PAD), (PAD, PAD)),
        dimension_numbers=("NCHW", "OIHW", "NCHW"),
        precision=lax.Precision.HIGHEST) + b.reshape(1, -1, 1, 1)


def _deform_conv2d_numpy_ref(x, off_w, off_b, mod_w, mod_b, reg_w, reg_b):
    """Slow numpy reference mirroring torchvision.ops.deform_conv2d semantics:
    offset channels interleaved (dy, dx) per tap, bilinear zero padding,
    modulated, preceded by the module's clamp and 2*sigmoid."""
    x = np.asarray(x, np.float64)
    off_w = np.asarray(off_w, np.float64); off_b = np.asarray(off_b, np.float64)
    mod_w = np.asarray(mod_w, np.float64); mod_b = np.asarray(mod_b, np.float64)
    reg_w = np.asarray(reg_w, np.float64); reg_b = np.asarray(reg_b, np.float64)
    B, Cin, H, W = x.shape
    Cout = reg_w.shape[0]
    max_off = max(H, W) / 4.0

    def conv3(inp, w, b):
        xp = np.pad(inp, ((0, 0), (0, 0), (1, 1), (1, 1)))
        out = np.zeros((B, w.shape[0], H, W))
        for ki in range(K):
            for kj in range(K):
                out += np.einsum("oc,bchw->bohw", w[:, :, ki, kj],
                                 xp[:, :, ki:ki + H, kj:kj + W])
        return out + b.reshape(1, -1, 1, 1)

    offset = np.clip(conv3(x, off_w, off_b), -max_off, max_off)
    mask = 2.0 / (1.0 + np.exp(-conv3(x, mod_w, mod_b)))

    out = np.zeros((B, Cout, H, W))
    for b in range(B):
        for y in range(H):
            for xq in range(W):
                for k in range(KK):
                    ki, kj = k // K, k % K
                    py = y + ki - PAD + offset[b, 2 * k, y, xq]
                    px = xq + kj - PAD + offset[b, 2 * k + 1, y, xq]
                    y0, x0 = int(np.floor(py)), int(np.floor(px))
                    val = np.zeros(Cin)
                    for dy in (0, 1):
                        for dx in (0, 1):
                            yy, xx = y0 + dy, x0 + dx
                            if 0 <= yy < H and 0 <= xx < W:
                                wgt = (1.0 - abs(py - yy)) * (1.0 - abs(px - xx))
                                if wgt > 0:
                                    val += wgt * x[b, :, yy, xx]
                    out[b, :, y, xq] += mask[b, k, y, xq] * (reg_w[:, :, ki, kj] @ val)
    return out + reg_b.reshape(1, Cout, 1, 1)


if __name__ == "__main__":
    B, Cin, Cout, H, W = 2, 4, 8, 16, 16
    key = jax.random.PRNGKey(0)
    k1, k2, k3, k4, k5, k6, k7 = jax.random.split(key, 7)

    x = jax.random.normal(k1, (B, Cin, H, W), jnp.float32)

    fan_in = Cin * K * K
    bound = 1.0 / np.sqrt(fan_in)
    reg_w = jax.random.uniform(k2, (Cout, Cin, K, K), jnp.float32, -bound, bound)
    reg_b = jax.random.uniform(k3, (Cout,), jnp.float32, -bound, bound)

    # --- test 1: module init state (zero offset/modulator convs) -> must equal
    #             a regular 3x3 conv.  f32 compute, two spatial tiles. ---------
    off_w0 = jnp.zeros((2 * KK, Cin, K, K), jnp.float32)
    off_b0 = jnp.zeros((2 * KK,), jnp.float32)
    mod_w0 = jnp.zeros((KK, Cin, K, K), jnp.float32)
    mod_b0 = jnp.zeros((KK,), jnp.float32)

    out1 = deformable_conv2d(x, off_w0, off_b0, mod_w0, mod_b0, reg_w, reg_b,
                             compute_dtype=jnp.float32, tile_rows=8)
    out1 = jax.block_until_ready(out1)
    assert out1.shape == (B, Cout, H, W) and out1.dtype == jnp.float32
    ref1 = _conv3x3_ref(x, reg_w, reg_b)
    np.testing.assert_allclose(np.asarray(out1), np.asarray(ref1),
                               rtol=1e-4, atol=1e-4)

    # --- test 2: non-trivial learned offsets / modulators, f32 compute --------
    off_w = 0.05 * jax.random.normal(k4, (2 * KK, Cin, K, K), jnp.float32)
    off_b = 0.5 * jax.random.normal(k5, (2 * KK,), jnp.float32)
    mod_w = 0.05 * jax.random.normal(k6, (KK, Cin, K, K), jnp.float32)
    mod_b = 0.5 * jax.random.normal(k7, (KK,), jnp.float32)

    out2 = deformable_conv2d(x, off_w, off_b, mod_w, mod_b, reg_w, reg_b,
                             compute_dtype=jnp.float32, tile_rows=8)
    out2 = jax.block_until_ready(out2)
    ref2 = _deform_conv2d_numpy_ref(x, off_w, off_b, mod_w, mod_b, reg_w, reg_b)
    np.testing.assert_allclose(np.asarray(out2), ref2, rtol=1e-3, atol=1e-3)

    # --- test 3: default bf16 matmul operands (f32 accumulation).  Compare
    #             against a reference built from bf16-rounded inputs/weights;
    #             bf16 operands loosen parity vs a pure-f32 reference. ---------
    out3 = deformable_conv2d(x, off_w0, off_b0, mod_w0, mod_b0, reg_w, reg_b)
    out3 = jax.block_until_ready(out3)
    xr_ = x.astype(jnp.bfloat16).astype(jnp.float32)
    wr_ = reg_w.astype(jnp.bfloat16).astype(jnp.float32)
    ref3 = _conv3x3_ref(xr_, wr_, reg_b)
    np.testing.assert_allclose(np.asarray(out3), np.asarray(ref3),
                               rtol=1e-2, atol=1e-2)

    print("KERNEL_OK")
</pallas_src>

<mosaic_0001>
module attributes {stable_mosaic.version = 11 : i64} {
  func.func @kernel(%arg0: i32, %arg1: i32, %arg2: memref<1x12x288xf32, #tpu.memory_space<vmem>>, %arg3: memref<1x128x16xf32, #tpu.memory_space<vmem>>, %arg4: memref<27x36xf32, #tpu.memory_space<vmem>>, %arg5: memref<27x1xf32, #tpu.memory_space<vmem>>, %arg6: memref<8x72xf32, #tpu.memory_space<vmem>>, %arg7: memref<8x1xf32, #tpu.memory_space<vmem>>, %arg8: memref<1x8x128xf32, #tpu.memory_space<vmem>>, %arg9: memref<27x128xf32, #tpu.memory_space<vmem>>, %arg10: memref<72x128xf32, #tpu.memory_space<vmem>>) attributes {dimension_semantics = [#tpu.dimension_semantics<parallel>, #tpu.dimension_semantics<parallel>], iteration_bounds = array<i64: 2, 2>, scalar_prefetch = 0 : i64, scratch_operands = 2 : i64, tpu.core_type = #tpu.core_type<tc>, window_params = [{transform_indices = @transform_0, window_bounds = array<i64: 1, 12, 288>}, {transform_indices = @transform_1, window_bounds = array<i64: 1, 128, 16>}, {pipeline_mode = #tpu.pipeline_mode<synchronous>, transform_indices = @transform_2, window_bounds = array<i64: 27, 36>}, {pipeline_mode = #tpu.pipeline_mode<synchronous>, transform_indices = @transform_3, window_bounds = array<i64: 27, 1>}, {pipeline_mode = #tpu.pipeline_mode<synchronous>, transform_indices = @transform_4, window_bounds = array<i64: 8, 72>}, {pipeline_mode = #tpu.pipeline_mode<synchronous>, transform_indices = @transform_5, window_bounds = array<i64: 8, 1>}, {transform_indices = @transform_6, window_bounds = array<i64: 1, 8, 128>}]} {
    %c8_i32 = arith.constant 8 : i32
    %0 = arith.muli %arg1, %c8_i32 : i32
    %c128_i32 = arith.constant 128 : i32
    %1 = arith.muli %arg1, %c128_i32 : i32
    %2 = tpu.assume_multiple %1, 128 : i32
    %c0 = arith.constant 0 : index
    %c0_0 = arith.constant 0 : index
    %3 = arith.index_cast %2 : i32 to index
    %4 = vector.load %arg2[%c0, %c0_0, %3] : memref<1x12x288xf32, #tpu.memory_space<vmem>>, vector<1x12x160xf32>
    %5 = vector.shape_cast %4 : vector<1x12x160xf32> to vector<12x160xf32>
    %6 = vector.extract_strided_slice %5 {offsets = [0, 0], sizes = [12, 128], strides = [1, 1]} : vector<12x160xf32> to vector<12x128xf32>
    %7 = vector.extract_strided_slice %5 {offsets = [0, 16], sizes = [12, 128], strides = [1, 1]} : vector<12x160xf32> to vector<12x128xf32>
    %8 = vector.extract_strided_slice %5 {offsets = [0, 32], sizes = [12, 128], strides = [1, 1]} : vector<12x160xf32> to vector<12x128xf32>
    %9 = tpu.concatenate %6, %7, %8 in 0 : vector<12x128xf32>, vector<12x128xf32>, vector<12x128xf32> -> vector<36x128xf32>
    %c0_1 = arith.constant 0 : index
    %c0_2 = arith.constant 0 : index
    %10 = vector.load %arg4[%c0_1, %c0_2] : memref<27x36xf32, #tpu.memory_space<vmem>>, vector<27x36xf32>
    %cst = arith.constant dense<0.000000e+00> : vector<27x128xf32>
    %11 = tpu.matmul %10, %9, %cst {dimension_numbers = #tpu.dot_dimension_numbers<[1], [0], [0], [1], [0, 0, 1, 1], [], []>} : vector<27x36xf32>, vector<36x128xf32>, vector<27x128xf32> -> vector<27x128xf32>
    %c0_3 = arith.constant 0 : index
    %c0_4 = arith.constant 0 : index
    %12 = vector.load %arg5[%c0_3, %c0_4] : memref<27x1xf32, #tpu.memory_space<vmem>>, vector<27x1xf32>
    %13 = vector.broadcast %12 : vector<27x1xf32> to vector<27x128xf32>
    %14 = arith.addf %11, %13 : vector<27x128xf32>
    %15 = vector.extract_strided_slice %14 {offsets = [0, 0], sizes = [18, 128], strides = [1, 1]} : vector<27x128xf32> to vector<18x128xf32>
    %cst_5 = arith.constant -4.000000e+00 : f32
    %cst_6 = arith.constant 4.000000e+00 : f32
    %16 = vector.broadcast %cst_5 : f32 to vector<18x128xf32>
    %17 = arith.maximumf %16, %15 : vector<18x128xf32>
    %18 = vector.broadcast %cst_6 : f32 to vector<18x128xf32>
    %19 = arith.minimumf %18, %17 : vector<18x128xf32>
    %20 = vector.extract_strided_slice %14 {offsets = [18, 0], sizes = [9, 128], strides = [1, 1]} : vector<27x128xf32> to vector<9x128xf32>
    %21 = arith.negf %20 : vector<9x128xf32>
    %22 = math.exp %21 : vector<9x128xf32>
    %cst_7 = arith.constant 1.000000e+00 : f32
    %23 = vector.broadcast %cst_7 : f32 to vector<9x128xf32>
    %24 = arith.addf %23, %22 : vector<9x128xf32>
    %25 = arith.divf %23, %24 : vector<9x128xf32>
    %cst_8 = arith.constant 2.000000e+00 : f32
    %26 = vector.broadcast %cst_8 : f32 to vector<9x128xf32>
    %27 = arith.mulf %26, %25 : vector<9x128xf32>
    %28 = tpu.concatenate %19, %27 in 0 : vector<18x128xf32>, vector<9x128xf32> -> vector<27x128xf32>
    %c0_9 = arith.constant 0 : index
    %c0_10 = arith.constant 0 : index
    %29 = vector.load %arg9[%c0_9, %c0_10] : memref<27x128xf32, #tpu.memory_space<vmem>>, vector<27x128xf32>
    tpu.vector_store %arg9[%c0_9, %c0_10], %28 {strides = array<i32>} : memref<27x128xf32, #tpu.memory_space<vmem>>, vector<27x128xf32>,
    %30 = tpu.iota {dimensions = array<i32: 1>} : vector<1x128xi32>
    %31 = arith.sitofp %30 : vector<1x128xi32> to vector<1x128xf32>
    %cst_11 = arith.constant 1.600000e+01 : f32
    %32 = vector.broadcast %cst_11 : f32 to vector<1x128xf32>
    %33 = arith.divf %31, %32 : vector<1x128xf32>
    %34 = math.floor %33 : vector<1x128xf32>
    %cst_12 = arith.constant 1.600000e+01 : f32
    %35 = vector.broadcast %cst_12 : f32 to vector<1x128xf32>
    %36 = arith.mulf %34, %35 : vector<1x128xf32>
    %37 = arith.subf %31, %36 : vector<1x128xf32>
    %38 = arith.sitofp %0 : i32 to f32
    %39 = vector.broadcast %38 : f32 to vector<1x128xf32>
    %40 = arith.addf %34, %39 : vector<1x128xf32>
    %41 = tpu.iota {dimensions = array<i32: 0>} : vector<16x1xi32>
    %42 = arith.sitofp %41 : vector<16x1xi32> to vector<16x1xf32>
    %43 = tpu.iota {dimensions = array<i32: 0>} : vector<16x1xi32>
    %44 = arith.sitofp %43 : vector<16x1xi32> to vector<16x1xf32>
    %c0_13 = arith.constant 0 : index
    %c0_14 = arith.constant 0 : index
    %c0_15 = arith.constant 0 : index
    %45 = vector.load %arg3[%c0_13, %c0_14, %c0_15] : memref<1x128x16xf32, #tpu.memory_space<vmem>>, vector<1x128x16xf32>
    %46 = vector.shape_cast %45 : vector<1x128x16xf32> to vector<128x16xf32>
    %c0_16 = arith.constant 0 : index
    %c0_17 = arith.constant 0 : index
    %47 = vector.load %arg9[%c0_16, %c0_17] : memref<27x128xf32, #tpu.memory_space<vmem>>, vector<1x128xf32>
    %c9 = arith.constant 9 : index
    %c0_18 = arith.constant 0 : index
    %48 = vector.load %arg9[%c9, %c0_18] : memref<27x128xf32, #tpu.memory_space<vmem>>, vector<1x128xf32>
    %c18 = arith.constant 18 : index
    %c0_19 = arith.constant 0 : index
    %49 = vector.load %arg9[%c18, %c0_19] : memref<27x128xf32, #tpu.memory_space<vmem>>, vector<1x128xf32>
    %cst_20 = arith.constant -1.000000e+00 : f32
    %50 = vector.broadcast %cst_20 : f32 to vector<1x128xf32>
    %51 = arith.addf %40, %50 : vector<1x128xf32>
    %52 = arith.addf %51, %47 : vector<1x128xf32>
    %cst_21 = arith.constant -1.000000e+00 : f32
    %53 = vector.broadcast %cst_21 : f32 to vector<1x128xf32>
    %54 = arith.addf %37, %53 : vector<1x128xf32>
    %55 = arith.addf %54, %48 : vector<1x128xf32>
    %56 = vector.broadcast %42 : vector<16x1xf32> to vector<16x128xf32>
    %57 = vector.broadcast %52 : vector<1x128xf32> to vector<16x128xf32>
    %58 = arith.subf %56, %57 : vector<16x128xf32>
    %59 = math.absf %58 : vector<16x128xf32>
    %cst_22 = arith.constant 1.000000e+00 : f32
    %60 = vector.broadcast %cst_22 : f32 to vector<16x128xf32>
    %61 = arith.subf %60, %59 : vector<16x128xf32>
    %cst_23 = arith.constant 0.000000e+00 : f32
    %62 = vector.broadcast %cst_23 : f32 to vector<16x128xf32>
    %63 = arith.maximumf %62, %61 : vector<16x128xf32>
    %64 = vector.broadcast %44 : vector<16x1xf32> to vector<16x128xf32>
    %65 = vector.broadcast %55 : vector<1x128xf32> to vector<16x128xf32>
    %66 = arith.subf %64, %65 : vector<16x128xf32>
    %67 = math.absf %66 : vector<16x128xf32>
    %cst_24 = arith.constant 1.000000e+00 : f32
    %68 = vector.broadcast %cst_24 : f32 to vector<16x128xf32>
    %69 = arith.subf %68, %67 : vector<16x128xf32>
    %cst_25 = arith.constant 0.000000e+00 : f32
    %70 = vector.broadcast %cst_25 : f32 to vector<16x128xf32>
    %71 = arith.maximumf %70, %69 : vector<16x128xf32>
    %cst_26 = arith.constant dense<0.000000e+00> : vector<128x128xf32>
    %72 = tpu.matmul %46, %71, %cst_26 {dimension_numbers = #tpu.dot_dimension_numbers<[1], [0], [0], [1], [0, 0, 1, 1], [], []>} : vector<128x16xf32>, vector<16x128xf32>, vector<128x128xf32> -> vector<128x128xf32>
    %73 = vector.shape_cast %72 : vector<128x128xf32> to vector<8x16x128xf32>
    %74 = vector.shape_cast %63 : vector<16x128xf32> to vector<1x16x128xf32>
    %75 = vector.broadcast %74 : vector<1x16x128xf32> to vector<8x16x128xf32>
    %76 = arith.mulf %73, %75 : vector<8x16x128xf32>
    %cst_27 = arith.constant dense<0.000000e+00> : vector<8x128xf32>
    %77 = vector.multi_reduction <add>, %76, %cst_27 [1] : vector<8x16x128xf32> to vector<8x128xf32>
    %78 = vector.broadcast %49 : vector<1x128xf32> to vector<8x128xf32>
    %79 = arith.mulf %77, %78 : vector<8x128xf32>
    %c0_28 = arith.constant 0 : index
    %c0_29 = arith.constant 0 : index
    %80 = vector.load %arg10[%c0_28, %c0_29] : memref<72x128xf32, #tpu.memory_space<vmem>>, vector<8x128xf32>
    tpu.vector_store %arg10[%c0_28, %c0_29], %79 {strides = array<i32>} : memref<72x128xf32, #tpu.memory_space<vmem>>, vector<8x128xf32>,
    %c1 = arith.constant 1 : index
    %c0_30 = arith.constant 0 : index
    %81 = vector.load %arg9[%c1, %c0_30] : memref<27x128xf32, #tpu.memory_space<vmem>>, vector<1x128xf32>
    %c10 = arith.constant 10 : index
    %c0_31 = arith.constant 0 : index
    %82 = vector.load %arg9[%c10, %c0_31] : memref<27x128xf32, #tpu.memory_space<vmem>>, vector<1x128xf32>
    %c19 = arith.constant 19 : index
    %c0_32 = arith.constant 0 : index
    %83 = vector.load %arg9[%c19, %c0_32] : memref<27x128xf32, #tpu.memory_space<vmem>>, vector<1x128xf32>
    %cst_33 = arith.constant -1.000000e+00 : f32
    %84 = vector.broadcast %cst_33 : f32 to vector<1x128xf32>
    %85 = arith.addf %40, %84 : vector<1x128xf32>
    %86 = arith.addf %85, %81 : vector<1x128xf32>
    %cst_34 = arith.constant 0.000000e+00 : f32
    %87 = vector.broadcast %cst_34 : f32 to vector<1x128xf32>
    %88 = arith.addf %37, %87 : vector<1x128xf32>
    %89 = arith.addf %88, %82 : vector<1x128xf32>
    %90 = vector.broadcast %42 : vector<16x1xf32> to vector<16x128xf32>
    %91 = vector.broadcast %86 : vector<1x128xf32> to vector<16x128xf32>
    %92 = arith.subf %90, %91 : vector<16x128xf32>
    %93 = math.absf %92 : vector<16x128xf32>
    %cst_35 = arith.constant 1.000000e+00 : f32
    %94 = vector.broadcast %cst_35 : f32 to vector<16x128xf32>
    %95 = arith.subf %94, %93 : vector<16x128xf32>
    %cst_36 = arith.constant 0.000000e+00 : f32
    %96 = vector.broadcast %cst_36 : f32 to vector<16x128xf32>
    %97 = arith.maximumf %96, %95 : vector<16x128xf32>
    %98 = vector.broadcast %44 : vector<16x1xf32> to vector<16x128xf32>
    %99 = vector.broadcast %89 : vector<1x128xf32> to vector<16x128xf32>
    %100 = arith.subf %98, %99 : vector<16x128xf32>
    %101 = math.absf %100 : vector<16x128xf32>
    %cst_37 = arith.constant 1.000000e+00 : f32
    %102 = vector.broadcast %cst_37 : f32 to vector<16x128xf32>
    %103 = arith.subf %102, %101 : vector<16x128xf32>
    %cst_38 = arith.constant 0.000000e+00 : f32
    %104 = vector.broadcast %cst_38 : f32 to vector<16x128xf32>
    %105 = arith.maximumf %104, %103 : vector<16x128xf32>
    %cst_39 = arith.constant dense<0.000000e+00> : vector<128x128xf32>
    %106 = tpu.matmul %46, %105, %cst_39 {dimension_numbers = #tpu.dot_dimension_numbers<[1], [0], [0], [1], [0, 0, 1, 1], [], []>} : vector<128x16xf32>, vector<16x128xf32>, vector<128x128xf32> -> vector<128x128xf32>
    %107 = vector.shape_cast %106 : vector<128x128xf32> to vector<8x16x128xf32>
    %108 = vector.shape_cast %97 : vector<16x128xf32> to vector<1x16x128xf32>
    %109 = vector.broadcast %108 : vector<1x16x128xf32> to vector<8x16x128xf32>
    %110 = arith.mulf %107, %109 : vector<8x16x128xf32>
    %cst_40 = arith.constant dense<0.000000e+00> : vector<8x128xf32>
    %111 = vector.multi_reduction <add>, %110, %cst_40 [1] : vector<8x16x128xf32> to vector<8x128xf32>
    %112 = vector.broadcast %83 : vector<1x128xf32> to vector<8x128xf32>
    %113 = arith.mulf %111, %112 : vector<8x128xf32>
    %c8 = arith.constant 8 : index
    %c0_41 = arith.constant 0 : index
    %114 = vector.load %arg10[%c8, %c0_41] : memref<72x128xf32, #tpu.memory_space<vmem>>, vector<8x128xf32>
    tpu.vector_store %arg10[%c8, %c0_41], %113 {strides = array<i32>} : memref<72x128xf32, #tpu.memory_space<vmem>>, vector<8x128xf32>,
    %c2 = arith.constant 2 : index
    %c0_42 = arith.constant 0 : index
    %115 = vector.load %arg9[%c2, %c0_42] : memref<27x128xf32, #tpu.memory_space<vmem>>, vector<1x128xf32>
    %c11 = arith.constant 11 : index
    %c0_43 = arith.constant 0 : index
    %116 = vector.load %arg9[%c11, %c0_43] : memref<27x128xf32, #tpu.memory_space<vmem>>, vector<1x128xf32>
    %c20 = arith.constant 20 : index
    %c0_44 = arith.constant 0 : index
    %117 = vector.load %arg9[%c20, %c0_44] : memref<27x128xf32, #tpu.memory_space<vmem>>, vector<1x128xf32>
    %cst_45 = arith.constant -1.000000e+00 : f32
    %118 = vector.broadcast %cst_45 : f32 to vector<1x128xf32>
    %119 = arith.addf %40, %118 : vector<1x128xf32>
    %120 = arith.addf %119, %115 : vector<1x128xf32>
    %cst_46 = arith.constant 1.000000e+00 : f32
    %121 = vector.broadcast %cst_46 : f32 to vector<1x128xf32>
    %122 = arith.addf %37, %121 : vector<1x128xf32>
    %123 = arith.addf %122, %116 : vector<1x128xf32>
    %124 = vector.broadcast %42 : vector<16x1xf32> to vector<16x128xf32>
    %125 = vector.broadcast %120 : vector<1x128xf32> to vector<16x128xf32>
    %126 = arith.subf %124, %125 : vector<16x128xf32>
    %127 = math.absf %126 : vector<16x128xf32>
    %cst_47 = arith.constant 1.000000e+00 : f32
    %128 = vector.broadcast %cst_47 : f32 to vector<16x128xf32>
    %129 = arith.subf %128, %127 : vector<16x128xf32>
    %cst_48 = arith.constant 0.000000e+00 : f32
    %130 = vector.broadcast %cst_48 : f32 to vector<16x128xf32>
    %131 = arith.maximumf %130, %129 : vector<16x128xf32>
    %132 = vector.broadcast %44 : vector<16x1xf32> to vector<16x128xf32>
    %133 = vector.broadcast %123 : vector<1x128xf32> to vector<16x128xf32>
    %134 = arith.subf %132, %133 : vector<16x128xf32>
    %135 = math.absf %134 : vector<16x128xf32>
    %cst_49 = arith.constant 1.000000e+00 : f32
    %136 = vector.broadcast %cst_49 : f32 to vector<16x128xf32>
    %137 = arith.subf %136, %135 : vector<16x128xf32>
    %cst_50 = arith.constant 0.000000e+00 : f32
    %138 = vector.broadcast %cst_50 : f32 to vector<16x128xf32>
    %139 = arith.maximumf %138, %137 : vector<16x128xf32>
    %cst_51 = arith.constant dense<0.000000e+00> : vector<128x128xf32>
    %140 = tpu.matmul %46, %139, %cst_51 {dimension_numbers = #tpu.dot_dimension_numbers<[1], [0], [0], [1], [0, 0, 1, 1], [], []>} : vector<128x16xf32>, vector<16x128xf32>, vector<128x128xf32> -> vector<128x128xf32>
    %141 = vector.shape_cast %140 : vector<128x128xf32> to vector<8x16x128xf32>
    %142 = vector.shape_cast %131 : vector<16x128xf32> to vector<1x16x128xf32>
    %143 = vector.broadcast %142 : vector<1x16x128xf32> to vector<8x16x128xf32>
    %144 = arith.mulf %141, %143 : vector<8x16x128xf32>
    %cst_52 = arith.constant dense<0.000000e+00> : vector<8x128xf32>
    %145 = vector.multi_reduction <add>, %144, %cst_52 [1] : vector<8x16x128xf32> to vector<8x128xf32>
    %146 = vector.broadcast %117 : vector<1x128xf32> to vector<8x128xf32>
    %147 = arith.mulf %145, %146 : vector<8x128xf32>
    %c16 = arith.constant 16 : index
    %c0_53 = arith.constant 0 : index
    %148 = vector.load %arg10[%c16, %c0_53] : memref<72x128xf32, #tpu.memory_space<vmem>>, vector<8x128xf32>
    tpu.vector_store %arg10[%c16, %c0_53], %147 {strides = array<i32>} : memref<72x128xf32, #tpu.memory_space<vmem>>, vector<8x128xf32>,
    %c3 = arith.constant 3 : index
    %c0_54 = arith.constant 0 : index
    %149 = vector.load %arg9[%c3, %c0_54] : memref<27x128xf32, #tpu.memory_space<vmem>>, vector<1x128xf32>
    %c12 = arith.constant 12 : index
    %c0_55 = arith.constant 0 : index
    %150 = vector.load %arg9[%c12, %c0_55] : memref<27x128xf32, #tpu.memory_space<vmem>>, vector<1x128xf32>
    %c21 = arith.constant 21 : index
    %c0_56 = arith.constant 0 : index
    %151 = vector.load %arg9[%c21, %c0_56] : memref<27x128xf32, #tpu.memory_space<vmem>>, vector<1x128xf32>
    %cst_57 = arith.constant 0.000000e+00 : f32
    %152 = vector.broadcast %cst_57 : f32 to vector<1x128xf32>
    %153 = arith.addf %40, %152 : vector<1x128xf32>
    %154 = arith.addf %153, %149 : vector<1x128xf32>
    %cst_58 = arith.constant -1.000000e+00 : f32
    %155 = vector.broadcast %cst_58 : f32 to vector<1x128xf32>
    %156 = arith.addf %37, %155 : vector<1x128xf32>
    %157 = arith.addf %156, %150 : vector<1x128xf32>
    %158 = vector.broadcast %42 : vector<16x1xf32> to vector<16x128xf32>
    %159 = vector.broadcast %154 : vector<1x128xf32> to vector<16x128xf32>
    %160 = arith.subf %158, %159 : vector<16x128xf32>
    %161 = math.absf %160 : vector<16x128xf32>
    %cst_59 = arith.constant 1.000000e+00 : f32
    %162 = vector.broadcast %cst_59 : f32 to vector<16x128xf32>
    %163 = arith.subf %162, %161 : vector<16x128xf32>
    %cst_60 = arith.constant 0.000000e+00 : f32
    %164 = vector.broadcast %cst_60 : f32 to vector<16x128xf32>
    %165 = arith.maximumf %164, %163 : vector<16x128xf32>
    %166 = vector.broadcast %44 : vector<16x1xf32> to vector<16x128xf32>
    %167 = vector.broadcast %157 : vector<1x128xf32> to vector<16x128xf32>
    %168 = arith.subf %166, %167 : vector<16x128xf32>
    %169 = math.absf %168 : vector<16x128xf32>
    %cst_61 = arith.constant 1.000000e+00 : f32
    %170 = vector.broadcast %cst_61 : f32 to vector<16x128xf32>
    %171 = arith.subf %170, %169 : vector<16x128xf32>
    %cst_62 = arith.constant 0.000000e+00 : f32
    %172 = vector.broadcast %cst_62 : f32 to vector<16x128xf32>
    %173 = arith.maximumf %172, %171 : vector<16x128xf32>
    %cst_63 = arith.constant dense<0.000000e+00> : vector<128x128xf32>
    %174 = tpu.matmul %46, %173, %cst_63 {dimension_numbers = #tpu.dot_dimension_numbers<[1], [0], [0], [1], [0, 0, 1, 1], [], []>} : vector<128x16xf32>, vector<16x128xf32>, vector<128x128xf32> -> vector<128x128xf32>
    %175 = vector.shape_cast %174 : vector<128x128xf32> to vector<8x16x128xf32>
    %176 = vector.shape_cast %165 : vector<16x128xf32> to vector<1x16x128xf32>
    %177 = vector.broadcast %176 : vector<1x16x128xf32> to vector<8x16x128xf32>
    %178 = arith.mulf %175, %177 : vector<8x16x128xf32>
    %cst_64 = arith.constant dense<0.000000e+00> : vector<8x128xf32>
    %179 = vector.multi_reduction <add>, %178, %cst_64 [1] : vector<8x16x128xf32> to vector<8x128xf32>
    %180 = vector.broadcast %151 : vector<1x128xf32> to vector<8x128xf32>
    %181 = arith.mulf %179, %180 : vector<8x128xf32>
    %c24 = arith.constant 24 : index
    %c0_65 = arith.constant 0 : index
    %182 = vector.load %arg10[%c24, %c0_65] : memref<72x128xf32, #tpu.memory_space<vmem>>, vector<8x128xf32>
    tpu.vector_store %arg10[%c24, %c0_65], %181 {strides = array<i32>} : memref<72x128xf32, #tpu.memory_space<vmem>>, vector<8x128xf32>,
    %c4 = arith.constant 4 : index
    %c0_66 = arith.constant 0 : index
    %183 = vector.load %arg9[%c4, %c0_66] : memref<27x128xf32, #tpu.memory_space<vmem>>, vector<1x128xf32>
    %c13 = arith.constant 13 : index
    %c0_67 = arith.constant 0 : index
    %184 = vector.load %arg9[%c13, %c0_67] : memref<27x128xf32, #tpu.memory_space<vmem>>, vector<1x128xf32>
    %c22 = arith.constant 22 : index
    %c0_68 = arith.constant 0 : index
    %185 = vector.load %arg9[%c22, %c0_68] : memref<27x128xf32, #tpu.memory_space<vmem>>, vector<1x128xf32>
    %cst_69 = arith.constant 0.000000e+00 : f32
    %186 = vector.broadcast %cst_69 : f32 to vector<1x128xf32>
    %187 = arith.addf %40, %186 : vector<1x128xf32>
    %188 = arith.addf %187, %183 : vector<1x128xf32>
    %cst_70 = arith.constant 0.000000e+00 : f32
    %189 = vector.broadcast %cst_70 : f32 to vector<1x128xf32>
    %190 = arith.addf %37, %189 : vector<1x128xf32>
    %191 = arith.addf %190, %184 : vector<1x128xf32>
    %192 = vector.broadcast %42 : vector<16x1xf32> to vector<16x128xf32>
    %193 = vector.broadcast %188 : vector<1x128xf32> to vector<16x128xf32>
    %194 = arith.subf %192, %193 : vector<16x128xf32>
    %195 = math.absf %194 : vector<16x128xf32>
    %cst_71 = arith.constant 1.000000e+00 : f32
    %196 = vector.broadcast %cst_71 : f32 to vector<16x128xf32>
    %197 = arith.subf %196, %195 : vector<16x128xf32>
    %cst_72 = arith.constant 0.000000e+00 : f32
    %198 = vector.broadcast %cst_72 : f32 to vector<16x128xf32>
    %199 = arith.maximumf %198, %197 : vector<16x128xf32>
    %200 = vector.broadcast %44 : vector<16x1xf32> to vector<16x128xf32>
    %201 = vector.broadcast %191 : vector<1x128xf32> to vector<16x128xf32>
    %202 = arith.subf %200, %201 : vector<16x128xf32>
    %203 = math.absf %202 : vector<16x128xf32>
    %cst_73 = arith.constant 1.000000e+00 : f32
    %204 = vector.broadcast %cst_73 : f32 to vector<16x128xf32>
    %205 = arith.subf %204, %203 : vector<16x128xf32>
    %cst_74 = arith.constant 0.000000e+00 : f32
    %206 = vector.broadcast %cst_74 : f32 to vector<16x128xf32>
    %207 = arith.maximumf %206, %205 : vector<16x128xf32>
    %cst_75 = arith.constant dense<0.000000e+00> : vector<128x128xf32>
    %208 = tpu.matmul %46, %207, %cst_75 {dimension_numbers = #tpu.dot_dimension_numbers<[1], [0], [0], [1], [0, 0, 1, 1], [], []>} : vector<128x16xf32>, vector<16x128xf32>, vector<128x128xf32> -> vector<128x128xf32>
    %209 = vector.shape_cast %208 : vector<128x128xf32> to vector<8x16x128xf32>
    %210 = vector.shape_cast %199 : vector<16x128xf32> to vector<1x16x128xf32>
    %211 = vector.broadcast %210 : vector<1x16x128xf32> to vector<8x16x128xf32>
    %212 = arith.mulf %209, %211 : vector<8x16x128xf32>
    %cst_76 = arith.constant dense<0.000000e+00> : vector<8x128xf32>
    %213 = vector.multi_reduction <add>, %212, %cst_76 [1] : vector<8x16x128xf32> to vector<8x128xf32>
    %214 = vector.broadcast %185 : vector<1x128xf32> to vector<8x128xf32>
    %215 = arith.mulf %213, %214 : vector<8x128xf32>
    %c32 = arith.constant 32 : index
    %c0_77 = arith.constant 0 : index
    %216 = vector.load %arg10[%c32, %c0_77] : memref<72x128xf32, #tpu.memory_space<vmem>>, vector<8x128xf32>
    tpu.vector_store %arg10[%c32, %c0_77], %215 {strides = array<i32>} : memref<72x128xf32, #tpu.memory_space<vmem>>, vector<8x128xf32>,
    %c5 = arith.constant 5 : index
    %c0_78 = arith.constant 0 : index
    %217 = vector.load %arg9[%c5, %c0_78] : memref<27x128xf32, #tpu.memory_space<vmem>>, vector<1x128xf32>
    %c14 = arith.constant 14 : index
    %c0_79 = arith.constant 0 : index
    %218 = vector.load %arg9[%c14, %c0_79] : memref<27x128xf32, #tpu.memory_space<vmem>>, vector<1x128xf32>
    %c23 = arith.constant 23 : index
    %c0_80 = arith.constant 0 : index
    %219 = vector.load %arg9[%c23, %c0_80] : memref<27x128xf32, #tpu.memory_space<vmem>>, vector<1x128xf32>
    %cst_81 = arith.constant 0.000000e+00 : f32
    %220 = vector.broadcast %cst_81 : f32 to vector<1x128xf32>
    %221 = arith.addf %40, %220 : vector<1x128xf32>
    %222 = arith.addf %221, %217 : vector<1x128xf32>
    %cst_82 = arith.constant 1.000000e+00 : f32
    %223 = vector.broadcast %cst_82 : f32 to vector<1x128xf32>
    %224 = arith.addf %37, %223 : vector<1x128xf32>
    %225 = arith.addf %224, %218 : vector<1x128xf32>
    %226 = vector.broadcast %42 : vector<16x1xf32> to vector<16x128xf32>
    %227 = vector.broadcast %222 : vector<1x128xf32> to vector<16x128xf32>
    %228 = arith.subf %226, %227 : vector<16x128xf32>
    %229 = math.absf %228 : vector<16x128xf32>
    %cst_83 = arith.constant 1.000000e+00 : f32
    %230 = vector.broadcast %cst_83 : f32 to vector<16x128xf32>
    %231 = arith.subf %230, %229 : vector<16x128xf32>
    %cst_84 = arith.constant 0.000000e+00 : f32
    %232 = vector.broadcast %cst_84 : f32 to vector<16x128xf32>
    %233 = arith.maximumf %232, %231 : vector<16x128xf32>
    %234 = vector.broadcast %44 : vector<16x1xf32> to vector<16x128xf32>
    %235 = vector.broadcast %225 : vector<1x128xf32> to vector<16x128xf32>
    %236 = arith.subf %234, %235 : vector<16x128xf32>
    %237 = math.absf %236 : vector<16x128xf32>
    %cst_85 = arith.constant 1.000000e+00 : f32
    %238 = vector.broadcast %cst_85 : f32 to vector<16x128xf32>
    %239 = arith.subf %238, %237 : vector<16x128xf32>
    %cst_86 = arith.constant 0.000000e+00 : f32
    %240 = vector.broadcast %cst_86 : f32 to vector<16x128xf32>
    %241 = arith.maximumf %240, %239 : vector<16x128xf32>
    %cst_87 = arith.constant dense<0.000000e+00> : vector<128x128xf32>
    %242 = tpu.matmul %46, %241, %cst_87 {dimension_numbers = #tpu.dot_dimension_numbers<[1], [0], [0], [1], [0, 0, 1, 1], [], []>} : vector<128x16xf32>, vector<16x128xf32>, vector<128x128xf32> -> vector<128x128xf32>
    %243 = vector.shape_cast %242 : vector<128x128xf32> to vector<8x16x128xf32>
    %244 = vector.shape_cast %233 : vector<16x128xf32> to vector<1x16x128xf32>
    %245 = vector.broadcast %244 : vector<1x16x128xf32> to vector<8x16x128xf32>
    %246 = arith.mulf %243, %245 : vector<8x16x128xf32>
    %cst_88 = arith.constant dense<0.000000e+00> : vector<8x128xf32>
    %247 = vector.multi_reduction <add>, %246, %cst_88 [1] : vector<8x16x128xf32> to vector<8x128xf32>
    %248 = vector.broadcast %219 : vector<1x128xf32> to vector<8x128xf32>
    %249 = arith.mulf %247, %248 : vector<8x128xf32>
    %c40 = arith.constant 40 : index
    %c0_89 = arith.constant 0 : index
    %250 = vector.load %arg10[%c40, %c0_89] : memref<72x128xf32, #tpu.memory_space<vmem>>, vector<8x128xf32>
    tpu.vector_store %arg10[%c40, %c0_89], %249 {strides = array<i32>} : memref<72x128xf32, #tpu.memory_space<vmem>>, vector<8x128xf32>,
    %c6 = arith.constant 6 : index
    %c0_90 = arith.constant 0 : index
    %251 = vector.load %arg9[%c6, %c0_90] : memref<27x128xf32, #tpu.memory_space<vmem>>, vector<1x128xf32>
    %c15 = arith.constant 15 : index
    %c0_91 = arith.constant 0 : index
    %252 = vector.load %arg9[%c15, %c0_91] : memref<27x128xf32, #tpu.memory_space<vmem>>, vector<1x128xf32>
    %c24_92 = arith.constant 24 : index
    %c0_93 = arith.constant 0 : index
    %253 = vector.load %arg9[%c24_92, %c0_93] : memref<27x128xf32, #tpu.memory_space<vmem>>, vector<1x128xf32>
    %cst_94 = arith.constant 1.000000e+00 : f32
    %254 = vector.broadcast %cst_94 : f32 to vector<1x128xf32>
    %255 = arith.addf %40, %254 : vector<1x128xf32>
    %256 = arith.addf %255, %251 : vector<1x128xf32>
    %cst_95 = arith.constant -1.000000e+00 : f32
    %257 = vector.broadcast %cst_95 : f32 to vector<1x128xf32>
    %258 = arith.addf %37, %257 : vector<1x128xf32>
    %259 = arith.addf %258, %252 : vector<1x128xf32>
    %260 = vector.broadcast %42 : vector<16x1xf32> to vector<16x128xf32>
    %261 = vector.broadcast %256 : vector<1x128xf32> to vector<16x128xf32>
    %262 = arith.subf %260, %261 : vector<16x128xf32>
    %263 = math.absf %262 : vector<16x128xf32>
    %cst_96 = arith.constant 1.000000e+00 : f32
    %264 = vector.broadcast %cst_96 : f32 to vector<16x128xf32>
    %265 = arith.subf %264, %263 : vector<16x128xf32>
    %cst_97 = arith.constant 0.000000e+00 : f32
    %266 = vector.broadcast %cst_97 : f32 to vector<16x128xf32>
    %267 = arith.maximumf %266, %265 : vector<16x128xf32>
    %268 = vector.broadcast %44 : vector<16x1xf32> to vector<16x128xf32>
    %269 = vector.broadcast %259 : vector<1x128xf32> to vector<16x128xf32>
    %270 = arith.subf %268, %269 : vector<16x128xf32>
    %271 = math.absf %270 : vector<16x128xf32>
    %cst_98 = arith.constant 1.000000e+00 : f32
    %272 = vector.broadcast %cst_98 : f32 to vector<16x128xf32>
    %273 = arith.subf %272, %271 : vector<16x128xf32>
    %cst_99 = arith.constant 0.000000e+00 : f32
    %274 = vector.broadcast %cst_99 : f32 to vector<16x128xf32>
    %275 = arith.maximumf %274, %273 : vector<16x128xf32>
    %cst_100 = arith.constant dense<0.000000e+00> : vector<128x128xf32>
    %276 = tpu.matmul %46, %275, %cst_100 {dimension_numbers = #tpu.dot_dimension_numbers<[1], [0], [0], [1], [0, 0, 1, 1], [], []>} : vector<128x16xf32>, vector<16x128xf32>, vector<128x128xf32> -> vector<128x128xf32>
    %277 = vector.shape_cast %276 : vector<128x128xf32> to vector<8x16x128xf32>
    %278 = vector.shape_cast %267 : vector<16x128xf32> to vector<1x16x128xf32>
    %279 = vector.broadcast %278 : vector<1x16x128xf32> to vector<8x16x128xf32>
    %280 = arith.mulf %277, %279 : vector<8x16x128xf32>
    %cst_101 = arith.constant dense<0.000000e+00> : vector<8x128xf32>
    %281 = vector.multi_reduction <add>, %280, %cst_101 [1] : vector<8x16x128xf32> to vector<8x128xf32>
    %282 = vector.broadcast %253 : vector<1x128xf32> to vector<8x128xf32>
    %283 = arith.mulf %281, %282 : vector<8x128xf32>
    %c48 = arith.constant 48 : index
    %c0_102 = arith.constant 0 : index
    %284 = vector.load %arg10[%c48, %c0_102] : memref<72x128xf32, #tpu.memory_space<vmem>>, vector<8x128xf32>
    tpu.vector_store %arg10[%c48, %c0_102], %283 {strides = array<i32>} : memref<72x128xf32, #tpu.memory_space<vmem>>, vector<8x128xf32>,
    %c7 = arith.constant 7 : index
    %c0_103 = arith.constant 0 : index
    %285 = vector.load %arg9[%c7, %c0_103] : memref<27x128xf32, #tpu.memory_space<vmem>>, vector<1x128xf32>
    %c16_104 = arith.constant 16 : index
    %c0_105 = arith.constant 0 : index
    %286 = vector.load %arg9[%c16_104, %c0_105] : memref<27x128xf32, #tpu.memory_space<vmem>>, vector<1x128xf32>
    %c25 = arith.constant 25 : index
    %c0_106 = arith.constant 0 : index
    %287 = vector.load %arg9[%c25, %c0_106] : memref<27x128xf32, #tpu.memory_space<vmem>>, vector<1x128xf32>
    %cst_107 = arith.constant 1.000000e+00 : f32
    %288 = vector.broadcast %cst_107 : f32 to vector<1x128xf32>
    %289 = arith.addf %40, %288 : vector<1x128xf32>
    %290 = arith.addf %289, %285 : vector<1x128xf32>
    %cst_108 = arith.constant 0.000000e+00 : f32
    %291 = vector.broadcast %cst_108 : f32 to vector<1x128xf32>
    %292 = arith.addf %37, %291 : vector<1x128xf32>
    %293 = arith.addf %292, %286 : vector<1x128xf32>
    %294 = vector.broadcast %42 : vector<16x1xf32> to vector<16x128xf32>
    %295 = vector.broadcast %290 : vector<1x128xf32> to vector<16x128xf32>
    %296 = arith.subf %294, %295 : vector<16x128xf32>
    %297 = math.absf %296 : vector<16x128xf32>
    %cst_109 = arith.constant 1.000000e+00 : f32
    %298 = vector.broadcast %cst_109 : f32 to vector<16x128xf32>
    %299 = arith.subf %298, %297 : vector<16x128xf32>
    %cst_110 = arith.constant 0.000000e+00 : f32
    %300 = vector.broadcast %cst_110 : f32 to vector<16x128xf32>
    %301 = arith.maximumf %300, %299 : vector<16x128xf32>
    %302 = vector.broadcast %44 : vector<16x1xf32> to vector<16x128xf32>
    %303 = vector.broadcast %293 : vector<1x128xf32> to vector<16x128xf32>
    %304 = arith.subf %302, %303 : vector<16x128xf32>
    %305 = math.absf %304 : vector<16x128xf32>
    %cst_111 = arith.constant 1.000000e+00 : f32
    %306 = vector.broadcast %cst_111 : f32 to vector<16x128xf32>
    %307 = arith.subf %306, %305 : vector<16x128xf32>
    %cst_112 = arith.constant 0.000000e+00 : f32
    %308 = vector.broadcast %cst_112 : f32 to vector<16x128xf32>
    %309 = arith.maximumf %308, %307 : vector<16x128xf32>
    %cst_113 = arith.constant dense<0.000000e+00> : vector<128x128xf32>
    %310 = tpu.matmul %46, %309, %cst_113 {dimension_numbers = #tpu.dot_dimension_numbers<[1], [0], [0], [1], [0, 0, 1, 1], [], []>} : vector<128x16xf32>, vector<16x128xf32>, vector<128x128xf32> -> vector<128x128xf32>
    %311 = vector.shape_cast %310 : vector<128x128xf32> to vector<8x16x128xf32>
    %312 = vector.shape_cast %301 : vector<16x128xf32> to vector<1x16x128xf32>
    %313 = vector.broadcast %312 : vector<1x16x128xf32> to vector<8x16x128xf32>
    %314 = arith.mulf %311, %313 : vector<8x16x128xf32>
    %cst_114 = arith.constant dense<0.000000e+00> : vector<8x128xf32>
    %315 = vector.multi_reduction <add>, %314, %cst_114 [1] : vector<8x16x128xf32> to vector<8x128xf32>
    %316 = vector.broadcast %287 : vector<1x128xf32> to vector<8x128xf32>
    %317 = arith.mulf %315, %316 : vector<8x128xf32>
    %c56 = arith.constant 56 : index
    %c0_115 = arith.constant 0 : index
    %318 = vector.load %arg10[%c56, %c0_115] : memref<72x128xf32, #tpu.memory_space<vmem>>, vector<8x128xf32>
    tpu.vector_store %arg10[%c56, %c0_115], %317 {strides = array<i32>} : memref<72x128xf32, #tpu.memory_space<vmem>>, vector<8x128xf32>,
    %c8_116 = arith.constant 8 : index
    %c0_117 = arith.constant 0 : index
    %319 = vector.load %arg9[%c8_116, %c0_117] : memref<27x128xf32, #tpu.memory_space<vmem>>, vector<1x128xf32>
    %c17 = arith.constant 17 : index
    %c0_118 = arith.constant 0 : index
    %320 = vector.load %arg9[%c17, %c0_118] : memref<27x128xf32, #tpu.memory_space<vmem>>, vector<1x128xf32>
    %c26 = arith.constant 26 : index
    %c0_119 = arith.constant 0 : index
    %321 = vector.load %arg9[%c26, %c0_119] : memref<27x128xf32, #tpu.memory_space<vmem>>, vector<1x128xf32>
    %cst_120 = arith.constant 1.000000e+00 : f32
    %322 = vector.broadcast %cst_120 : f32 to vector<1x128xf32>
    %323 = arith.addf %40, %322 : vector<1x128xf32>
    %324 = arith.addf %323, %319 : vector<1x128xf32>
    %cst_121 = arith.constant 1.000000e+00 : f32
    %325 = vector.broadcast %cst_121 : f32 to vector<1x128xf32>
    %326 = arith.addf %37, %325 : vector<1x128xf32>
    %327 = arith.addf %326, %320 : vector<1x128xf32>
    %328 = vector.broadcast %42 : vector<16x1xf32> to vector<16x128xf32>
    %329 = vector.broadcast %324 : vector<1x128xf32> to vector<16x128xf32>
    %330 = arith.subf %328, %329 : vector<16x128xf32>
    %331 = math.absf %330 : vector<16x128xf32>
    %cst_122 = arith.constant 1.000000e+00 : f32
    %332 = vector.broadcast %cst_122 : f32 to vector<16x128xf32>
    %333 = arith.subf %332, %331 : vector<16x128xf32>
    %cst_123 = arith.constant 0.000000e+00 : f32
    %334 = vector.broadcast %cst_123 : f32 to vector<16x128xf32>
    %335 = arith.maximumf %334, %333 : vector<16x128xf32>
    %336 = vector.broadcast %44 : vector<16x1xf32> to vector<16x128xf32>
    %337 = vector.broadcast %327 : vector<1x128xf32> to vector<16x128xf32>
    %338 = arith.subf %336, %337 : vector<16x128xf32>
    %339 = math.absf %338 : vector<16x128xf32>
    %cst_124 = arith.constant 1.000000e+00 : f32
    %340 = vector.broadcast %cst_124 : f32 to vector<16x128xf32>
    %341 = arith.subf %340, %339 : vector<16x128xf32>
    %cst_125 = arith.constant 0.000000e+00 : f32
    %342 = vector.broadcast %cst_125 : f32 to vector<16x128xf32>
    %343 = arith.maximumf %342, %341 : vector<16x128xf32>
    %cst_126 = arith.constant dense<0.000000e+00> : vector<128x128xf32>
    %344 = tpu.matmul %46, %343, %cst_126 {dimension_numbers = #tpu.dot_dimension_numbers<[1], [0], [0], [1], [0, 0, 1, 1], [], []>} : vector<128x16xf32>, vector<16x128xf32>, vector<128x128xf32> -> vector<128x128xf32>
    %345 = vector.shape_cast %344 : vector<128x128xf32> to vector<8x16x128xf32>
    %346 = vector.shape_cast %335 : vector<16x128xf32> to vector<1x16x128xf32>
    %347 = vector.broadcast %346 : vector<1x16x128xf32> to vector<8x16x128xf32>
    %348 = arith.mulf %345, %347 : vector<8x16x128xf32>
    %cst_127 = arith.constant dense<0.000000e+00> : vector<8x128xf32>
    %349 = vector.multi_reduction <add>, %348, %cst_127 [1] : vector<8x16x128xf32> to vector<8x128xf32>
    %350 = vector.broadcast %321 : vector<1x128xf32> to vector<8x128xf32>
    %351 = arith.mulf %349, %350 : vector<8x128xf32>
    %c64 = arith.constant 64 : index
    %c0_128 = arith.constant 0 : index
    %352 = vector.load %arg10[%c64, %c0_128] : memref<72x128xf32, #tpu.memory_space<vmem>>, vector<8x128xf32>
    tpu.vector_store %arg10[%c64, %c0_128], %351 {strides = array<i32>} : memref<72x128xf32, #tpu.memory_space<vmem>>, vector<8x128xf32>,
    %c0_129 = arith.constant 0 : index
    %c0_130 = arith.constant 0 : index
    %353 = vector.load %arg6[%c0_129, %c0_130] : memref<8x72xf32, #tpu.memory_space<vmem>>, vector<8x72xf32>
    %c0_131 = arith.constant 0 : index
    %c0_132 = arith.constant 0 : index
    %354 = vector.load %arg10[%c0_131, %c0_132] : memref<72x128xf32, #tpu.memory_space<vmem>>, vector<72x128xf32>
    %cst_133 = arith.constant dense<0.000000e+00> : vector<8x128xf32>
    %355 = tpu.matmul %353, %354, %cst_133 {dimension_numbers = #tpu.dot_dimension_numbers<[1], [0], [0], [1], [0, 0, 1, 1], [], []>} : vector<8x72xf32>, vector<72x128xf32>, vector<8x128xf32> -> vector<8x128xf32>
    %c0_134 = arith.constant 0 : index
    %c0_135 = arith.constant 0 : index
    %356 = vector.load %arg7[%c0_134, %c0_135] : memref<8x1xf32, #tpu.memory_space<vmem>>, vector<8x1xf32>
    %357 = vector.broadcast %356 : vector<8x1xf32> to vector<8x128xf32>
    %358 = arith.addf %355, %357 : vector<8x128xf32>
    %c0_136 = arith.constant 0 : index
    %c0_137 = arith.constant 0 : index
    %c0_138 = arith.constant 0 : index
    %359 = vector.load %arg8[%c0_136, %c0_137, %c0_138] : memref<1x8x128xf32, #tpu.memory_space<vmem>>, vector<1x8x128xf32>
    %360 = vector.shape_cast %359 : vector<1x8x128xf32> to vector<8x128xf32>
    %361 = vector.shape_cast %358 : vector<8x128xf32> to vector<1x8x128xf32>
    tpu.vector_store %arg8[%c0_136, %c0_137, %c0_138], %361 {strides = array<i32>} : memref<1x8x128xf32, #tpu.memory_space<vmem>>, vector<1x8x128xf32>,
    return
  }
  func.func @transform_0(%arg0: i32, %arg1: i32) -> (i32, i32, i32) {
    %c0_i32 = arith.constant 0 : i32
    %c0_i32_0 = arith.constant 0 : i32
    %c0_i32_1 = arith.constant 0 : i32
    return %arg0, %c0_i32, %c0_i32_0 : i32, i32, i32
  }
  func.func @transform_1(%arg0: i32, %arg1: i32) -> (i32, i32, i32) {
    %c0_i32 = arith.constant 0 : i32
    %c0_i32_0 = arith.constant 0 : i32
    %c0_i32_1 = arith.constant 0 : i32
    return %arg0, %c0_i32, %c0_i32_0 : i32, i32, i32
  }
  func.func @transform_2(%arg0: i32, %arg1: i32) -> (i32, i32) {
    %c0_i32 = arith.constant 0 : i32
    %c0_i32_0 = arith.constant 0 : i32
    %c0_i32_1 = arith.constant 0 : i32
    return %c0_i32, %c0_i32_0 : i32, i32
  }
  func.func @transform_3(%arg0: i32, %arg1: i32) -> (i32, i32) {
    %c0_i32 = arith.constant 0 : i32
    %c0_i32_0 = arith.constant 0 : i32
    %c0_i32_1 = arith.constant 0 : i32
    return %c0_i32, %c0_i32_0 : i32, i32
  }
  func.func @transform_4(%arg0: i32, %arg1: i32) -> (i32, i32) {
    %c0_i32 = arith.constant 0 : i32
    %c0_i32_0 = arith.constant 0 : i32
    %c0_i32_1 = arith.constant 0 : i32
    return %c0_i32, %c0_i32_0 : i32, i32
  }
  func.func @transform_5(%arg0: i32, %arg1: i32) -> (i32, i32) {
    %c0_i32 = arith.constant 0 : i32
    %c0_i32_0 = arith.constant 0 : i32
    %c0_i32_1 = arith.constant 0 : i32
    return %c0_i32, %c0_i32_0 : i32, i32
  }
  func.func @transform_6(%arg0: i32, %arg1: i32) -> (i32, i32, i32) {
    %c0_i32 = arith.constant 0 : i32
    %c0_i32_0 = arith.constant 0 : i32
    return %arg0, %c0_i32, %arg1 : i32, i32, i32
  }
}

</mosaic_0001>

<llo_original>
// kernel: tpu_custom_call.1
$region0: #{tpu_custom_call.1}
  #allocation0 [shape = 'u32[]', space=smem, size = 0x4, offset = 0x4, fixed_abs, tag = 'smem constant byte address 0x4 - core index']
  #allocation1 [shape = 'u32[144,128]{1,0:T(1,128)}', space=vmem, size = 0x12000, scoped, tag = 'internal scratch']
  #allocation2 [shape = 'f32[27,128]{1,0:T(8,128)}', space=vmem, size = 0x4000, scoped, tag = 'scratch operand']
  #allocation3 [shape = 'f32[72,128]{1,0:T(8,128)}', space=vmem, size = 0x9000, scoped, tag = 'scratch operand']
  %s0 = inlined_call_operand.vmem [shape: f32[2,12,288], index: 0, kind: input, shape index: {}]
  %s1 = inlined_call_operand.vmem [shape: f32[2,128,16], index: 1, kind: input, shape index: {}]
  %s2 = inlined_call_operand.vmem [shape: f32[27,36], index: 2, kind: input, shape index: {}]
  %s3 = inlined_call_operand.vmem [shape: f32[27,1], index: 3, kind: input, shape index: {}]
  %s4 = inlined_call_operand.vmem [shape: f32[8,72], index: 4, kind: input, shape index: {}]
  %s5 = inlined_call_operand.vmem [shape: f32[8,1], index: 5, kind: input, shape index: {}]
  %s6 = inlined_call_operand.hbm [shape: f32[2,8,256], index: 6, kind: output, shape index: {}]
  %s7 = sld [smem:[#allocation0]]
  $region57: #{tpu_custom_call.1} parent=0
    _
  %s9 = ssub.s32 1, %s7
  %s10 = scalar_select 0, %s9, %s7
  $region1: #{tpu_custom_call.1} parent=0
    #allocation4 [shape = 'u8[8192]{0}', space=vmem, size = 0x2000, scoped, tag = 'output window, operand 0']
    #allocation5 [shape = 's32[2]{0}', space=sflag, size = 0x8, scoped, tag = 'scoped memory for tpu_custom_call.1']
    %11 = vsyncpa [#allocation5], 0
    %s12 = scalar_lea.sflag [#allocation5], 1
    %13 = vsyncpa %s12, 0
    loop: start=0, step=1, limit=6
    $region2: #{tpu_custom_call.1} parent=1 // loop_pre_header
      _
    $region3: #{tpu_custom_call.1} parent=1 // loop_header
      %s15 = sphi 0, %s19
      %p16 = scmp.ge.s32.totalorder %s15, 6
      %s22 = sphi 0, %s34
      %s23 = sphi 0, %s30
      %s24 = sphi 0, %s22
      %s25 = sphi 0, %s23
      %s26 = sphi 0, %s24
      %s27 = sphi 0, %s25
      %s37 = sphi 0, %s39
      %s40 = sphi 0, %s37
      %s41 = sphi 0, %s40
      %s57 = sphi 0, %s41
      %s63 = sphi 0, %s65
      %s66 = sphi 0, %s63
      %s67 = sphi 0, %s66
      %s83 = sphi 0, %s67
      %s87 = sphi 0, %s87
      %s89 = sphi 0, %s87
      %s90 = sphi 0, %s89
      %s104 = sphi 0, %s90
      %s108 = sphi 0, %s108
      %s110 = sphi 0, %s108
      %s111 = sphi 0, %s110
      %s125 = sphi 0, %s111
      %s129 = sphi 0, %s129
      %s131 = sphi 0, %s129
      %s132 = sphi 0, %s131
      %s146 = sphi 0, %s132
      %s150 = sphi 0, %s150
      %s152 = sphi 0, %s150
      %s153 = sphi 0, %s152
      %s167 = sphi 0, %s153
      %s175 = sphi 0, %s177
      %s178 = sphi 0, %s175
      %s179 = sphi 0, %s178
      %s195 = sphi 0, %s179
    $region4: #{tpu_custom_call.1} parent=1 // loop_header_branch
      %18 = sbr.rel (%p16) target = $region8
    $region5: #{tpu_custom_call.1} parent=1 // loop_body
      %s20 = ssub.s32 %s15, 1
      %s21 = ssub.s32 %s15, 2
      %s28 = sadd.s32 1, %s23
      %p29 = scmp.ge.s32.totalorder %s28, 2
      %s30 = scalar_select %p29, 0, %s28
      %s31 = sadd.s32 1, %s22
      %s32 = scalar_select %p29, %s31, %s22
      %p33 = scmp.ge.s32.totalorder %s32, 2
      %s34 = scalar_select %p33, 0, %s32
      %s35 = ssub.s32 %s22, %s34
      %p36 = scmp.eq.s32.totalorder %s35, 0
      %s38 = sadd.s32 %s37, 1
      %s39 = scalar_select %p36, %s37, %s38
      %p42 = pneg %p36
      %p43 = scmp.eq.s32.totalorder %s15, 3
      %p44 = por %p42, %p43
      %p45 = scmp.ne.s32.totalorder %s37, %s40
      %p46 = scmp.eq.s32.totalorder %s15, 0
      %p47 = por %p45, %p46
      %p48 = scmp.ne.s32.totalorder %s37, %s40
      %p49 = scmp.eq.s32.totalorder %s20, 3
      %p50 = por %p48, %p49
      %p51 = scmp.ne.s32.totalorder %s40, %s41
      %p52 = scmp.eq.s32.totalorder %s20, 0
      %p53 = por %p51, %p52
      %p54 = scmp.ne.s32.totalorder %s40, %s41
      %p55 = scmp.eq.s32.totalorder %s21, 3
      %p56 = por %p54, %p55
      %p58 = scmp.ne.s32.totalorder %s41, %s57
      %p59 = scmp.eq.s32.totalorder %s21, 0
      %p60 = por %p58, %p59
      %s61 = ssub.s32 %s22, %s34
      %p62 = scmp.eq.s32.totalorder %s61, 0
      %s64 = sadd.s32 %s63, 1
      %s65 = scalar_select %p62, %s63, %s64
      %p68 = pneg %p62
      %p69 = scmp.eq.s32.totalorder %s15, 3
      %p70 = por %p68, %p69
      %p71 = scmp.ne.s32.totalorder %s63, %s66
      %p72 = scmp.eq.s32.totalorder %s15, 0
      %p73 = por %p71, %p72
      %p74 = scmp.ne.s32.totalorder %s63, %s66
      %p75 = scmp.eq.s32.totalorder %s20, 3
      %p76 = por %p74, %p75
      %p77 = scmp.ne.s32.totalorder %s66, %s67
      %p78 = scmp.eq.s32.totalorder %s20, 0
      %p79 = por %p77, %p78
      %p80 = scmp.ne.s32.totalorder %s66, %s67
      %p81 = scmp.eq.s32.totalorder %s21, 3
      %p82 = por %p80, %p81
      %p84 = scmp.ne.s32.totalorder %s67, %s83
      %p85 = scmp.eq.s32.totalorder %s21, 0
      %p86 = por %p84, %p85
      %s88 = sadd.s32 %s87, 1
      %p91 = scmp.eq.s32.totalorder %s15, 3
      %p92 = scmp.ne.s32.totalorder %s87, %s89
      %p93 = scmp.eq.s32.totalorder %s15, 0
      %p94 = por %p92, %p93
      %p95 = scmp.ne.s32.totalorder %s87, %s89
      %p96 = scmp.eq.s32.totalorder %s20, 3
      %p97 = por %p95, %p96
      %p98 = scmp.ne.s32.totalorder %s89, %s90
      %p99 = scmp.eq.s32.totalorder %s20, 0
      %p100 = por %p98, %p99
      %p101 = scmp.ne.s32.totalorder %s89, %s90
      %p102 = scmp.eq.s32.totalorder %s21, 3
      %p103 = por %p101, %p102
      %p105 = scmp.ne.s32.totalorder %s90, %s104
      %p106 = scmp.eq.s32.totalorder %s21, 0
      %p107 = por %p105, %p106
      %s109 = sadd.s32 %s108, 1
      %p112 = scmp.eq.s32.totalorder %s15, 3
      %p113 = scmp.ne.s32.totalorder %s108, %s110
      %p114 = scmp.eq.s32.totalorder %s15, 0
      %p115 = por %p113, %p114
      %p116 = scmp.ne.s32.totalorder %s108, %s110
      %p117 = scmp.eq.s32.totalorder %s20, 3
      %p118 = por %p116, %p117
      %p119 = scmp.ne.s32.totalorder %s110, %s111
      %p120 = scmp.eq.s32.totalorder %s20, 0
      %p121 = por %p119, %p120
      %p122 = scmp.ne.s32.totalorder %s110, %s111
      %p123 = scmp.eq.s32.totalorder %s21, 3
      %p124 = por %p122, %p123
      %p126 = scmp.ne.s32.totalorder %s111, %s125
      %p127 = scmp.eq.s32.totalorder %s21, 0
      %p128 = por %p126, %p127
      %s130 = sadd.s32 %s129, 1
      %p133 = scmp.eq.s32.totalorder %s15, 3
      %p134 = scmp.ne.s32.totalorder %s129, %s131
      %p135 = scmp.eq.s32.totalorder %s15, 0
      %p136 = por %p134, %p135
      %p137 = scmp.ne.s32.totalorder %s129, %s131
      %p138 = scmp.eq.s32.totalorder %s20, 3
      %p139 = por %p137, %p138
      %p140 = scmp.ne.s32.totalorder %s131, %s132
      %p141 = scmp.eq.s32.totalorder %s20, 0
      %p142 = por %p140, %p141
      %p143 = scmp.ne.s32.totalorder %s131, %s132
      %p144 = scmp.eq.s32.totalorder %s21, 3
      %p145 = por %p143, %p144
      %p147 = scmp.ne.s32.totalorder %s132, %s146
      %p148 = scmp.eq.s32.totalorder %s21, 0
      %p149 = por %p147, %p148
      %s151 = sadd.s32 %s150, 1
      %p154 = scmp.eq.s32.totalorder %s15, 3
      %p155 = scmp.ne.s32.totalorder %s150, %s152
      %p156 = scmp.eq.s32.totalorder %s15, 0
      %p157 = por %p155, %p156
      %p158 = scmp.ne.s32.totalorder %s150, %s152
      %p159 = scmp.eq.s32.totalorder %s20, 3
      %p160 = por %p158, %p159
      %p161 = scmp.ne.s32.totalorder %s152, %s153
      %p162 = scmp.eq.s32.totalorder %s20, 0
      %p163 = por %p161, %p162
      %p164 = scmp.ne.s32.totalorder %s152, %s153
      %p165 = scmp.eq.s32.totalorder %s21, 3
      %p166 = por %p164, %p165
      %p168 = scmp.ne.s32.totalorder %s153, %s167
      %p169 = scmp.eq.s32.totalorder %s21, 0
      %p170 = por %p168, %p169
      %s171 = ssub.s32 %s22, %s34
      %s172 = ssub.s32 %s23, %s30
      %s173 = sor.u32 %s171, %s172
      %p174 = scmp.eq.s32.totalorder %s173, 0
      %s176 = sadd.s32 %s175, 1
      %s177 = scalar_select %p174, %s175, %s176
      %p180 = pneg %p174
      %p181 = scmp.eq.s32.totalorder %s15, 3
      %p182 = por %p180, %p181
      %p183 = scmp.ne.s32.totalorder %s175, %s178
      %p184 = scmp.eq.s32.totalorder %s15, 0
      %p185 = por %p183, %p184
      %p186 = scmp.ne.s32.totalorder %s175, %s178
      %p187 = scmp.eq.s32.totalorder %s20, 3
      %p188 = por %p186, %p187
      %p189 = scmp.ne.s32.totalorder %s178, %s179
      %p190 = scmp.eq.s32.totalorder %s20, 0
      %p191 = por %p189, %p190
      %p192 = scmp.ne.s32.totalorder %s178, %s179
      %p193 = scmp.eq.s32.totalorder %s21, 3
      %p194 = por %p192, %p193
      %p196 = scmp.ne.s32.totalorder %s179, %s195
      %p197 = scmp.eq.s32.totalorder %s21, 0
      %p198 = por %p196, %p197
      %p199 = scmp.le.s32.totalorder 1, %s15
      %p200 = scmp.lt.s32.totalorder %s15, 5
      %p201 = pnand %p199, %p200
      %p202 = pneg %p201
      // Predicated region
      $region9: #{tpu_custom_call.1} parent=5 // pred_check
        _
      $region10: #{tpu_custom_call.1} parent=5 // pred_check_branch
        %204 = sbr.rel (%p201) target = $region12
      $region11: #{tpu_custom_call.1} parent=5 // pred_region
        %s205 = ssub.s32 %s15, 1
        // Predicated region
        $region13: #{tpu_custom_call.1} parent=11 // pred_check
          %p206 = pneg %p100
        $region14: #{tpu_custom_call.1} parent=11 // pred_check_branch
          %208 = sbr.rel (%p206) target = $region16
        $region15: #{tpu_custom_call.1} parent=11 // pred_region
          _
        $region16: #{tpu_custom_call.1} parent=11 // pred_fallthru
          _
        // Predicated region
        $region17: #{tpu_custom_call.1} parent=11 // pred_check
          %p209 = pneg %p121
        $region18: #{tpu_custom_call.1} parent=11 // pred_check_branch
          %211 = sbr.rel (%p209) target = $region20
        $region19: #{tpu_custom_call.1} parent=11 // pred_region
          _
        $region20: #{tpu_custom_call.1} parent=11 // pred_fallthru
          _
        // Predicated region
        $region21: #{tpu_custom_call.1} parent=11 // pred_check
          %p212 = pneg %p142
        $region22: #{tpu_custom_call.1} parent=11 // pred_check_branch
          %214 = sbr.rel (%p212) target = $region24
        $region23: #{tpu_custom_call.1} parent=11 // pred_region
          _
        $region24: #{tpu_custom_call.1} parent=11 // pred_fallthru
          _
        // Predicated region
        $region25: #{tpu_custom_call.1} parent=11 // pred_check
          %p215 = pneg %p163
        $region26: #{tpu_custom_call.1} parent=11 // pred_check_branch
          %217 = sbr.rel (%p215) target = $region28
        $region27: #{tpu_custom_call.1} parent=11 // pred_region
          _
        $region28: #{tpu_custom_call.1} parent=11 // pred_fallthru
          _
      $region12: #{tpu_custom_call.1} parent=5 // pred_fallthru
        _
      %p218 = scmp.lt.s32.totalorder %s15, 4
      // Predicated region
      $region29: #{tpu_custom_call.1} parent=5 // pred_check
        %p219 = pneg %p218
      $region30: #{tpu_custom_call.1} parent=5 // pred_check_branch
        %221 = sbr.rel (%p219) target = $region32
      $region31: #{tpu_custom_call.1} parent=5 // pred_region
        // Predicated region
        $region33: #{tpu_custom_call.1} parent=31 // pred_check
          %p222 = pneg %p47
        $region34: #{tpu_custom_call.1} parent=31 // pred_check_branch
          %224 = sbr.rel (%p222) target = $region36
        $region35: #{tpu_custom_call.1} parent=31 // pred_region
          %p225 = scmp.lt.s32.totalorder %s22, 1
          %s226 = scalar_select %p225, %s22, 1
          %s227 = smul.addr %s226, 6
          %s228 = smul.addr %s227, 8
          %s229 = scalar_lea.vmem %s0, %s228
        $region36: #{tpu_custom_call.1} parent=31 // pred_fallthru
          _
        // Predicated region
        $region37: #{tpu_custom_call.1} parent=31 // pred_check
          %p230 = pneg %p73
        $region38: #{tpu_custom_call.1} parent=31 // pred_check_branch
          %232 = sbr.rel (%p230) target = $region40
        $region39: #{tpu_custom_call.1} parent=31 // pred_region
          %p233 = scmp.lt.s32.totalorder %s22, 1
          %s234 = scalar_select %p233, %s22, 1
          %s235 = smul.addr %s234, 16
          %s236 = smul.addr %s235, 8
          %s237 = scalar_lea.vmem %s1, %s236
        $region40: #{tpu_custom_call.1} parent=31 // pred_fallthru
          _
      $region32: #{tpu_custom_call.1} parent=5 // pred_fallthru
        _
      %p238 = scmp.le.s32.totalorder 1, %s15
      %p239 = scmp.lt.s32.totalorder %s15, 5
      %p240 = pnand %p238, %p239
      %p241 = pneg %p240
      // Predicated region
      $region41: #{tpu_custom_call.1} parent=5 // pred_check
        _
      $region42: #{tpu_custom_call.1} parent=5 // pred_check_branch
        %243 = sbr.rel (%p240) target = $region44
      $region43: #{tpu_custom_call.1} parent=5 // pred_region
        %s244 = ssub.s32 %s15, 1
        %p245 = scmp.lt.s32.totalorder %s24, 1
        %s246 = scalar_select %p245, %s24, 1
        %s247 = smul.addr %s246, 6
        %s248 = smul.addr %s247, 8
        %s249 = scalar_lea.vmem %s0, %s248
        %p250 = pneg %p53
        %p251 = pneg %p50
        %p252 = scmp.lt.s32.totalorder %s24, 1
        %s253 = scalar_select %p252, %s24, 1
        %s254 = smul.addr %s253, 16
        %s255 = smul.addr %s254, 8
        %s256 = scalar_lea.vmem %s1, %s255
        %p257 = pneg %p79
        %p258 = pneg %p76
        %p259 = pneg %p100
        %p260 = pneg %p97
        %p261 = pneg %p121
        %p262 = pneg %p118
        %p263 = pneg %p142
        %p264 = pneg %p139
        %p265 = pneg %p163
        %p266 = pneg %p160
        %p267 = pneg %p191
        %p268 = pneg %p188
        %s269 = sand.u32 %s178, 1
        %s270 = scalar_lea.sflag [#allocation5], %s269
        %s271 = sand.u32 %s178, 1
        %s272 = smul.addr %s271, 8
        %s273 = scalar_lea.vmem [#allocation4], %s272
        %p274 = scmp.lt.s32.totalorder %s24, 1
        %s275 = scalar_select %p274, %s24, 1
        %s276 = smul.addr %s275, 6
        %s277 = smul.addr %s276, 8
        %s278 = scalar_lea.vmem %s0, %s277
        %p279 = scmp.lt.s32.totalorder %s24, 1
        %s280 = scalar_select %p279, %s24, 1
        %s281 = smul.addr %s280, 16
        %s282 = smul.addr %s281, 8
        %s283 = scalar_lea.vmem %s1, %s282
        %s284 = smul.u32 %s25, 8
        %s285 = smul.u32 %s25, 128
        %s286 = sshra.s32 %s285, 7
        %s287 = sand.u32 %s285, 127
        %s288 = smul.addr %s286, 8
        %s289 = scalar_lea.vmem %s278, %s288
        %v290 = vld [vmem:[%s289] sm:$0xff]
        %v291 = vld [vmem:[%s289 + $0x8] sm:$0xff]
        %v292 = vld [vmem:[%s289 + $0x18] sm:$0xf]
        %v293 = vld [vmem:[%s289 + $0x20] sm:$0xf]
        %vm298 = vcmask 1043456
        %v299 = vrot.slane %v290, 4
        %v300 = vrot.slane %v291, 4
        %v301 = vrot.slane %v292, 4
        %v302 = vsel %vm298, %v299, %v301
        %v303 = vrot.slane %v293, 4
        %v304 = vsel %vm298, %v300, %v303
        %305 = vrot.lane.b32.xlu0 %v299, 112
        %v306 = vpop.permute.xlu0 %305
        %307 = vrot.lane.b32.xlu0 %v300, 112
        %v308 = vpop.permute.xlu0 %307
        %309 = vrot.lane.b32.xlu0 %v302, 112
        %v310 = vpop.permute.xlu0 %309
        %311 = vrot.lane.b32.xlu0 %v304, 112
        %v312 = vpop.permute.xlu0 %311
        %vm313 = vcmask 916480
        %v314 = vsel %vm313, %v306, %v308
        %v315 = vsel %vm313, %v310, %v312
        %318 = vrot.lane.b32.xlu0 %v290, 96
        %v319 = vpop.permute.xlu0 %318
        %320 = vrot.lane.b32.xlu0 %v291, 96
        %v321 = vpop.permute.xlu0 %320
        %322 = vrot.lane.b32.xlu0 %v292, 96
        %v323 = vpop.permute.xlu0 %322
        %324 = vrot.lane.b32.xlu0 %v293, 96
        %v325 = vpop.permute.xlu0 %324
        %vm326 = vcmask 785408
        %v327 = vsel %vm326, %v319, %v321
        %v328 = vsel %vm326, %v323, %v325
        %v330 = vsel %vm298, %v292, %v314
        %v331 = vld [vmem:[%s2] sm:$0xff]
        %v332 = vld [vmem:[%s2 + $0x8] sm:$0xff]
        %v333 = vld [vmem:[%s2 + $0x10] sm:$0xff]
        %v334 = vld [vmem:[%s2 + $0x18] sm:$0x7]
        %v335 = vld [vmem:[%s3] sm:$0xff]
        %v336 = vld [vmem:[%s3 + $0x8] sm:$0xff]
        %v337 = vld [vmem:[%s3 + $0x10] sm:$0xff]
        %v338 = vld [vmem:[%s3 + $0x18] sm:$0x7]
        %340 = vset.pattern.permute.xlu0 0
        %341 = vperm.xlu0 %340, %v335
        %v342 = vpop.permute.xlu0 %341
        %345 = vset.pattern.permute.xlu0 0
        %346 = vperm.xlu0 %345, %v336
        %v347 = vpop.permute.xlu0 %346
        %350 = vset.pattern.permute.xlu0 0
        %351 = vperm.xlu0 %350, %v337
        %v352 = vpop.permute.xlu0 %351
        %355 = vset.pattern.permute.xlu0 0
        %356 = vperm.xlu0 %355, %v338
        %v357 = vpop.permute.xlu0 %356
        %vm359 = vcmask 293888
        %v361 = vsel %vm359, %v331, 0
        %v364 = vsel %vm359, %v332, 0
        %v367 = vsel %vm359, %v333, 0
        %v370 = vsel %vm359, %v334, 0
        %v372 = vsel %vm298, %v328, 0
        %374 = vmatprep.subr.mxu0 0.0
        %375 = vmatpush1.msra.mxu0 0.0
        %376 = vmatprep.subr.mxu0 0.0
        %377 = vmatpush1.msra.mxu0 0.0
        %378 = vmatprep.subr.mxu0 0.0
        %379 = vmatpush1.msra.mxu0 0.0
        %380 = vmatprep.subr.mxu0 0.0
        %381 = vmatpush1.msra.mxu0 0.0
        %382 = vmatprep.subr.mxu0 0.0
        %383 = vmatpush1.msra.mxu0 0.0
        %384 = vmatprep.subr.mxu0 0.0
        %385 = vmatpush1.msra.mxu0 0.0
        %386 = vmatprep.subr.mxu0 0.0
        %387 = vmatpush1.msra.mxu0 0.0
        %388 = vmatprep.subr.mxu0 0.0
        %389 = vmatpush1.msra.mxu0 0.0
        %390 = vmatprep.subr.mxu0 0.0
        %391 = vmatpush1.msra.mxu0 0.0
        %392 = vmatprep.subr.mxu0 0.0
        %393 = vmatpush1.msra.mxu0 0.0
        %394 = vmatprep.subr.mxu0 0.0
        %395 = vmatpush1.msra.mxu0 0.0
        %396 = vmatprep.subr.mxu0 0.0
        %397 = vmatpush1.msra.mxu0 %v372
        %398 = vmatprep.subr.mxu0 0.0
        %399 = vmatpush1.msra.mxu0 %v327
        %400 = vmatprep.subr.mxu0 0.0
        %401 = vmatpush1.msra.mxu0 %v315
        %402 = vmatprep.subr.mxu0 0.0
        %403 = vmatpush1.msra.mxu0 %v330
        %404 = vmatprep.subr.mxu0 0.0
        %405 = vmatpush1.msra.mxu0 %v290
        %406 = vmatprep.subr.mxu0 0.0
        %407 = vmatpush2.msra.mxu0 0.0
        %408 = vmatprep.subr.mxu0 0.0
        %409 = vmatpush2.msra.mxu0 0.0
        %410 = vmatprep.subr.mxu0 0.0
        %411 = vmatpush2.msra.mxu0 0.0
        %412 = vmatprep.subr.mxu0 0.0
        %413 = vmatpush2.msra.mxu0 0.0
        %414 = vmatprep.subr.mxu0 0.0
        %415 = vmatpush2.msra.mxu0 0.0
        %416 = vmatprep.subr.mxu0 0.0
        %417 = vmatpush2.msra.mxu0 0.0
        %418 = vmatprep.subr.mxu0 0.0
        %419 = vmatpush2.msra.mxu0 0.0
        %420 = vmatprep.subr.mxu0 0.0
        %421 = vmatpush2.msra.mxu0 0.0
        %422 = vmatprep.subr.mxu0 0.0
        %423 = vmatpush2.msra.mxu0 0.0
        %424 = vmatprep.subr.mxu0 0.0
        %425 = vmatpush2.msra.mxu0 0.0
        %426 = vmatprep.subr.mxu0 0.0
        %427 = vmatpush2.msra.mxu0 0.0
        %428 = vmatprep.subr.mxu0 0.0
        %429 = vmatpush2.msra.mxu0 0.0
        %430 = vmatprep.subr.mxu0 0.0
        %431 = vmatpush2.msra.mxu0 0.0
        %432 = vmatprep.subr.mxu0 0.0
        %433 = vmatpush2.msra.mxu0 0.0
        %434 = vmatprep.subr.mxu0 0.0
        %435 = vmatpush2.msra.mxu0 0.0
        %436 = vmatprep.subr.mxu0 0.0
        %437 = vmatpush2.msra.mxu0 0.0
        %438 = vmatprep.mubr.f32.mxu0 0.0
        %439 = vmatmul.mubr.f32.gmra.mxu0 %v361
        %v440 = vpop.f32.mrf.mxu0
        %v441 = vadd.f32 %v342, %v440
        %v442 = vpop.f32.mrf.mxu0
        %443 = vmatprep.mubr.f32.mxu0 0.0
        %444 = vmatmul.mubr.f32.gmra.mxu0 %v364
        %v445 = vpop.f32.mrf.mxu0
        %v446 = vadd.f32 %v347, %v445
        %v447 = vpop.f32.mrf.mxu0
        %448 = vmatprep.mubr.f32.mxu0 0.0
        %449 = vmatmul.mubr.f32.gmra.mxu0 %v367
        %v450 = vpop.f32.mrf.mxu0
        %v451 = vadd.f32 %v352, %v450
        %v452 = vpop.f32.mrf.mxu0
        %453 = vmatprep.mubr.f32.mxu0 0.0
        %454 = vmatmul.mubr.f32.gmra.mxu0 %v370
        %v455 = vpop.f32.mrf.mxu0
        %v456 = vadd.f32 %v357, %v455
        %v457 = vpop.f32.mrf.mxu0
        %458 = vdwg.mxu0
        %v459 = vmax.f32 %v441, -4.0
        %v460 = vmax.f32 %v446, -4.0
        %v461 = vmax.f32 %v451, -4.0
        %v462 = vmin.f32 %v459, 4.0
        %v463 = vmin.f32 %v460, 4.0
        %v464 = vmin.f32 %v461, 4.0
        %v465 = vxor.u32 %v451, 2147483648
        %v466 = vxor.u32 %v456, 2147483648
        %v467 = vmul.f32 %v465, 1.442695
        %v468 = vpow.pop %v467
        %v469 = vmul.f32 %v466, 1.442695
        %v470 = vpow.pop %v469
        %v471 = vadd.f32 %v468, 1.0
        %v472 = vadd.f32 %v470, 1.0
        %v473 = vrcp.pop %v471
        %v474 = vmul.f32 1.0, %v473
        %v475 = vrcp.pop %v472
        %v476 = vmul.f32 1.0, %v475
        %v477 = vmul.f32 %v474, 2.0
        %v478 = vmul.f32 %v476, 2.0
        %vm479 = vcmask 1041408
        %v480 = vsel %vm479, %v464, %v477
        %481 = vst [vmem:[#allocation2] sm:$0xff] %v462
        %482 = vst [vmem:[#allocation2 + $0x8] sm:$0xff] %v463
        %483 = vst [vmem:[#allocation2 + $0x10] sm:$0xff] %v480
        %484 = vst [vmem:[#allocation2 + $0x18] sm:$0x7] %v478
        %v485 = vlaneseq
        %v486 = vand.u32 %v485, 127
        %v487 = vcvt.s32.f32 %v486
        %v488 = vrcp.pop 16.0
        %v489 = vmul.f32 %v487, %v488
        %v490 = vfloor.f32 %v489
        %v491 = vmul.f32 %v490, 16.0
        %v492 = vsub.f32 %v487, %v491
        %s493 = scvt.s32.f32 %s284
        %v494 = vstv %s493
        %v495 = vadd.f32 %v490, %v494
        %v496 = vlaneseq
        %v497 = vshrl.u32 %v496, 7
        %v498 = vadd.s32 %v497, 8
        %v499 = vcvt.s32.f32 %v497
        %v500 = vcvt.s32.f32 %v498
        %v501 = vld [vmem:[%s283] sm:$0xff]
        %v502 = vld [vmem:[%s283 + $0x8] sm:$0xff]
        %v503 = vld [vmem:[%s283 + $0x10] sm:$0xff]
        %v504 = vld [vmem:[%s283 + $0x18] sm:$0xff]
        %v505 = vld [vmem:[%s283 + $0x20] sm:$0xff]
        %v506 = vld [vmem:[%s283 + $0x28] sm:$0xff]
        %v507 = vld [vmem:[%s283 + $0x30] sm:$0xff]
        %v508 = vld [vmem:[%s283 + $0x38] sm:$0xff]
        %v509 = vld [vmem:[%s283 + $0x40] sm:$0xff]
        %v510 = vld [vmem:[%s283 + $0x48] sm:$0xff]
        %v511 = vld [vmem:[%s283 + $0x50] sm:$0xff]
        %v512 = vld [vmem:[%s283 + $0x58] sm:$0xff]
        %v513 = vld [vmem:[%s283 + $0x60] sm:$0xff]
        %v514 = vld [vmem:[%s283 + $0x68] sm:$0xff]
        %v515 = vld [vmem:[%s283 + $0x70] sm:$0xff]
        %v516 = vld [vmem:[%s283 + $0x78] sm:$0xff]
        %v517 = vld [vmem:[#allocation2] sm:$0x1]
        %v518 = vld [vmem:[#allocation2 + $0x9] sm:$0x1]
        %v519 = vld [vmem:[#allocation2 + $0x12] sm:$0x1]
        %v520 = vadd.f32 %v495, -1.0
        %v521 = vadd.f32 %v520, %v517
        %v522 = vadd.f32 %v492, -1.0
        %v523 = vadd.f32 %v522, %v518
        %v524 = vlaneseq
        %v525 = vshrl.u32 %v524, 7
        %v526 = vsub.s32 0, %v525
        %v527 = vrot.slane %v521, %v526
        %v528 = vsub.f32 %v499, %v527
        %v529 = vsub.f32 %v500, %v527
        %v530 = vand.u32 2147483647, %v528
        %v531 = vand.u32 2147483647, %v529
        %v532 = vsub.f32 1.0, %v530
        %v533 = vsub.f32 1.0, %v531
        %v534 = vmax.f32 %v532, 0.0
        %v535 = vmax.f32 %v533, 0.0
        %v536 = vlaneseq
        %v537 = vshrl.u32 %v536, 7
        %v538 = vsub.s32 0, %v537
        %v539 = vrot.slane %v523, %v538
        %v540 = vsub.f32 %v499, %v539
        %v541 = vsub.f32 %v500, %v539
        %v542 = vand.u32 2147483647, %v540
        %v543 = vand.u32 2147483647, %v541
        %v544 = vsub.f32 1.0, %v542
        %v545 = vsub.f32 1.0, %v543
        %v546 = vmax.f32 %v544, 0.0
        %v547 = vmax.f32 %v545, 0.0
        %vm548 = vcmask 130048
        %v550 = vsel %vm548, %v501, 0
        %v553 = vsel %vm548, %v502, 0
        %v556 = vsel %vm548, %v503, 0
        %v559 = vsel %vm548, %v504, 0
        %v562 = vsel %vm548, %v505, 0
        %v565 = vsel %vm548, %v506, 0
        %v568 = vsel %vm548, %v507, 0
        %v571 = vsel %vm548, %v508, 0
        %v574 = vsel %vm548, %v509, 0
        %v577 = vsel %vm548, %v510, 0
        %v580 = vsel %vm548, %v511, 0
        %v583 = vsel %vm548, %v512, 0
        %v586 = vsel %vm548, %v513, 0
        %v589 = vsel %vm548, %v514, 0
        %v592 = vsel %vm548, %v515, 0
        %v595 = vsel %vm548, %v516, 0
        %597 = vmatprep.subr.mxu0 0.0
        %598 = vmatpush1.msra.mxu0 0.0
        %599 = vmatprep.subr.mxu0 0.0
        %600 = vmatpush1.msra.mxu0 0.0
        %601 = vmatprep.subr.mxu0 0.0
        %602 = vmatpush1.msra.mxu0 0.0
        %603 = vmatprep.subr.mxu0 0.0
        %604 = vmatpush1.msra.mxu0 0.0
        %605 = vmatprep.subr.mxu0 0.0
        %606 = vmatpush1.msra.mxu0 0.0
        %607 = vmatprep.subr.mxu0 0.0
        %608 = vmatpush1.msra.mxu0 0.0
        %609 = vmatprep.subr.mxu0 0.0
        %610 = vmatpush1.msra.mxu0 0.0
        %611 = vmatprep.subr.mxu0 0.0
        %612 = vmatpush1.msra.mxu0 0.0
        %613 = vmatprep.subr.mxu0 0.0
        %614 = vmatpush1.msra.mxu0 0.0
        %615 = vmatprep.subr.mxu0 0.0
        %616 = vmatpush1.msra.mxu0 0.0
        %617 = vmatprep.subr.mxu0 0.0
        %618 = vmatpush1.msra.mxu0 0.0
        %619 = vmatprep.subr.mxu0 0.0
        %620 = vmatpush1.msra.mxu0 0.0
        %621 = vmatprep.subr.mxu0 0.0
        %622 = vmatpush1.msra.mxu0 0.0
        %623 = vmatprep.subr.mxu0 0.0
        %624 = vmatpush1.msra.mxu0 0.0
        %625 = vmatprep.subr.mxu0 0.0
        %626 = vmatpush1.msra.mxu0 %v547
        %627 = vmatprep.subr.mxu0 0.0
        %628 = vmatpush1.msra.mxu0 %v546
        %629 = vmatprep.subr.mxu0 0.0
        %630 = vmatpush2.msra.mxu0 0.0
        %631 = vmatprep.subr.mxu0 0.0
        %632 = vmatpush2.msra.mxu0 0.0
        %633 = vmatprep.subr.mxu0 0.0
        %634 = vmatpush2.msra.mxu0 0.0
        %635 = vmatprep.subr.mxu0 0.0
        %636 = vmatpush2.msra.mxu0 0.0
        %637 = vmatprep.subr.mxu0 0.0
        %638 = vmatpush2.msra.mxu0 0.0
        %639 = vmatprep.subr.mxu0 0.0
        %640 = vmatpush2.msra.mxu0 0.0
        %641 = vmatprep.subr.mxu0 0.0
        %642 = vmatpush2.msra.mxu0 0.0
        %643 = vmatprep.subr.mxu0 0.0
        %644 = vmatpush2.msra.mxu0 0.0
        %645 = vmatprep.subr.mxu0 0.0
        %646 = vmatpush2.msra.mxu0 0.0
        %647 = vmatprep.subr.mxu0 0.0
        %648 = vmatpush2.msra.mxu0 0.0
        %649 = vmatprep.subr.mxu0 0.0
        %650 = vmatpush2.msra.mxu0 0.0
        %651 = vmatprep.subr.mxu0 0.0
        %652 = vmatpush2.msra.mxu0 0.0
        %653 = vmatprep.subr.mxu0 0.0
        %654 = vmatpush2.msra.mxu0 0.0
        %655 = vmatprep.subr.mxu0 0.0
        %656 = vmatpush2.msra.mxu0 0.0
        %657 = vmatprep.subr.mxu0 0.0
        %658 = vmatpush2.msra.mxu0 0.0
        %659 = vmatprep.subr.mxu0 0.0
        %660 = vmatpush2.msra.mxu0 0.0
        %661 = vmatprep.mubr.f32.mxu0 0.0
        %662 = vmatmul.mubr.f32.gmra.mxu0 %v550
        %v663 = vpop.f32.mrf.mxu0
        %v664 = vadd.f32 0.0, %v663
        %v665 = vpop.f32.mrf.mxu0
        %666 = vmatprep.mubr.f32.mxu0 0.0
        %667 = vmatmul.mubr.f32.gmra.mxu0 %v553
        %v668 = vpop.f32.mrf.mxu0
        %v669 = vadd.f32 0.0, %v668
        %v670 = vpop.f32.mrf.mxu0
        %671 = vmatprep.mubr.f32.mxu0 0.0
        %672 = vmatmul.mubr.f32.gmra.mxu0 %v556
        %v673 = vpop.f32.mrf.mxu0
        %v674 = vadd.f32 0.0, %v673
        %v675 = vpop.f32.mrf.mxu0
        %676 = vmatprep.mubr.f32.mxu0 0.0
        %677 = vmatmul.mubr.f32.gmra.mxu0 %v559
        %v678 = vpop.f32.mrf.mxu0
        %v679 = vadd.f32 0.0, %v678
        %v680 = vpop.f32.mrf.mxu0
        %681 = vmatprep.mubr.f32.mxu0 0.0
        %682 = vmatmul.mubr.f32.gmra.mxu0 %v562
        %v683 = vpop.f32.mrf.mxu0
        %v684 = vadd.f32 0.0, %v683
        %v685 = vpop.f32.mrf.mxu0
        %686 = vmatprep.mubr.f32.mxu0 0.0
        %687 = vmatmul.mubr.f32.gmra.mxu0 %v565
        %v688 = vpop.f32.mrf.mxu0
        %v689 = vadd.f32 0.0, %v688
        %v690 = vpop.f32.mrf.mxu0
        %691 = vmatprep.mubr.f32.mxu0 0.0
        %692 = vmatmul.mubr.f32.gmra.mxu0 %v568
        %v693 = vpop.f32.mrf.mxu0
        %v694 = vadd.f32 0.0, %v693
        %v695 = vpop.f32.mrf.mxu0
        %696 = vmatprep.mubr.f32.mxu0 0.0
        %697 = vmatmul.mubr.f32.gmra.mxu0 %v571
        %v698 = vpop.f32.mrf.mxu0
        %v699 = vadd.f32 0.0, %v698
        %v700 = vpop.f32.mrf.mxu0
        %701 = vmatprep.mubr.f32.mxu0 0.0
        %702 = vmatmul.mubr.f32.gmra.mxu0 %v574
        %v703 = vpop.f32.mrf.mxu0
        %v704 = vadd.f32 0.0, %v703
        %v705 = vpop.f32.mrf.mxu0
        %706 = vmatprep.mubr.f32.mxu0 0.0
        %707 = vmatmul.mubr.f32.gmra.mxu0 %v577
        %v708 = vpop.f32.mrf.mxu0
        %v709 = vadd.f32 0.0, %v708
        %v710 = vpop.f32.mrf.mxu0
        %711 = vmatprep.mubr.f32.mxu0 0.0
        %712 = vmatmul.mubr.f32.gmra.mxu0 %v580
        %v713 = vpop.f32.mrf.mxu0
        %v714 = vadd.f32 0.0, %v713
        %v715 = vpop.f32.mrf.mxu0
        %716 = vmatprep.mubr.f32.mxu0 0.0
        %717 = vmatmul.mubr.f32.gmra.mxu0 %v583
        %v718 = vpop.f32.mrf.mxu0
        %v719 = vadd.f32 0.0, %v718
        %v720 = vpop.f32.mrf.mxu0
        %721 = vmatprep.mubr.f32.mxu0 0.0
        %722 = vmatmul.mubr.f32.gmra.mxu0 %v586
        %v723 = vpop.f32.mrf.mxu0
        %v724 = vadd.f32 0.0, %v723
        %v725 = vpop.f32.mrf.mxu0
        %726 = vmatprep.mubr.f32.mxu0 0.0
        %727 = vmatmul.mubr.f32.gmra.mxu0 %v589
        %v728 = vpop.f32.mrf.mxu0
        %v729 = vadd.f32 0.0, %v728
        %v730 = vpop.f32.mrf.mxu0
        %731 = vmatprep.mubr.f32.mxu0 0.0
        %732 = vmatmul.mubr.f32.gmra.mxu0 %v592
        %v733 = vpop.f32.mrf.mxu0
        %v734 = vadd.f32 0.0, %v733
        %v735 = vpop.f32.mrf.mxu0
        %736 = vmatprep.mubr.f32.mxu0 0.0
        %737 = vmatmul.mubr.f32.gmra.mxu0 %v595
        %v738 = vpop.f32.mrf.mxu0
        %v739 = vadd.f32 0.0, %v738
        %v740 = vpop.f32.mrf.mxu0
        %741 = vdwg.mxu0
        %v742 = vmul.f32 %v664, %v534
        %v743 = vmul.f32 %v669, %v535
        %v744 = vmul.f32 %v674, %v534
        %v745 = vmul.f32 %v679, %v535
        %v746 = vmul.f32 %v684, %v534
        %v747 = vmul.f32 %v689, %v535
        %v748 = vmul.f32 %v694, %v534
        %v749 = vmul.f32 %v699, %v535
        %v750 = vmul.f32 %v704, %v534
        %v751 = vmul.f32 %v709, %v535
        %v752 = vmul.f32 %v714, %v534
        %v753 = vmul.f32 %v719, %v535
        %v754 = vmul.f32 %v724, %v534
        %v755 = vmul.f32 %v729, %v535
        %v756 = vmul.f32 %v734, %v534
        %v757 = vmul.f32 %v739, %v535
        %v758 = vadd.f32 %v742, %v743
        %v759 = vrot.slane %v758, 4
        %v760 = vadd.f32 %v758, %v759
        %v761 = vrot.slane %v760, 2
        %v762 = vadd.f32 %v760, %v761
        %v763 = vrot.slane %v762, 1
        %v764 = vadd.f32 %v762, %v763
        %v765 = vadd.f32 %v744, %v745
        %v766 = vrot.slane %v765, 4
        %v767 = vadd.f32 %v765, %v766
        %v768 = vrot.slane %v767, 2
        %v769 = vadd.f32 %v767, %v768
        %v770 = vrot.slane %v769, 1
        %v771 = vadd.f32 %v769, %v770
        %v772 = vadd.f32 %v746, %v747
        %v773 = vrot.slane %v772, 4
        %v774 = vadd.f32 %v772, %v773
        %v775 = vrot.slane %v774, 2
        %v776 = vadd.f32 %v774, %v775
        %v777 = vrot.slane %v776, 1
        %v778 = vadd.f32 %v776, %v777
        %v779 = vadd.f32 %v748, %v749
        %v780 = vrot.slane %v779, 4
        %v781 = vadd.f32 %v779, %v780
        %v782 = vrot.slane %v781, 2
        %v783 = vadd.f32 %v781, %v782
        %v784 = vrot.slane %v783, 1
        %v785 = vadd.f32 %v783, %v784
        %v786 = vadd.f32 %v750, %v751
        %v787 = vrot.slane %v786, 4
        %v788 = vadd.f32 %v786, %v787
        %v789 = vrot.slane %v788, 2
        %v790 = vadd.f32 %v788, %v789
        %v791 = vrot.slane %v790, 1
        %v792 = vadd.f32 %v790, %v791
        %v793 = vadd.f32 %v752, %v753
        %v794 = vrot.slane %v793, 4
        %v795 = vadd.f32 %v793, %v794
        %v796 = vrot.slane %v795, 2
        %v797 = vadd.f32 %v795, %v796
        %v798 = vrot.slane %v797, 1
        %v799 = vadd.f32 %v797, %v798
        %v800 = vadd.f32 %v754, %v755
        %v801 = vrot.slane %v800, 4
        %v802 = vadd.f32 %v800, %v801
        %v803 = vrot.slane %v802, 2
        %v804 = vadd.f32 %v802, %v803
        %v805 = vrot.slane %v804, 1
        %v806 = vadd.f32 %v804, %v805
        %v807 = vadd.f32 %v756, %v757
        %v808 = vrot.slane %v807, 4
        %v809 = vadd.f32 %v807, %v808
        %v810 = vrot.slane %v809, 2
        %v811 = vadd.f32 %v809, %v810
        %v812 = vrot.slane %v811, 1
        %v813 = vadd.f32 %v811, %v812
        %v814 = vlaneseq
        %v815 = vshrl.u32 %v814, 7
        %v816 = vsub.s32 0, %v815
        %v817 = vrot.slane %v519, %v816
        %v818 = vmul.f32 %v764, %v817
        %v819 = vmul.f32 %v771, %v817
        %v820 = vmul.f32 %v778, %v817
        %v821 = vmul.f32 %v785, %v817
        %v822 = vmul.f32 %v792, %v817
        %v823 = vmul.f32 %v799, %v817
        %v824 = vmul.f32 %v806, %v817
        %v825 = vmul.f32 %v813, %v817
        %v834 = vrot.slane %v819, 7
        %vm835 = vcmask 1041409
        %v836 = vsel %vm835, %v834, %v818
        %v837 = vrot.slane %v820, 6
        %vm838 = vcmask 1042434
        %v839 = vsel %vm838, %v837, %v836
        %v840 = vrot.slane %v821, 5
        %vm841 = vcmask 1043459
        %v842 = vsel %vm841, %v840, %v839
        %v843 = vrot.slane %v822, 4
        %vm844 = vcmask 1044484
        %v845 = vsel %vm844, %v843, %v842
        %v846 = vrot.slane %v823, 3
        %vm847 = vcmask 1045509
        %v848 = vsel %vm847, %v846, %v845
        %v849 = vrot.slane %v824, 2
        %vm850 = vcmask 1046534
        %v851 = vsel %vm850, %v849, %v848
        %v852 = vrot.slane %v825, 1
        %vm853 = vcmask 1047559
        %v854 = vsel %vm853, %v852, %v851
        %856 = vst [vmem:[#allocation3] sm:$0xff] %v854
        %v857 = vld [vmem:[#allocation2 + $0x1] sm:$0x1]
        %v858 = vld [vmem:[#allocation2 + $0xa] sm:$0x1]
        %v859 = vld [vmem:[#allocation2 + $0x13] sm:$0x1]
        %v860 = vadd.f32 %v520, %v857
        %v861 = vadd.f32 %v492, 0.0
        %v862 = vadd.f32 %v861, %v858
        %v863 = vlaneseq
        %v864 = vshrl.u32 %v863, 7
        %v865 = vsub.s32 0, %v864
        %v866 = vrot.slane %v860, %v865
        %v867 = vsub.f32 %v499, %v866
        %v868 = vsub.f32 %v500, %v866
        %v869 = vand.u32 2147483647, %v867
        %v870 = vand.u32 2147483647, %v868
        %v871 = vsub.f32 1.0, %v869
        %v872 = vsub.f32 1.0, %v870
        %v873 = vmax.f32 %v871, 0.0
        %v874 = vmax.f32 %v872, 0.0
        %v875 = vlaneseq
        %v876 = vshrl.u32 %v875, 7
        %v877 = vsub.s32 0, %v876
        %v878 = vrot.slane %v862, %v877
        %v879 = vsub.f32 %v499, %v878
        %v880 = vsub.f32 %v500, %v878
        %v881 = vand.u32 2147483647, %v879
        %v882 = vand.u32 2147483647, %v880
        %v883 = vsub.f32 1.0, %v881
        %v884 = vsub.f32 1.0, %v882
        %v885 = vmax.f32 %v883, 0.0
        %v886 = vmax.f32 %v884, 0.0
        %887 = vmatprep.subr.mxu0 0.0
        %888 = vmatpush1.msra.mxu0 0.0
        %889 = vmatprep.subr.mxu0 0.0
        %890 = vmatpush1.msra.mxu0 0.0
        %891 = vmatprep.subr.mxu0 0.0
        %892 = vmatpush1.msra.mxu0 0.0
        %893 = vmatprep.subr.mxu0 0.0
        %894 = vmatpush1.msra.mxu0 0.0
        %895 = vmatprep.subr.mxu0 0.0
        %896 = vmatpush1.msra.mxu0 0.0
        %897 = vmatprep.subr.mxu0 0.0
        %898 = vmatpush1.msra.mxu0 0.0
        %899 = vmatprep.subr.mxu0 0.0
        %900 = vmatpush1.msra.mxu0 0.0
        %901 = vmatprep.subr.mxu0 0.0
        %902 = vmatpush1.msra.mxu0 0.0
        %903 = vmatprep.subr.mxu0 0.0
        %904 = vmatpush1.msra.mxu0 0.0
        %905 = vmatprep.subr.mxu0 0.0
        %906 = vmatpush1.msra.mxu0 0.0
        %907 = vmatprep.subr.mxu0 0.0
        %908 = vmatpush1.msra.mxu0 0.0
        %909 = vmatprep.subr.mxu0 0.0
        %910 = vmatpush1.msra.mxu0 0.0
        %911 = vmatprep.subr.mxu0 0.0
        %912 = vmatpush1.msra.mxu0 0.0
        %913 = vmatprep.subr.mxu0 0.0
        %914 = vmatpush1.msra.mxu0 0.0
        %915 = vmatprep.subr.mxu0 0.0
        %916 = vmatpush1.msra.mxu0 %v886
        %917 = vmatprep.subr.mxu0 0.0
        %918 = vmatpush1.msra.mxu0 %v885
        %919 = vmatprep.subr.mxu0 0.0
        %920 = vmatpush2.msra.mxu0 0.0
        %921 = vmatprep.subr.mxu0 0.0
        %922 = vmatpush2.msra.mxu0 0.0
        %923 = vmatprep.subr.mxu0 0.0
        %924 = vmatpush2.msra.mxu0 0.0
        %925 = vmatprep.subr.mxu0 0.0
        %926 = vmatpush2.msra.mxu0 0.0
        %927 = vmatprep.subr.mxu0 0.0
        %928 = vmatpush2.msra.mxu0 0.0
        %929 = vmatprep.subr.mxu0 0.0
        %930 = vmatpush2.msra.mxu0 0.0
        %931 = vmatprep.subr.mxu0 0.0
        %932 = vmatpush2.msra.mxu0 0.0
        %933 = vmatprep.subr.mxu0 0.0
        %934 = vmatpush2.msra.mxu0 0.0
        %935 = vmatprep.subr.mxu0 0.0
        %936 = vmatpush2.msra.mxu0 0.0
        %937 = vmatprep.subr.mxu0 0.0
        %938 = vmatpush2.msra.mxu0 0.0
        %939 = vmatprep.subr.mxu0 0.0
        %940 = vmatpush2.msra.mxu0 0.0
        %941 = vmatprep.subr.mxu0 0.0
        %942 = vmatpush2.msra.mxu0 0.0
        %943 = vmatprep.subr.mxu0 0.0
        %944 = vmatpush2.msra.mxu0 0.0
        %945 = vmatprep.subr.mxu0 0.0
        %946 = vmatpush2.msra.mxu0 0.0
        %947 = vmatprep.subr.mxu0 0.0
        %948 = vmatpush2.msra.mxu0 0.0
        %949 = vmatprep.subr.mxu0 0.0
        %950 = vmatpush2.msra.mxu0 0.0
        %951 = vmatprep.mubr.f32.mxu0 0.0
        %952 = vmatmul.mubr.f32.gmra.mxu0 %v550
        %v953 = vpop.f32.mrf.mxu0
        %v954 = vadd.f32 0.0, %v953
        %v955 = vpop.f32.mrf.mxu0
        %956 = vmatprep.mubr.f32.mxu0 0.0
        %957 = vmatmul.mubr.f32.gmra.mxu0 %v553
        %v958 = vpop.f32.mrf.mxu0
        %v959 = vadd.f32 0.0, %v958
        %v960 = vpop.f32.mrf.mxu0
        %961 = vmatprep.mubr.f32.mxu0 0.0
        %962 = vmatmul.mubr.f32.gmra.mxu0 %v556
        %v963 = vpop.f32.mrf.mxu0
        %v964 = vadd.f32 0.0, %v963
        %v965 = vpop.f32.mrf.mxu0
        %966 = vmatprep.mubr.f32.mxu0 0.0
        %967 = vmatmul.mubr.f32.gmra.mxu0 %v559
        %v968 = vpop.f32.mrf.mxu0
        %v969 = vadd.f32 0.0, %v968
        %v970 = vpop.f32.mrf.mxu0
        %971 = vmatprep.mubr.f32.mxu0 0.0
        %972 = vmatmul.mubr.f32.gmra.mxu0 %v562
        %v973 = vpop.f32.mrf.mxu0
        %v974 = vadd.f32 0.0, %v973
        %v975 = vpop.f32.mrf.mxu0
        %976 = vmatprep.mubr.f32.mxu0 0.0
        %977 = vmatmul.mubr.f32.gmra.mxu0 %v565
        %v978 = vpop.f32.mrf.mxu0
        %v979 = vadd.f32 0.0, %v978
        %v980 = vpop.f32.mrf.mxu0
        %981 = vmatprep.mubr.f32.mxu0 0.0
        %982 = vmatmul.mubr.f32.gmra.mxu0 %v568
        %v983 = vpop.f32.mrf.mxu0
        %v984 = vadd.f32 0.0, %v983
        %v985 = vpop.f32.mrf.mxu0
        %986 = vmatprep.mubr.f32.mxu0 0.0
        %987 = vmatmul.mubr.f32.gmra.mxu0 %v571
        %v988 = vpop.f32.mrf.mxu0
        %v989 = vadd.f32 0.0, %v988
        %v990 = vpop.f32.mrf.mxu0
        %991 = vmatprep.mubr.f32.mxu0 0.0
        %992 = vmatmul.mubr.f32.gmra.mxu0 %v574
        %v993 = vpop.f32.mrf.mxu0
        %v994 = vadd.f32 0.0, %v993
        %v995 = vpop.f32.mrf.mxu0
        %996 = vmatprep.mubr.f32.mxu0 0.0
        %997 = vmatmul.mubr.f32.gmra.mxu0 %v577
        %v998 = vpop.f32.mrf.mxu0
        %v999 = vadd.f32 0.0, %v998
        %v1000 = vpop.f32.mrf.mxu0
        %1001 = vmatprep.mubr.f32.mxu0 0.0
        %1002 = vmatmul.mubr.f32.gmra.mxu0 %v580
        %v1003 = vpop.f32.mrf.mxu0
        %v1004 = vadd.f32 0.0, %v1003
        %v1005 = vpop.f32.mrf.mxu0
        %1006 = vmatprep.mubr.f32.mxu0 0.0
        %1007 = vmatmul.mubr.f32.gmra.mxu0 %v583
        %v1008 = vpop.f32.mrf.mxu0
        %v1009 = vadd.f32 0.0, %v1008
        %v1010 = vpop.f32.mrf.mxu0
        %1011 = vmatprep.mubr.f32.mxu0 0.0
        %1012 = vmatmul.mubr.f32.gmra.mxu0 %v586
        %v1013 = vpop.f32.mrf.mxu0
        %v1014 = vadd.f32 0.0, %v1013
        %v1015 = vpop.f32.mrf.mxu0
        %1016 = vmatprep.mubr.f32.mxu0 0.0
        %1017 = vmatmul.mubr.f32.gmra.mxu0 %v589
        %v1018 = vpop.f32.mrf.mxu0
        %v1019 = vadd.f32 0.0, %v1018
        %v1020 = vpop.f32.mrf.mxu0
        %1021 = vmatprep.mubr.f32.mxu0 0.0
        %1022 = vmatmul.mubr.f32.gmra.mxu0 %v592
        %v1023 = vpop.f32.mrf.mxu0
        %v1024 = vadd.f32 0.0, %v1023
        %v1025 = vpop.f32.mrf.mxu0
        %1026 = vmatprep.mubr.f32.mxu0 0.0
        %1027 = vmatmul.mubr.f32.gmra.mxu0 %v595
        %v1028 = vpop.f32.mrf.mxu0
        %v1029 = vadd.f32 0.0, %v1028
        %v1030 = vpop.f32.mrf.mxu0
        %1031 = vdwg.mxu0
        %v1032 = vmul.f32 %v954, %v873
        %v1033 = vmul.f32 %v959, %v874
        %v1034 = vmul.f32 %v964, %v873
        %v1035 = vmul.f32 %v969, %v874
        %v1036 = vmul.f32 %v974, %v873
        %v1037 = vmul.f32 %v979, %v874
        %v1038 = vmul.f32 %v984, %v873
        %v1039 = vmul.f32 %v989, %v874
        %v1040 = vmul.f32 %v994, %v873
        %v1041 = vmul.f32 %v999, %v874
        %v1042 = vmul.f32 %v1004, %v873
        %v1043 = vmul.f32 %v1009, %v874
        %v1044 = vmul.f32 %v1014, %v873
        %v1045 = vmul.f32 %v1019, %v874
        %v1046 = vmul.f32 %v1024, %v873
        %v1047 = vmul.f32 %v1029, %v874
        %v1048 = vadd.f32 %v1032, %v1033
        %v1049 = vrot.slane %v1048, 4
        %v1050 = vadd.f32 %v1048, %v1049
        %v1051 = vrot.slane %v1050, 2
        %v1052 = vadd.f32 %v1050, %v1051
        %v1053 = vrot.slane %v1052, 1
        %v1054 = vadd.f32 %v1052, %v1053
        %v1055 = vadd.f32 %v1034, %v1035
        %v1056 = vrot.slane %v1055, 4
        %v1057 = vadd.f32 %v1055, %v1056
        %v1058 = vrot.slane %v1057, 2
        %v1059 = vadd.f32 %v1057, %v1058
        %v1060 = vrot.slane %v1059, 1
        %v1061 = vadd.f32 %v1059, %v1060
        %v1062 = vadd.f32 %v1036, %v1037
        %v1063 = vrot.slane %v1062, 4
        %v1064 = vadd.f32 %v1062, %v1063
        %v1065 = vrot.slane %v1064, 2
        %v1066 = vadd.f32 %v1064, %v1065
        %v1067 = vrot.slane %v1066, 1
        %v1068 = vadd.f32 %v1066, %v1067
        %v1069 = vadd.f32 %v1038, %v1039
        %v1070 = vrot.slane %v1069, 4
        %v1071 = vadd.f32 %v1069, %v1070
        %v1072 = vrot.slane %v1071, 2
        %v1073 = vadd.f32 %v1071, %v1072
        %v1074 = vrot.slane %v1073, 1
        %v1075 = vadd.f32 %v1073, %v1074
        %v1076 = vadd.f32 %v1040, %v1041
        %v1077 = vrot.slane %v1076, 4
        %v1078 = vadd.f32 %v1076, %v1077
        %v1079 = vrot.slane %v1078, 2
        %v1080 = vadd.f32 %v1078, %v1079
        %v1081 = vrot.slane %v1080, 1
        %v1082 = vadd.f32 %v1080, %v1081
        %v1083 = vadd.f32 %v1042, %v1043
        %v1084 = vrot.slane %v1083, 4
        %v1085 = vadd.f32 %v1083, %v1084
        %v1086 = vrot.slane %v1085, 2
        %v1087 = vadd.f32 %v1085, %v1086
        %v1088 = vrot.slane %v1087, 1
        %v1089 = vadd.f32 %v1087, %v1088
        %v1090 = vadd.f32 %v1044, %v1045
        %v1091 = vrot.slane %v1090, 4
        %v1092 = vadd.f32 %v1090, %v1091
        %v1093 = vrot.slane %v1092, 2
        %v1094 = vadd.f32 %v1092, %v1093
        %v1095 = vrot.slane %v1094, 1
        %v1096 = vadd.f32 %v1094, %v1095
        %v1097 = vadd.f32 %v1046, %v1047
        %v1098 = vrot.slane %v1097, 4
        %v1099 = vadd.f32 %v1097, %v1098
        %v1100 = vrot.slane %v1099, 2
        %v1101 = vadd.f32 %v1099, %v1100
        %v1102 = vrot.slane %v1101, 1
        %v1103 = vadd.f32 %v1101, %v1102
        %v1104 = vlaneseq
        %v1105 = vshrl.u32 %v1104, 7
        %v1106 = vsub.s32 0, %v1105
        %v1107 = vrot.slane %v859, %v1106
        %v1108 = vmul.f32 %v1054, %v1107
        %v1109 = vmul.f32 %v1061, %v1107
        %v1110 = vmul.f32 %v1068, %v1107
        %v1111 = vmul.f32 %v1075, %v1107
        %v1112 = vmul.f32 %v1082, %v1107
        %v1113 = vmul.f32 %v1089, %v1107
        %v1114 = vmul.f32 %v1096, %v1107
        %v1115 = vmul.f32 %v1103, %v1107
        %v1124 = vrot.slane %v1109, 7
        %v1125 = vsel %vm835, %v1124, %v1108
        %v1126 = vrot.slane %v1110, 6
        %v1127 = vsel %vm838, %v1126, %v1125
        %v1128 = vrot.slane %v1111, 5
        %v1129 = vsel %vm841, %v1128, %v1127
        %v1130 = vrot.slane %v1112, 4
        %v1131 = vsel %vm844, %v1130, %v1129
        %v1132 = vrot.slane %v1113, 3
        %v1133 = vsel %vm847, %v1132, %v1131
        %v1134 = vrot.slane %v1114, 2
        %v1135 = vsel %vm850, %v1134, %v1133
        %v1136 = vrot.slane %v1115, 1
        %v1137 = vsel %vm853, %v1136, %v1135
        %1139 = vst [vmem:[#allocation3 + $0x8] sm:$0xff] %v1137
        %v1140 = vld [vmem:[#allocation2 + $0x2] sm:$0x1]
        %v1141 = vld [vmem:[#allocation2 + $0xb] sm:$0x1]
        %v1142 = vld [vmem:[#allocation2 + $0x14] sm:$0x1]
        %v1143 = vadd.f32 %v520, %v1140
        %v1144 = vadd.f32 %v492, 1.0
        %v1145 = vadd.f32 %v1144, %v1141
        %v1146 = vlaneseq
        %v1147 = vshrl.u32 %v1146, 7
        %v1148 = vsub.s32 0, %v1147
        %v1149 = vrot.slane %v1143, %v1148
        %v1150 = vsub.f32 %v499, %v1149
        %v1151 = vsub.f32 %v500, %v1149
        %v1152 = vand.u32 2147483647, %v1150
        %v1153 = vand.u32 2147483647, %v1151
        %v1154 = vsub.f32 1.0, %v1152
        %v1155 = vsub.f32 1.0, %v1153
        %v1156 = vmax.f32 %v1154, 0.0
        %v1157 = vmax.f32 %v1155, 0.0
        %v1158 = vlaneseq
        %v1159 = vshrl.u32 %v1158, 7
        %v1160 = vsub.s32 0, %v1159
        %v1161 = vrot.slane %v1145, %v1160
        %v1162 = vsub.f32 %v499, %v1161
        %v1163 = vsub.f32 %v500, %v1161
        %v1164 = vand.u32 2147483647, %v1162
        %v1165 = vand.u32 2147483647, %v1163
        %v1166 = vsub.f32 1.0, %v1164
        %v1167 = vsub.f32 1.0, %v1165
        %v1168 = vmax.f32 %v1166, 0.0
        %v1169 = vmax.f32 %v1167, 0.0
        %1170 = vmatprep.subr.mxu0 0.0
        %1171 = vmatpush1.msra.mxu0 0.0
        %1172 = vmatprep.subr.mxu0 0.0
        %1173 = vmatpush1.msra.mxu0 0.0
        %1174 = vmatprep.subr.mxu0 0.0
        %1175 = vmatpush1.msra.mxu0 0.0
        %1176 = vmatprep.subr.mxu0 0.0
        %1177 = vmatpush1.msra.mxu0 0.0
        %1178 = vmatprep.subr.mxu0 0.0
        %1179 = vmatpush1.msra.mxu0 0.0
        %1180 = vmatprep.subr.mxu0 0.0
        %1181 = vmatpush1.msra.mxu0 0.0
        %1182 = vmatprep.subr.mxu0 0.0
        %1183 = vmatpush1.msra.mxu0 0.0
        %1184 = vmatprep.subr.mxu0 0.0
        %1185 = vmatpush1.msra.mxu0 0.0
        %1186 = vmatprep.subr.mxu0 0.0
        %1187 = vmatpush1.msra.mxu0 0.0
        %1188 = vmatprep.subr.mxu0 0.0
        %1189 = vmatpush1.msra.mxu0 0.0
        %1190 = vmatprep.subr.mxu0 0.0
        %1191 = vmatpush1.msra.mxu0 0.0
        %1192 = vmatprep.subr.mxu0 0.0
        %1193 = vmatpush1.msra.mxu0 0.0
        %1194 = vmatprep.subr.mxu0 0.0
        %1195 = vmatpush1.msra.mxu0 0.0
        %1196 = vmatprep.subr.mxu0 0.0
        %1197 = vmatpush1.msra.mxu0 0.0
        %1198 = vmatprep.subr.mxu0 0.0
        %1199 = vmatpush1.msra.mxu0 %v1169
        %1200 = vmatprep.subr.mxu0 0.0
        %1201 = vmatpush1.msra.mxu0 %v1168
        %1202 = vmatprep.subr.mxu0 0.0
        %1203 = vmatpush2.msra.mxu0 0.0
        %1204 = vmatprep.subr.mxu0 0.0
        %1205 = vmatpush2.msra.mxu0 0.0
        %1206 = vmatprep.subr.mxu0 0.0
        %1207 = vmatpush2.msra.mxu0 0.0
        %1208 = vmatprep.subr.mxu0 0.0
        %1209 = vmatpush2.msra.mxu0 0.0
        %1210 = vmatprep.subr.mxu0 0.0
        %1211 = vmatpush2.msra.mxu0 0.0
        %1212 = vmatprep.subr.mxu0 0.0
        %1213 = vmatpush2.msra.mxu0 0.0
        %1214 = vmatprep.subr.mxu0 0.0
        %1215 = vmatpush2.msra.mxu0 0.0
        %1216 = vmatprep.subr.mxu0 0.0
        %1217 = vmatpush2.msra.mxu0 0.0
        %1218 = vmatprep.subr.mxu0 0.0
        %1219 = vmatpush2.msra.mxu0 0.0
        %1220 = vmatprep.subr.mxu0 0.0
        %1221 = vmatpush2.msra.mxu0 0.0
        %1222 = vmatprep.subr.mxu0 0.0
        %1223 = vmatpush2.msra.mxu0 0.0
        %1224 = vmatprep.subr.mxu0 0.0
        %1225 = vmatpush2.msra.mxu0 0.0
        %1226 = vmatprep.subr.mxu0 0.0
        %1227 = vmatpush2.msra.mxu0 0.0
        %1228 = vmatprep.subr.mxu0 0.0
        %1229 = vmatpush2.msra.mxu0 0.0
        %1230 = vmatprep.subr.mxu0 0.0
        %1231 = vmatpush2.msra.mxu0 0.0
        %1232 = vmatprep.subr.mxu0 0.0
        %1233 = vmatpush2.msra.mxu0 0.0
        %1234 = vmatprep.mubr.f32.mxu0 0.0
        %1235 = vmatmul.mubr.f32.gmra.mxu0 %v550
        %v1236 = vpop.f32.mrf.mxu0
        %v1237 = vadd.f32 0.0, %v1236
        %v1238 = vpop.f32.mrf.mxu0
        %1239 = vmatprep.mubr.f32.mxu0 0.0
        %1240 = vmatmul.mubr.f32.gmra.mxu0 %v553
        %v1241 = vpop.f32.mrf.mxu0
        %v1242 = vadd.f32 0.0, %v1241
        %v1243 = vpop.f32.mrf.mxu0
        %1244 = vmatprep.mubr.f32.mxu0 0.0
        %1245 = vmatmul.mubr.f32.gmra.mxu0 %v556
        %v1246 = vpop.f32.mrf.mxu0
        %v1247 = vadd.f32 0.0, %v1246
        %v1248 = vpop.f32.mrf.mxu0
        %1249 = vmatprep.mubr.f32.mxu0 0.0
        %1250 = vmatmul.mubr.f32.gmra.mxu0 %v559
        %v1251 = vpop.f32.mrf.mxu0
        %v1252 = vadd.f32 0.0, %v1251
        %v1253 = vpop.f32.mrf.mxu0
        %1254 = vmatprep.mubr.f32.mxu0 0.0
        %1255 = vmatmul.mubr.f32.gmra.mxu0 %v562
        %v1256 = vpop.f32.mrf.mxu0
        %v1257 = vadd.f32 0.0, %v1256
        %v1258 = vpop.f32.mrf.mxu0
        %1259 = vmatprep.mubr.f32.mxu0 0.0
        %1260 = vmatmul.mubr.f32.gmra.mxu0 %v565
        %v1261 = vpop.f32.mrf.mxu0
        %v1262 = vadd.f32 0.0, %v1261
        %v1263 = vpop.f32.mrf.mxu0
        %1264 = vmatprep.mubr.f32.mxu0 0.0
        %1265 = vmatmul.mubr.f32.gmra.mxu0 %v568
        %v1266 = vpop.f32.mrf.mxu0
        %v1267 = vadd.f32 0.0, %v1266
        %v1268 = vpop.f32.mrf.mxu0
        %1269 = vmatprep.mubr.f32.mxu0 0.0
        %1270 = vmatmul.mubr.f32.gmra.mxu0 %v571
        %v1271 = vpop.f32.mrf.mxu0
        %v1272 = vadd.f32 0.0, %v1271
        %v1273 = vpop.f32.mrf.mxu0
        %1274 = vmatprep.mubr.f32.mxu0 0.0
        %1275 = vmatmul.mubr.f32.gmra.mxu0 %v574
        %v1276 = vpop.f32.mrf.mxu0
        %v1277 = vadd.f32 0.0, %v1276
        %v1278 = vpop.f32.mrf.mxu0
        %1279 = vmatprep.mubr.f32.mxu0 0.0
        %1280 = vmatmul.mubr.f32.gmra.mxu0 %v577
        %v1281 = vpop.f32.mrf.mxu0
        %v1282 = vadd.f32 0.0, %v1281
        %v1283 = vpop.f32.mrf.mxu0
        %1284 = vmatprep.mubr.f32.mxu0 0.0
        %1285 = vmatmul.mubr.f32.gmra.mxu0 %v580
        %v1286 = vpop.f32.mrf.mxu0
        %v1287 = vadd.f32 0.0, %v1286
        %v1288 = vpop.f32.mrf.mxu0
        %1289 = vmatprep.mubr.f32.mxu0 0.0
        %1290 = vmatmul.mubr.f32.gmra.mxu0 %v583
        %v1291 = vpop.f32.mrf.mxu0
        %v1292 = vadd.f32 0.0, %v1291
        %v1293 = vpop.f32.mrf.mxu0
        %1294 = vmatprep.mubr.f32.mxu0 0.0
        %1295 = vmatmul.mubr.f32.gmra.mxu0 %v586
        %v1296 = vpop.f32.mrf.mxu0
        %v1297 = vadd.f32 0.0, %v1296
        %v1298 = vpop.f32.mrf.mxu0
        %1299 = vmatprep.mubr.f32.mxu0 0.0
        %1300 = vmatmul.mubr.f32.gmra.mxu0 %v589
        %v1301 = vpop.f32.mrf.mxu0
        %v1302 = vadd.f32 0.0, %v1301
        %v1303 = vpop.f32.mrf.mxu0
        %1304 = vmatprep.mubr.f32.mxu0 0.0
        %1305 = vmatmul.mubr.f32.gmra.mxu0 %v592
        %v1306 = vpop.f32.mrf.mxu0
        %v1307 = vadd.f32 0.0, %v1306
        %v1308 = vpop.f32.mrf.mxu0
        %1309 = vmatprep.mubr.f32.mxu0 0.0
        %1310 = vmatmul.mubr.f32.gmra.mxu0 %v595
        %v1311 = vpop.f32.mrf.mxu0
        %v1312 = vadd.f32 0.0, %v1311
        %v1313 = vpop.f32.mrf.mxu0
        %1314 = vdwg.mxu0
        %v1315 = vmul.f32 %v1237, %v1156
        %v1316 = vmul.f32 %v1242, %v1157
        %v1317 = vmul.f32 %v1247, %v1156
        %v1318 = vmul.f32 %v1252, %v1157
        %v1319 = vmul.f32 %v1257, %v1156
        %v1320 = vmul.f32 %v1262, %v1157
        %v1321 = vmul.f32 %v1267, %v1156
        %v1322 = vmul.f32 %v1272, %v1157
        %v1323 = vmul.f32 %v1277, %v1156
        %v1324 = vmul.f32 %v1282, %v1157
        %v1325 = vmul.f32 %v1287, %v1156
        %v1326 = vmul.f32 %v1292, %v1157
        %v1327 = vmul.f32 %v1297, %v1156
        %v1328 = vmul.f32 %v1302, %v1157
        %v1329 = vmul.f32 %v1307, %v1156
        %v1330 = vmul.f32 %v1312, %v1157
        %v1331 = vadd.f32 %v1315, %v1316
        %v1332 = vrot.slane %v1331, 4
        %v1333 = vadd.f32 %v1331, %v1332
        %v1334 = vrot.slane %v1333, 2
        %v1335 = vadd.f32 %v1333, %v1334
        %v1336 = vrot.slane %v1335, 1
        %v1337 = vadd.f32 %v1335, %v1336
        %v1338 = vadd.f32 %v1317, %v1318
        %v1339 = vrot.slane %v1338, 4
        %v1340 = vadd.f32 %v1338, %v1339
        %v1341 = vrot.slane %v1340, 2
        %v1342 = vadd.f32 %v1340, %v1341
        %v1343 = vrot.slane %v1342, 1
        %v1344 = vadd.f32 %v1342, %v1343
        %v1345 = vadd.f32 %v1319, %v1320
        %v1346 = vrot.slane %v1345, 4
        %v1347 = vadd.f32 %v1345, %v1346
        %v1348 = vrot.slane %v1347, 2
        %v1349 = vadd.f32 %v1347, %v1348
        %v1350 = vrot.slane %v1349, 1
        %v1351 = vadd.f32 %v1349, %v1350
        %v1352 = vadd.f32 %v1321, %v1322
        %v1353 = vrot.slane %v1352, 4
        %v1354 = vadd.f32 %v1352, %v1353
        %v1355 = vrot.slane %v1354, 2
        %v1356 = vadd.f32 %v1354, %v1355
        %v1357 = vrot.slane %v1356, 1
        %v1358 = vadd.f32 %v1356, %v1357
        %v1359 = vadd.f32 %v1323, %v1324
        %v1360 = vrot.slane %v1359, 4
        %v1361 = vadd.f32 %v1359, %v1360
        %v1362 = vrot.slane %v1361, 2
        %v1363 = vadd.f32 %v1361, %v1362
        %v1364 = vrot.slane %v1363, 1
        %v1365 = vadd.f32 %v1363, %v1364
        %v1366 = vadd.f32 %v1325, %v1326
        %v1367 = vrot.slane %v1366, 4
        %v1368 = vadd.f32 %v1366, %v1367
        %v1369 = vrot.slane %v1368, 2
        %v1370 = vadd.f32 %v1368, %v1369
        %v1371 = vrot.slane %v1370, 1
        %v1372 = vadd.f32 %v1370, %v1371
        %v1373 = vadd.f32 %v1327, %v1328
        %v1374 = vrot.slane %v1373, 4
        %v1375 = vadd.f32 %v1373, %v1374
        %v1376 = vrot.slane %v1375, 2
        %v1377 = vadd.f32 %v1375, %v1376
        %v1378 = vrot.slane %v1377, 1
        %v1379 = vadd.f32 %v1377, %v1378
        %v1380 = vadd.f32 %v1329, %v1330
        %v1381 = vrot.slane %v1380, 4
        %v1382 = vadd.f32 %v1380, %v1381
        %v1383 = vrot.slane %v1382, 2
        %v1384 = vadd.f32 %v1382, %v1383
        %v1385 = vrot.slane %v1384, 1
        %v1386 = vadd.f32 %v1384, %v1385
        %v1387 = vlaneseq
        %v1388 = vshrl.u32 %v1387, 7
        %v1389 = vsub.s32 0, %v1388
        %v1390 = vrot.slane %v1142, %v1389
        %v1391 = vmul.f32 %v1337, %v1390
        %v1392 = vmul.f32 %v1344, %v1390
        %v1393 = vmul.f32 %v1351, %v1390
        %v1394 = vmul.f32 %v1358, %v1390
        %v1395 = vmul.f32 %v1365, %v1390
        %v1396 = vmul.f32 %v1372, %v1390
        %v1397 = vmul.f32 %v1379, %v1390
        %v1398 = vmul.f32 %v1386, %v1390
        %v1407 = vrot.slane %v1392, 7
        %v1408 = vsel %vm835, %v1407, %v1391
        %v1409 = vrot.slane %v1393, 6
        %v1410 = vsel %vm838, %v1409, %v1408
        %v1411 = vrot.slane %v1394, 5
        %v1412 = vsel %vm841, %v1411, %v1410
        %v1413 = vrot.slane %v1395, 4
        %v1414 = vsel %vm844, %v1413, %v1412
        %v1415 = vrot.slane %v1396, 3
        %v1416 = vsel %vm847, %v1415, %v1414
        %v1417 = vrot.slane %v1397, 2
        %v1418 = vsel %vm850, %v1417, %v1416
        %v1419 = vrot.slane %v1398, 1
        %v1420 = vsel %vm853, %v1419, %v1418
        %1422 = vst [vmem:[#allocation3 + $0x10] sm:$0xff] %v1420
        %v1423 = vld [vmem:[#allocation2 + $0x3] sm:$0x1]
        %v1424 = vld [vmem:[#allocation2 + $0xc] sm:$0x1]
        %v1425 = vld [vmem:[#allocation2 + $0x15] sm:$0x1]
        %v1426 = vadd.f32 %v495, 0.0
        %v1427 = vadd.f32 %v1426, %v1423
        %v1428 = vadd.f32 %v522, %v1424
        %v1429 = vlaneseq
        %v1430 = vshrl.u32 %v1429, 7
        %v1431 = vsub.s32 0, %v1430
        %v1432 = vrot.slane %v1427, %v1431
        %v1433 = vsub.f32 %v499, %v1432
        %v1434 = vsub.f32 %v500, %v1432
        %v1435 = vand.u32 2147483647, %v1433
        %v1436 = vand.u32 2147483647, %v1434
        %v1437 = vsub.f32 1.0, %v1435
        %v1438 = vsub.f32 1.0, %v1436
        %v1439 = vmax.f32 %v1437, 0.0
        %v1440 = vmax.f32 %v1438, 0.0
        %v1441 = vlaneseq
        %v1442 = vshrl.u32 %v1441, 7
        %v1443 = vsub.s32 0, %v1442
        %v1444 = vrot.slane %v1428, %v1443
        %v1445 = vsub.f32 %v499, %v1444
        %v1446 = vsub.f32 %v500, %v1444
        %v1447 = vand.u32 2147483647, %v1445
        %v1448 = vand.u32 2147483647, %v1446
        %v1449 = vsub.f32 1.0, %v1447
        %v1450 = vsub.f32 1.0, %v1448
        %v1451 = vmax.f32 %v1449, 0.0
        %v1452 = vmax.f32 %v1450, 0.0
        %1453 = vmatprep.subr.mxu0 0.0
        %1454 = vmatpush1.msra.mxu0 0.0
        %1455 = vmatprep.subr.mxu0 0.0
        %1456 = vmatpush1.msra.mxu0 0.0
        %1457 = vmatprep.subr.mxu0 0.0
        %1458 = vmatpush1.msra.mxu0 0.0
        %1459 = vmatprep.subr.mxu0 0.0
        %1460 = vmatpush1.msra.mxu0 0.0
        %1461 = vmatprep.subr.mxu0 0.0
        %1462 = vmatpush1.msra.mxu0 0.0
        %1463 = vmatprep.subr.mxu0 0.0
        %1464 = vmatpush1.msra.mxu0 0.0
        %1465 = vmatprep.subr.mxu0 0.0
        %1466 = vmatpush1.msra.mxu0 0.0
        %1467 = vmatprep.subr.mxu0 0.0
        %1468 = vmatpush1.msra.mxu0 0.0
        %1469 = vmatprep.subr.mxu0 0.0
        %1470 = vmatpush1.msra.mxu0 0.0
        %1471 = vmatprep.subr.mxu0 0.0
        %1472 = vmatpush1.msra.mxu0 0.0
        %1473 = vmatprep.subr.mxu0 0.0
        %1474 = vmatpush1.msra.mxu0 0.0
        %1475 = vmatprep.subr.mxu0 0.0
        %1476 = vmatpush1.msra.mxu0 0.0
        %1477 = vmatprep.subr.mxu0 0.0
        %1478 = vmatpush1.msra.mxu0 0.0
        %1479 = vmatprep.subr.mxu0 0.0
        %1480 = vmatpush1.msra.mxu0 0.0
        %1481 = vmatprep.subr.mxu0 0.0
        %1482 = vmatpush1.msra.mxu0 %v1452
        %1483 = vmatprep.subr.mxu0 0.0
        %1484 = vmatpush1.msra.mxu0 %v1451
        %1485 = vmatprep.subr.mxu0 0.0
        %1486 = vmatpush2.msra.mxu0 0.0
        %1487 = vmatprep.subr.mxu0 0.0
        %1488 = vmatpush2.msra.mxu0 0.0
        %1489 = vmatprep.subr.mxu0 0.0
        %1490 = vmatpush2.msra.mxu0 0.0
        %1491 = vmatprep.subr.mxu0 0.0
        %1492 = vmatpush2.msra.mxu0 0.0
        %1493 = vmatprep.subr.mxu0 0.0
        %1494 = vmatpush2.msra.mxu0 0.0
        %1495 = vmatprep.subr.mxu0 0.0
        %1496 = vmatpush2.msra.mxu0 0.0
        %1497 = vmatprep.subr.mxu0 0.0
        %1498 = vmatpush2.msra.mxu0 0.0
        %1499 = vmatprep.subr.mxu0 0.0
        %1500 = vmatpush2.msra.mxu0 0.0
        %1501 = vmatprep.subr.mxu0 0.0
        %1502 = vmatpush2.msra.mxu0 0.0
        %1503 = vmatprep.subr.mxu0 0.0
        %1504 = vmatpush2.msra.mxu0 0.0
        %1505 = vmatprep.subr.mxu0 0.0
        %1506 = vmatpush2.msra.mxu0 0.0
        %1507 = vmatprep.subr.mxu0 0.0
        %1508 = vmatpush2.msra.mxu0 0.0
        %1509 = vmatprep.subr.mxu0 0.0
        %1510 = vmatpush2.msra.mxu0 0.0
        %1511 = vmatprep.subr.mxu0 0.0
        %1512 = vmatpush2.msra.mxu0 0.0
        %1513 = vmatprep.subr.mxu0 0.0
        %1514 = vmatpush2.msra.mxu0 0.0
        %1515 = vmatprep.subr.mxu0 0.0
        %1516 = vmatpush2.msra.mxu0 0.0
        %1517 = vmatprep.mubr.f32.mxu0 0.0
        %1518 = vmatmul.mubr.f32.gmra.mxu0 %v550
        %v1519 = vpop.f32.mrf.mxu0
        %v1520 = vadd.f32 0.0, %v1519
        %v1521 = vpop.f32.mrf.mxu0
        %1522 = vmatprep.mubr.f32.mxu0 0.0
        %1523 = vmatmul.mubr.f32.gmra.mxu0 %v553
        %v1524 = vpop.f32.mrf.mxu0
        %v1525 = vadd.f32 0.0, %v1524
        %v1526 = vpop.f32.mrf.mxu0
        %1527 = vmatprep.mubr.f32.mxu0 0.0
        %1528 = vmatmul.mubr.f32.gmra.mxu0 %v556
        %v1529 = vpop.f32.mrf.mxu0
        %v1530 = vadd.f32 0.0, %v1529
        %v1531 = vpop.f32.mrf.mxu0
        %1532 = vmatprep.mubr.f32.mxu0 0.0
        %1533 = vmatmul.mubr.f32.gmra.mxu0 %v559
        %v1534 = vpop.f32.mrf.mxu0
        %v1535 = vadd.f32 0.0, %v1534
        %v1536 = vpop.f32.mrf.mxu0
        %1537 = vmatprep.mubr.f32.mxu0 0.0
        %1538 = vmatmul.mubr.f32.gmra.mxu0 %v562
        %v1539 = vpop.f32.mrf.mxu0
        %v1540 = vadd.f32 0.0, %v1539
        %v1541 = vpop.f32.mrf.mxu0
        %1542 = vmatprep.mubr.f32.mxu0 0.0
        %1543 = vmatmul.mubr.f32.gmra.mxu0 %v565
        %v1544 = vpop.f32.mrf.mxu0
        %v1545 = vadd.f32 0.0, %v1544
        %v1546 = vpop.f32.mrf.mxu0
        %1547 = vmatprep.mubr.f32.mxu0 0.0
        %1548 = vmatmul.mubr.f32.gmra.mxu0 %v568
        %v1549 = vpop.f32.mrf.mxu0
        %v1550 = vadd.f32 0.0, %v1549
        %v1551 = vpop.f32.mrf.mxu0
        %1552 = vmatprep.mubr.f32.mxu0 0.0
        %1553 = vmatmul.mubr.f32.gmra.mxu0 %v571
        %v1554 = vpop.f32.mrf.mxu0
        %v1555 = vadd.f32 0.0, %v1554
        %v1556 = vpop.f32.mrf.mxu0
        %1557 = vmatprep.mubr.f32.mxu0 0.0
        %1558 = vmatmul.mubr.f32.gmra.mxu0 %v574
        %v1559 = vpop.f32.mrf.mxu0
        %v1560 = vadd.f32 0.0, %v1559
        %v1561 = vpop.f32.mrf.mxu0
        %1562 = vmatprep.mubr.f32.mxu0 0.0
        %1563 = vmatmul.mubr.f32.gmra.mxu0 %v577
        %v1564 = vpop.f32.mrf.mxu0
        %v1565 = vadd.f32 0.0, %v1564
        %v1566 = vpop.f32.mrf.mxu0
        %1567 = vmatprep.mubr.f32.mxu0 0.0
        %1568 = vmatmul.mubr.f32.gmra.mxu0 %v580
        %v1569 = vpop.f32.mrf.mxu0
        %v1570 = vadd.f32 0.0, %v1569
        %v1571 = vpop.f32.mrf.mxu0
        %1572 = vmatprep.mubr.f32.mxu0 0.0
        %1573 = vmatmul.mubr.f32.gmra.mxu0 %v583
        %v1574 = vpop.f32.mrf.mxu0
        %v1575 = vadd.f32 0.0, %v1574
        %v1576 = vpop.f32.mrf.mxu0
        %1577 = vmatprep.mubr.f32.mxu0 0.0
        %1578 = vmatmul.mubr.f32.gmra.mxu0 %v586
        %v1579 = vpop.f32.mrf.mxu0
        %v1580 = vadd.f32 0.0, %v1579
        %v1581 = vpop.f32.mrf.mxu0
        %1582 = vmatprep.mubr.f32.mxu0 0.0
        %1583 = vmatmul.mubr.f32.gmra.mxu0 %v589
        %v1584 = vpop.f32.mrf.mxu0
        %v1585 = vadd.f32 0.0, %v1584
        %v1586 = vpop.f32.mrf.mxu0
        %1587 = vmatprep.mubr.f32.mxu0 0.0
        %1588 = vmatmul.mubr.f32.gmra.mxu0 %v592
        %v1589 = vpop.f32.mrf.mxu0
        %v1590 = vadd.f32 0.0, %v1589
        %v1591 = vpop.f32.mrf.mxu0
        %1592 = vmatprep.mubr.f32.mxu0 0.0
        %1593 = vmatmul.mubr.f32.gmra.mxu0 %v595
        %v1594 = vpop.f32.mrf.mxu0
        %v1595 = vadd.f32 0.0, %v1594
        %v1596 = vpop.f32.mrf.mxu0
        %1597 = vdwg.mxu0
        %v1598 = vmul.f32 %v1520, %v1439
        %v1599 = vmul.f32 %v1525, %v1440
        %v1600 = vmul.f32 %v1530, %v1439
        %v1601 = vmul.f32 %v1535, %v1440
        %v1602 = vmul.f32 %v1540, %v1439
        %v1603 = vmul.f32 %v1545, %v1440
        %v1604 = vmul.f32 %v1550, %v1439
        %v1605 = vmul.f32 %v1555, %v1440
        %v1606 = vmul.f32 %v1560, %v1439
        %v1607 = vmul.f32 %v1565, %v1440
        %v1608 = vmul.f32 %v1570, %v1439
        %v1609 = vmul.f32 %v1575, %v1440
        %v1610 = vmul.f32 %v1580, %v1439
        %v1611 = vmul.f32 %v1585, %v1440
        %v1612 = vmul.f32 %v1590, %v1439
        %v1613 = vmul.f32 %v1595, %v1440
        %v1614 = vadd.f32 %v1598, %v1599
        %v1615 = vrot.slane %v1614, 4
        %v1616 = vadd.f32 %v1614, %v1615
        %v1617 = vrot.slane %v1616, 2
        %v1618 = vadd.f32 %v1616, %v1617
        %v1619 = vrot.slane %v1618, 1
        %v1620 = vadd.f32 %v1618, %v1619
        %v1621 = vadd.f32 %v1600, %v1601
        %v1622 = vrot.slane %v1621, 4
        %v1623 = vadd.f32 %v1621, %v1622
        %v1624 = vrot.slane %v1623, 2
        %v1625 = vadd.f32 %v1623, %v1624
        %v1626 = vrot.slane %v1625, 1
        %v1627 = vadd.f32 %v1625, %v1626
        %v1628 = vadd.f32 %v1602, %v1603
        %v1629 = vrot.slane %v1628, 4
        %v1630 = vadd.f32 %v1628, %v1629
        %v1631 = vrot.slane %v1630, 2
        %v1632 = vadd.f32 %v1630, %v1631
        %v1633 = vrot.slane %v1632, 1
        %v1634 = vadd.f32 %v1632, %v1633
        %v1635 = vadd.f32 %v1604, %v1605
        %v1636 = vrot.slane %v1635, 4
        %v1637 = vadd.f32 %v1635, %v1636
        %v1638 = vrot.slane %v1637, 2
        %v1639 = vadd.f32 %v1637, %v1638
        %v1640 = vrot.slane %v1639, 1
        %v1641 = vadd.f32 %v1639, %v1640
        %v1642 = vadd.f32 %v1606, %v1607
        %v1643 = vrot.slane %v1642, 4
        %v1644 = vadd.f32 %v1642, %v1643
        %v1645 = vrot.slane %v1644, 2
        %v1646 = vadd.f32 %v1644, %v1645
        %v1647 = vrot.slane %v1646, 1
        %v1648 = vadd.f32 %v1646, %v1647
        %v1649 = vadd.f32 %v1608, %v1609
        %v1650 = vrot.slane %v1649, 4
        %v1651 = vadd.f32 %v1649, %v1650
        %v1652 = vrot.slane %v1651, 2
        %v1653 = vadd.f32 %v1651, %v1652
        %v1654 = vrot.slane %v1653, 1
        %v1655 = vadd.f32 %v1653, %v1654
        %v1656 = vadd.f32 %v1610, %v1611
        %v1657 = vrot.slane %v1656, 4
        %v1658 = vadd.f32 %v1656, %v1657
        %v1659 = vrot.slane %v1658, 2
        %v1660 = vadd.f32 %v1658, %v1659
        %v1661 = vrot.slane %v1660, 1
        %v1662 = vadd.f32 %v1660, %v1661
        %v1663 = vadd.f32 %v1612, %v1613
        %v1664 = vrot.slane %v1663, 4
        %v1665 = vadd.f32 %v1663, %v1664
        %v1666 = vrot.slane %v1665, 2
        %v1667 = vadd.f32 %v1665, %v1666
        %v1668 = vrot.slane %v1667, 1
        %v1669 = vadd.f32 %v1667, %v1668
        %v1670 = vlaneseq
        %v1671 = vshrl.u32 %v1670, 7
        %v1672 = vsub.s32 0, %v1671
        %v1673 = vrot.slane %v1425, %v1672
        %v1674 = vmul.f32 %v1620, %v1673
        %v1675 = vmul.f32 %v1627, %v1673
        %v1676 = vmul.f32 %v1634, %v1673
        %v1677 = vmul.f32 %v1641, %v1673
        %v1678 = vmul.f32 %v1648, %v1673
        %v1679 = vmul.f32 %v1655, %v1673
        %v1680 = vmul.f32 %v1662, %v1673
        %v1681 = vmul.f32 %v1669, %v1673
        %v1690 = vrot.slane %v1675, 7
        %v1691 = vsel %vm835, %v1690, %v1674
        %v1692 = vrot.slane %v1676, 6
        %v1693 = vsel %vm838, %v1692, %v1691
        %v1694 = vrot.slane %v1677, 5
        %v1695 = vsel %vm841, %v1694, %v1693
        %v1696 = vrot.slane %v1678, 4
        %v1697 = vsel %vm844, %v1696, %v1695
        %v1698 = vrot.slane %v1679, 3
        %v1699 = vsel %vm847, %v1698, %v1697
        %v1700 = vrot.slane %v1680, 2
        %v1701 = vsel %vm850, %v1700, %v1699
        %v1702 = vrot.slane %v1681, 1
        %v1703 = vsel %vm853, %v1702, %v1701
        %1705 = vst [vmem:[#allocation3 + $0x18] sm:$0xff] %v1703
        %v1706 = vld [vmem:[#allocation2 + $0x4] sm:$0x1]
        %v1707 = vld [vmem:[#allocation2 + $0xd] sm:$0x1]
        %v1708 = vld [vmem:[#allocation2 + $0x16] sm:$0x1]
        %v1709 = vadd.f32 %v1426, %v1706
        %v1710 = vadd.f32 %v861, %v1707
        %v1711 = vlaneseq
        %v1712 = vshrl.u32 %v1711, 7
        %v1713 = vsub.s32 0, %v1712
        %v1714 = vrot.slane %v1709, %v1713
        %v1715 = vsub.f32 %v499, %v1714
        %v1716 = vsub.f32 %v500, %v1714
        %v1717 = vand.u32 2147483647, %v1715
        %v1718 = vand.u32 2147483647, %v1716
        %v1719 = vsub.f32 1.0, %v1717
        %v1720 = vsub.f32 1.0, %v1718
        %v1721 = vmax.f32 %v1719, 0.0
        %v1722 = vmax.f32 %v1720, 0.0
        %v1723 = vlaneseq
        %v1724 = vshrl.u32 %v1723, 7
        %v1725 = vsub.s32 0, %v1724
        %v1726 = vrot.slane %v1710, %v1725
        %v1727 = vsub.f32 %v499, %v1726
        %v1728 = vsub.f32 %v500, %v1726
        %v1729 = vand.u32 2147483647, %v1727
        %v1730 = vand.u32 2147483647, %v1728
        %v1731 = vsub.f32 1.0, %v1729
        %v1732 = vsub.f32 1.0, %v1730
        %v1733 = vmax.f32 %v1731, 0.0
        %v1734 = vmax.f32 %v1732, 0.0
        %1735 = vmatprep.subr.mxu0 0.0
        %1736 = vmatpush1.msra.mxu0 0.0
        %1737 = vmatprep.subr.mxu0 0.0
        %1738 = vmatpush1.msra.mxu0 0.0
        %1739 = vmatprep.subr.mxu0 0.0
        %1740 = vmatpush1.msra.mxu0 0.0
        %1741 = vmatprep.subr.mxu0 0.0
        %1742 = vmatpush1.msra.mxu0 0.0
        %1743 = vmatprep.subr.mxu0 0.0
        %1744 = vmatpush1.msra.mxu0 0.0
        %1745 = vmatprep.subr.mxu0 0.0
        %1746 = vmatpush1.msra.mxu0 0.0
        %1747 = vmatprep.subr.mxu0 0.0
        %1748 = vmatpush1.msra.mxu0 0.0
        %1749 = vmatprep.subr.mxu0 0.0
        %1750 = vmatpush1.msra.mxu0 0.0
        %1751 = vmatprep.subr.mxu0 0.0
        %1752 = vmatpush1.msra.mxu0 0.0
        %1753 = vmatprep.subr.mxu0 0.0
        %1754 = vmatpush1.msra.mxu0 0.0
        %1755 = vmatprep.subr.mxu0 0.0
        %1756 = vmatpush1.msra.mxu0 0.0
        %1757 = vmatprep.subr.mxu0 0.0
        %1758 = vmatpush1.msra.mxu0 0.0
        %1759 = vmatprep.subr.mxu0 0.0
        %1760 = vmatpush1.msra.mxu0 0.0
        %1761 = vmatprep.subr.mxu0 0.0
        %1762 = vmatpush1.msra.mxu0 0.0
        %1763 = vmatprep.subr.mxu0 0.0
        %1764 = vmatpush1.msra.mxu0 %v1734
        %1765 = vmatprep.subr.mxu0 0.0
        %1766 = vmatpush1.msra.mxu0 %v1733
        %1767 = vmatprep.subr.mxu0 0.0
        %1768 = vmatpush2.msra.mxu0 0.0
        %1769 = vmatprep.subr.mxu0 0.0
        %1770 = vmatpush2.msra.mxu0 0.0
        %1771 = vmatprep.subr.mxu0 0.0
        %1772 = vmatpush2.msra.mxu0 0.0
        %1773 = vmatprep.subr.mxu0 0.0
        %1774 = vmatpush2.msra.mxu0 0.0
        %1775 = vmatprep.subr.mxu0 0.0
        %1776 = vmatpush2.msra.mxu0 0.0
        %1777 = vmatprep.subr.mxu0 0.0
        %1778 = vmatpush2.msra.mxu0 0.0
        %1779 = vmatprep.subr.mxu0 0.0
        %1780 = vmatpush2.msra.mxu0 0.0
        %1781 = vmatprep.subr.mxu0 0.0
        %1782 = vmatpush2.msra.mxu0 0.0
        %1783 = vmatprep.subr.mxu0 0.0
        %1784 = vmatpush2.msra.mxu0 0.0
        %1785 = vmatprep.subr.mxu0 0.0
        %1786 = vmatpush2.msra.mxu0 0.0
        %1787 = vmatprep.subr.mxu0 0.0
        %1788 = vmatpush2.msra.mxu0 0.0
        %1789 = vmatprep.subr.mxu0 0.0
        %1790 = vmatpush2.msra.mxu0 0.0
        %1791 = vmatprep.subr.mxu0 0.0
        %1792 = vmatpush2.msra.mxu0 0.0
        %1793 = vmatprep.subr.mxu0 0.0
        %1794 = vmatpush2.msra.mxu0 0.0
        %1795 = vmatprep.subr.mxu0 0.0
        %1796 = vmatpush2.msra.mxu0 0.0
        %1797 = vmatprep.subr.mxu0 0.0
        %1798 = vmatpush2.msra.mxu0 0.0
        %1799 = vmatprep.mubr.f32.mxu0 0.0
        %1800 = vmatmul.mubr.f32.gmra.mxu0 %v550
        %v1801 = vpop.f32.mrf.mxu0
        %v1802 = vadd.f32 0.0, %v1801
        %v1803 = vpop.f32.mrf.mxu0
        %1804 = vmatprep.mubr.f32.mxu0 0.0
        %1805 = vmatmul.mubr.f32.gmra.mxu0 %v553
        %v1806 = vpop.f32.mrf.mxu0
        %v1807 = vadd.f32 0.0, %v1806
        %v1808 = vpop.f32.mrf.mxu0
        %1809 = vmatprep.mubr.f32.mxu0 0.0
        %1810 = vmatmul.mubr.f32.gmra.mxu0 %v556
        %v1811 = vpop.f32.mrf.mxu0
        %v1812 = vadd.f32 0.0, %v1811
        %v1813 = vpop.f32.mrf.mxu0
        %1814 = vmatprep.mubr.f32.mxu0 0.0
        %1815 = vmatmul.mubr.f32.gmra.mxu0 %v559
        %v1816 = vpop.f32.mrf.mxu0
        %v1817 = vadd.f32 0.0, %v1816
        %v1818 = vpop.f32.mrf.mxu0
        %1819 = vmatprep.mubr.f32.mxu0 0.0
        %1820 = vmatmul.mubr.f32.gmra.mxu0 %v562
        %v1821 = vpop.f32.mrf.mxu0
        %v1822 = vadd.f32 0.0, %v1821
        %v1823 = vpop.f32.mrf.mxu0
        %1824 = vmatprep.mubr.f32.mxu0 0.0
        %1825 = vmatmul.mubr.f32.gmra.mxu0 %v565
        %v1826 = vpop.f32.mrf.mxu0
        %v1827 = vadd.f32 0.0, %v1826
        %v1828 = vpop.f32.mrf.mxu0
        %1829 = vmatprep.mubr.f32.mxu0 0.0
        %1830 = vmatmul.mubr.f32.gmra.mxu0 %v568
        %v1831 = vpop.f32.mrf.mxu0
        %v1832 = vadd.f32 0.0, %v1831
        %v1833 = vpop.f32.mrf.mxu0
        %1834 = vmatprep.mubr.f32.mxu0 0.0
        %1835 = vmatmul.mubr.f32.gmra.mxu0 %v571
        %v1836 = vpop.f32.mrf.mxu0
        %v1837 = vadd.f32 0.0, %v1836
        %v1838 = vpop.f32.mrf.mxu0
        %1839 = vmatprep.mubr.f32.mxu0 0.0
        %1840 = vmatmul.mubr.f32.gmra.mxu0 %v574
        %v1841 = vpop.f32.mrf.mxu0
        %v1842 = vadd.f32 0.0, %v1841
        %v1843 = vpop.f32.mrf.mxu0
        %1844 = vmatprep.mubr.f32.mxu0 0.0
        %1845 = vmatmul.mubr.f32.gmra.mxu0 %v577
        %v1846 = vpop.f32.mrf.mxu0
        %v1847 = vadd.f32 0.0, %v1846
        %v1848 = vpop.f32.mrf.mxu0
        %1849 = vmatprep.mubr.f32.mxu0 0.0
        %1850 = vmatmul.mubr.f32.gmra.mxu0 %v580
        %v1851 = vpop.f32.mrf.mxu0
        %v1852 = vadd.f32 0.0, %v1851
        %v1853 = vpop.f32.mrf.mxu0
        %1854 = vmatprep.mubr.f32.mxu0 0.0
        %1855 = vmatmul.mubr.f32.gmra.mxu0 %v583
        %v1856 = vpop.f32.mrf.mxu0
        %v1857 = vadd.f32 0.0, %v1856
        %v1858 = vpop.f32.mrf.mxu0
        %1859 = vmatprep.mubr.f32.mxu0 0.0
        %1860 = vmatmul.mubr.f32.gmra.mxu0 %v586
        %v1861 = vpop.f32.mrf.mxu0
        %v1862 = vadd.f32 0.0, %v1861
        %v1863 = vpop.f32.mrf.mxu0
        %1864 = vmatprep.mubr.f32.mxu0 0.0
        %1865 = vmatmul.mubr.f32.gmra.mxu0 %v589
        %v1866 = vpop.f32.mrf.mxu0
        %v1867 = vadd.f32 0.0, %v1866
        %v1868 = vpop.f32.mrf.mxu0
        %1869 = vmatprep.mubr.f32.mxu0 0.0
        %1870 = vmatmul.mubr.f32.gmra.mxu0 %v592
        %v1871 = vpop.f32.mrf.mxu0
        %v1872 = vadd.f32 0.0, %v1871
        %v1873 = vpop.f32.mrf.mxu0
        %1874 = vmatprep.mubr.f32.mxu0 0.0
        %1875 = vmatmul.mubr.f32.gmra.mxu0 %v595
        %v1876 = vpop.f32.mrf.mxu0
        %v1877 = vadd.f32 0.0, %v1876
        %v1878 = vpop.f32.mrf.mxu0
        %1879 = vdwg.mxu0
        %v1880 = vmul.f32 %v1802, %v1721
        %v1881 = vmul.f32 %v1807, %v1722
        %v1882 = vmul.f32 %v1812, %v1721
        %v1883 = vmul.f32 %v1817, %v1722
        %v1884 = vmul.f32 %v1822, %v1721
        %v1885 = vmul.f32 %v1827, %v1722
        %v1886 = vmul.f32 %v1832, %v1721
        %v1887 = vmul.f32 %v1837, %v1722
        %v1888 = vmul.f32 %v1842, %v1721
        %v1889 = vmul.f32 %v1847, %v1722
        %v1890 = vmul.f32 %v1852, %v1721
        %v1891 = vmul.f32 %v1857, %v1722
        %v1892 = vmul.f32 %v1862, %v1721
        %v1893 = vmul.f32 %v1867, %v1722
        %v1894 = vmul.f32 %v1872, %v1721
        %v1895 = vmul.f32 %v1877, %v1722
        %v1896 = vadd.f32 %v1880, %v1881
        %v1897 = vrot.slane %v1896, 4
        %v1898 = vadd.f32 %v1896, %v1897
        %v1899 = vrot.slane %v1898, 2
        %v1900 = vadd.f32 %v1898, %v1899
        %v1901 = vrot.slane %v1900, 1
        %v1902 = vadd.f32 %v1900, %v1901
        %v1903 = vadd.f32 %v1882, %v1883
        %v1904 = vrot.slane %v1903, 4
        %v1905 = vadd.f32 %v1903, %v1904
        %v1906 = vrot.slane %v1905, 2
        %v1907 = vadd.f32 %v1905, %v1906
        %v1908 = vrot.slane %v1907, 1
        %v1909 = vadd.f32 %v1907, %v1908
        %v1910 = vadd.f32 %v1884, %v1885
        %v1911 = vrot.slane %v1910, 4
        %v1912 = vadd.f32 %v1910, %v1911
        %v1913 = vrot.slane %v1912, 2
        %v1914 = vadd.f32 %v1912, %v1913
        %v1915 = vrot.slane %v1914, 1
        %v1916 = vadd.f32 %v1914, %v1915
        %v1917 = vadd.f32 %v1886, %v1887
        %v1918 = vrot.slane %v1917, 4
        %v1919 = vadd.f32 %v1917, %v1918
        %v1920 = vrot.slane %v1919, 2
        %v1921 = vadd.f32 %v1919, %v1920
        %v1922 = vrot.slane %v1921, 1
        %v1923 = vadd.f32 %v1921, %v1922
        %v1924 = vadd.f32 %v1888, %v1889
        %v1925 = vrot.slane %v1924, 4
        %v1926 = vadd.f32 %v1924, %v1925
        %v1927 = vrot.slane %v1926, 2
        %v1928 = vadd.f32 %v1926, %v1927
        %v1929 = vrot.slane %v1928, 1
        %v1930 = vadd.f32 %v1928, %v1929
        %v1931 = vadd.f32 %v1890, %v1891
        %v1932 = vrot.slane %v1931, 4
        %v1933 = vadd.f32 %v1931, %v1932
        %v1934 = vrot.slane %v1933, 2
        %v1935 = vadd.f32 %v1933, %v1934
        %v1936 = vrot.slane %v1935, 1
        %v1937 = vadd.f32 %v1935, %v1936
        %v1938 = vadd.f32 %v1892, %v1893
        %v1939 = vrot.slane %v1938, 4
        %v1940 = vadd.f32 %v1938, %v1939
        %v1941 = vrot.slane %v1940, 2
        %v1942 = vadd.f32 %v1940, %v1941
        %v1943 = vrot.slane %v1942, 1
        %v1944 = vadd.f32 %v1942, %v1943
        %v1945 = vadd.f32 %v1894, %v1895
        %v1946 = vrot.slane %v1945, 4
        %v1947 = vadd.f32 %v1945, %v1946
        %v1948 = vrot.slane %v1947, 2
        %v1949 = vadd.f32 %v1947, %v1948
        %v1950 = vrot.slane %v1949, 1
        %v1951 = vadd.f32 %v1949, %v1950
        %v1952 = vlaneseq
        %v1953 = vshrl.u32 %v1952, 7
        %v1954 = vsub.s32 0, %v1953
        %v1955 = vrot.slane %v1708, %v1954
        %v1956 = vmul.f32 %v1902, %v1955
        %v1957 = vmul.f32 %v1909, %v1955
        %v1958 = vmul.f32 %v1916, %v1955
        %v1959 = vmul.f32 %v1923, %v1955
        %v1960 = vmul.f32 %v1930, %v1955
        %v1961 = vmul.f32 %v1937, %v1955
        %v1962 = vmul.f32 %v1944, %v1955
        %v1963 = vmul.f32 %v1951, %v1955
        %v1972 = vrot.slane %v1957, 7
        %v1973 = vsel %vm835, %v1972, %v1956
        %v1974 = vrot.slane %v1958, 6
        %v1975 = vsel %vm838, %v1974, %v1973
        %v1976 = vrot.slane %v1959, 5
        %v1977 = vsel %vm841, %v1976, %v1975
        %v1978 = vrot.slane %v1960, 4
        %v1979 = vsel %vm844, %v1978, %v1977
        %v1980 = vrot.slane %v1961, 3
        %v1981 = vsel %vm847, %v1980, %v1979
        %v1982 = vrot.slane %v1962, 2
        %v1983 = vsel %vm850, %v1982, %v1981
        %v1984 = vrot.slane %v1963, 1
        %v1985 = vsel %vm853, %v1984, %v1983
        %1987 = vst [vmem:[#allocation3 + $0x20] sm:$0xff] %v1985
        %v1988 = vld [vmem:[#allocation2 + $0x5] sm:$0x1]
        %v1989 = vld [vmem:[#allocation2 + $0xe] sm:$0x1]
        %v1990 = vld [vmem:[#allocation2 + $0x17] sm:$0x1]
        %v1991 = vadd.f32 %v1426, %v1988
        %v1992 = vadd.f32 %v1144, %v1989
        %v1993 = vlaneseq
        %v1994 = vshrl.u32 %v1993, 7
        %v1995 = vsub.s32 0, %v1994
        %v1996 = vrot.slane %v1991, %v1995
        %v1997 = vsub.f32 %v499, %v1996
        %v1998 = vsub.f32 %v500, %v1996
        %v1999 = vand.u32 2147483647, %v1997
        %v2000 = vand.u32 2147483647, %v1998
        %v2001 = vsub.f32 1.0, %v1999
        %v2002 = vsub.f32 1.0, %v2000
        %v2003 = vmax.f32 %v2001, 0.0
        %v2004 = vmax.f32 %v2002, 0.0
        %v2005 = vlaneseq
        %v2006 = vshrl.u32 %v2005, 7
        %v2007 = vsub.s32 0, %v2006
        %v2008 = vrot.slane %v1992, %v2007
        %v2009 = vsub.f32 %v499, %v2008
        %v2010 = vsub.f32 %v500, %v2008
        %v2011 = vand.u32 2147483647, %v2009
        %v2012 = vand.u32 2147483647, %v2010
        %v2013 = vsub.f32 1.0, %v2011
        %v2014 = vsub.f32 1.0, %v2012
        %v2015 = vmax.f32 %v2013, 0.0
        %v2016 = vmax.f32 %v2014, 0.0
        %2017 = vmatprep.subr.mxu0 0.0
        %2018 = vmatpush1.msra.mxu0 0.0
        %2019 = vmatprep.subr.mxu0 0.0
        %2020 = vmatpush1.msra.mxu0 0.0
        %2021 = vmatprep.subr.mxu0 0.0
        %2022 = vmatpush1.msra.mxu0 0.0
        %2023 = vmatprep.subr.mxu0 0.0
        %2024 = vmatpush1.msra.mxu0 0.0
        %2025 = vmatprep.subr.mxu0 0.0
        %2026 = vmatpush1.msra.mxu0 0.0
        %2027 = vmatprep.subr.mxu0 0.0
        %2028 = vmatpush1.msra.mxu0 0.0
        %2029 = vmatprep.subr.mxu0 0.0
        %2030 = vmatpush1.msra.mxu0 0.0
        %2031 = vmatprep.subr.mxu0 0.0
        %2032 = vmatpush1.msra.mxu0 0.0
        %2033 = vmatprep.subr.mxu0 0.0
        %2034 = vmatpush1.msra.mxu0 0.0
        %2035 = vmatprep.subr.mxu0 0.0
        %2036 = vmatpush1.msra.mxu0 0.0
        %2037 = vmatprep.subr.mxu0 0.0
        %2038 = vmatpush1.msra.mxu0 0.0
        %2039 = vmatprep.subr.mxu0 0.0
        %2040 = vmatpush1.msra.mxu0 0.0
        %2041 = vmatprep.subr.mxu0 0.0
        %2042 = vmatpush1.msra.mxu0 0.0
        %2043 = vmatprep.subr.mxu0 0.0
        %2044 = vmatpush1.msra.mxu0 0.0
        %2045 = vmatprep.subr.mxu0 0.0
        %2046 = vmatpush1.msra.mxu0 %v2016
        %2047 = vmatprep.subr.mxu0 0.0
        %2048 = vmatpush1.msra.mxu0 %v2015
        %2049 = vmatprep.subr.mxu0 0.0
        %2050 = vmatpush2.msra.mxu0 0.0
        %2051 = vmatprep.subr.mxu0 0.0
        %2052 = vmatpush2.msra.mxu0 0.0
        %2053 = vmatprep.subr.mxu0 0.0
        %2054 = vmatpush2.msra.mxu0 0.0
        %2055 = vmatprep.subr.mxu0 0.0
        %2056 = vmatpush2.msra.mxu0 0.0
        %2057 = vmatprep.subr.mxu0 0.0
        %2058 = vmatpush2.msra.mxu0 0.0
        %2059 = vmatprep.subr.mxu0 0.0
        %2060 = vmatpush2.msra.mxu0 0.0
        %2061 = vmatprep.subr.mxu0 0.0
        %2062 = vmatpush2.msra.mxu0 0.0
        %2063 = vmatprep.subr.mxu0 0.0
        %2064 = vmatpush2.msra.mxu0 0.0
        %2065 = vmatprep.subr.mxu0 0.0
        %2066 = vmatpush2.msra.mxu0 0.0
        %2067 = vmatprep.subr.mxu0 0.0
        %2068 = vmatpush2.msra.mxu0 0.0
        %2069 = vmatprep.subr.mxu0 0.0
        %2070 = vmatpush2.msra.mxu0 0.0
        %2071 = vmatprep.subr.mxu0 0.0
        %2072 = vmatpush2.msra.mxu0 0.0
        %2073 = vmatprep.subr.mxu0 0.0
        %2074 = vmatpush2.msra.mxu0 0.0
        %2075 = vmatprep.subr.mxu0 0.0
        %2076 = vmatpush2.msra.mxu0 0.0
        %2077 = vmatprep.subr.mxu0 0.0
        %2078 = vmatpush2.msra.mxu0 0.0
        %2079 = vmatprep.subr.mxu0 0.0
        %2080 = vmatpush2.msra.mxu0 0.0
        %2081 = vmatprep.mubr.f32.mxu0 0.0
        %2082 = vmatmul.mubr.f32.gmra.mxu0 %v550
        %v2083 = vpop.f32.mrf.mxu0
        %v2084 = vadd.f32 0.0, %v2083
        %v2085 = vpop.f32.mrf.mxu0
        %2086 = vmatprep.mubr.f32.mxu0 0.0
        %2087 = vmatmul.mubr.f32.gmra.mxu0 %v553
        %v2088 = vpop.f32.mrf.mxu0
        %v2089 = vadd.f32 0.0, %v2088
        %v2090 = vpop.f32.mrf.mxu0
        %2091 = vmatprep.mubr.f32.mxu0 0.0
        %2092 = vmatmul.mubr.f32.gmra.mxu0 %v556
        %v2093 = vpop.f32.mrf.mxu0
        %v2094 = vadd.f32 0.0, %v2093
        %v2095 = vpop.f32.mrf.mxu0
        %2096 = vmatprep.mubr.f32.mxu0 0.0
        %2097 = vmatmul.mubr.f32.gmra.mxu0 %v559
        %v2098 = vpop.f32.mrf.mxu0
        %v2099 = vadd.f32 0.0, %v2098
        %v2100 = vpop.f32.mrf.mxu0
        %2101 = vmatprep.mubr.f32.mxu0 0.0
        %2102 = vmatmul.mubr.f32.gmra.mxu0 %v562
        %v2103 = vpop.f32.mrf.mxu0
        %v2104 = vadd.f32 0.0, %v2103
        %v2105 = vpop.f32.mrf.mxu0
        %2106 = vmatprep.mubr.f32.mxu0 0.0
        %2107 = vmatmul.mubr.f32.gmra.mxu0 %v565
        %v2108 = vpop.f32.mrf.mxu0
        %v2109 = vadd.f32 0.0, %v2108
        %v2110 = vpop.f32.mrf.mxu0
        %2111 = vmatprep.mubr.f32.mxu0 0.0
        %2112 = vmatmul.mubr.f32.gmra.mxu0 %v568
        %v2113 = vpop.f32.mrf.mxu0
        %v2114 = vadd.f32 0.0, %v2113
        %v2115 = vpop.f32.mrf.mxu0
        %2116 = vmatprep.mubr.f32.mxu0 0.0
        %2117 = vmatmul.mubr.f32.gmra.mxu0 %v571
        %v2118 = vpop.f32.mrf.mxu0
        %v2119 = vadd.f32 0.0, %v2118
        %v2120 = vpop.f32.mrf.mxu0
        %2121 = vmatprep.mubr.f32.mxu0 0.0
        %2122 = vmatmul.mubr.f32.gmra.mxu0 %v574
        %v2123 = vpop.f32.mrf.mxu0
        %v2124 = vadd.f32 0.0, %v2123
        %v2125 = vpop.f32.mrf.mxu0
        %2126 = vmatprep.mubr.f32.mxu0 0.0
        %2127 = vmatmul.mubr.f32.gmra.mxu0 %v577
        %v2128 = vpop.f32.mrf.mxu0
        %v2129 = vadd.f32 0.0, %v2128
        %v2130 = vpop.f32.mrf.mxu0
        %2131 = vmatprep.mubr.f32.mxu0 0.0
        %2132 = vmatmul.mubr.f32.gmra.mxu0 %v580
        %v2133 = vpop.f32.mrf.mxu0
        %v2134 = vadd.f32 0.0, %v2133
        %v2135 = vpop.f32.mrf.mxu0
        %2136 = vmatprep.mubr.f32.mxu0 0.0
        %2137 = vmatmul.mubr.f32.gmra.mxu0 %v583
        %v2138 = vpop.f32.mrf.mxu0
        %v2139 = vadd.f32 0.0, %v2138
        %v2140 = vpop.f32.mrf.mxu0
        %2141 = vmatprep.mubr.f32.mxu0 0.0
        %2142 = vmatmul.mubr.f32.gmra.mxu0 %v586
        %v2143 = vpop.f32.mrf.mxu0
        %v2144 = vadd.f32 0.0, %v2143
        %v2145 = vpop.f32.mrf.mxu0
        %2146 = vmatprep.mubr.f32.mxu0 0.0
        %2147 = vmatmul.mubr.f32.gmra.mxu0 %v589
        %v2148 = vpop.f32.mrf.mxu0
        %v2149 = vadd.f32 0.0, %v2148
        %v2150 = vpop.f32.mrf.mxu0
        %2151 = vmatprep.mubr.f32.mxu0 0.0
        %2152 = vmatmul.mubr.f32.gmra.mxu0 %v592
        %v2153 = vpop.f32.mrf.mxu0
        %v2154 = vadd.f32 0.0, %v2153
        %v2155 = vpop.f32.mrf.mxu0
        %2156 = vmatprep.mubr.f32.mxu0 0.0
        %2157 = vmatmul.mubr.f32.gmra.mxu0 %v595
        %v2158 = vpop.f32.mrf.mxu0
        %v2159 = vadd.f32 0.0, %v2158
        %v2160 = vpop.f32.mrf.mxu0
        %2161 = vdwg.mxu0
        %v2162 = vmul.f32 %v2084, %v2003
        %v2163 = vmul.f32 %v2089, %v2004
        %v2164 = vmul.f32 %v2094, %v2003
        %v2165 = vmul.f32 %v2099, %v2004
        %v2166 = vmul.f32 %v2104, %v2003
        %v2167 = vmul.f32 %v2109, %v2004
        %v2168 = vmul.f32 %v2114, %v2003
        %v2169 = vmul.f32 %v2119, %v2004
        %v2170 = vmul.f32 %v2124, %v2003
        %v2171 = vmul.f32 %v2129, %v2004
        %v2172 = vmul.f32 %v2134, %v2003
        %v2173 = vmul.f32 %v2139, %v2004
        %v2174 = vmul.f32 %v2144, %v2003
        %v2175 = vmul.f32 %v2149, %v2004
        %v2176 = vmul.f32 %v2154, %v2003
        %v2177 = vmul.f32 %v2159, %v2004
        %v2178 = vadd.f32 %v2162, %v2163
        %v2179 = vrot.slane %v2178, 4
        %v2180 = vadd.f32 %v2178, %v2179
        %v2181 = vrot.slane %v2180, 2
        %v2182 = vadd.f32 %v2180, %v2181
        %v2183 = vrot.slane %v2182, 1
        %v2184 = vadd.f32 %v2182, %v2183
        %v2185 = vadd.f32 %v2164, %v2165
        %v2186 = vrot.slane %v2185, 4
        %v2187 = vadd.f32 %v2185, %v2186
        %v2188 = vrot.slane %v2187, 2
        %v2189 = vadd.f32 %v2187, %v2188
        %v2190 = vrot.slane %v2189, 1
        %v2191 = vadd.f32 %v2189, %v2190
        %v2192 = vadd.f32 %v2166, %v2167
        %v2193 = vrot.slane %v2192, 4
        %v2194 = vadd.f32 %v2192, %v2193
        %v2195 = vrot.slane %v2194, 2
        %v2196 = vadd.f32 %v2194, %v2195
        %v2197 = vrot.slane %v2196, 1
        %v2198 = vadd.f32 %v2196, %v2197
        %v2199 = vadd.f32 %v2168, %v2169
        %v2200 = vrot.slane %v2199, 4
        %v2201 = vadd.f32 %v2199, %v2200
        %v2202 = vrot.slane %v2201, 2
        %v2203 = vadd.f32 %v2201, %v2202
        %v2204 = vrot.slane %v2203, 1
        %v2205 = vadd.f32 %v2203, %v2204
        %v2206 = vadd.f32 %v2170, %v2171
        %v2207 = vrot.slane %v2206, 4
        %v2208 = vadd.f32 %v2206, %v2207
        %v2209 = vrot.slane %v2208, 2
        %v2210 = vadd.f32 %v2208, %v2209
        %v2211 = vrot.slane %v2210, 1
        %v2212 = vadd.f32 %v2210, %v2211
        %v2213 = vadd.f32 %v2172, %v2173
        %v2214 = vrot.slane %v2213, 4
        %v2215 = vadd.f32 %v2213, %v2214
        %v2216 = vrot.slane %v2215, 2
        %v2217 = vadd.f32 %v2215, %v2216
        %v2218 = vrot.slane %v2217, 1
        %v2219 = vadd.f32 %v2217, %v2218
        %v2220 = vadd.f32 %v2174, %v2175
        %v2221 = vrot.slane %v2220, 4
        %v2222 = vadd.f32 %v2220, %v2221
        %v2223 = vrot.slane %v2222, 2
        %v2224 = vadd.f32 %v2222, %v2223
        %v2225 = vrot.slane %v2224, 1
        %v2226 = vadd.f32 %v2224, %v2225
        %v2227 = vadd.f32 %v2176, %v2177
        %v2228 = vrot.slane %v2227, 4
        %v2229 = vadd.f32 %v2227, %v2228
        %v2230 = vrot.slane %v2229, 2
        %v2231 = vadd.f32 %v2229, %v2230
        %v2232 = vrot.slane %v2231, 1
        %v2233 = vadd.f32 %v2231, %v2232
        %v2234 = vlaneseq
        %v2235 = vshrl.u32 %v2234, 7
        %v2236 = vsub.s32 0, %v2235
        %v2237 = vrot.slane %v1990, %v2236
        %v2238 = vmul.f32 %v2184, %v2237
        %v2239 = vmul.f32 %v2191, %v2237
        %v2240 = vmul.f32 %v2198, %v2237
        %v2241 = vmul.f32 %v2205, %v2237
        %v2242 = vmul.f32 %v2212, %v2237
        %v2243 = vmul.f32 %v2219, %v2237
        %v2244 = vmul.f32 %v2226, %v2237
        %v2245 = vmul.f32 %v2233, %v2237
        %v2254 = vrot.slane %v2239, 7
        %v2255 = vsel %vm835, %v2254, %v2238
        %v2256 = vrot.slane %v2240, 6
        %v2257 = vsel %vm838, %v2256, %v2255
        %v2258 = vrot.slane %v2241, 5
        %v2259 = vsel %vm841, %v2258, %v2257
        %v2260 = vrot.slane %v2242, 4
        %v2261 = vsel %vm844, %v2260, %v2259
        %v2262 = vrot.slane %v2243, 3
        %v2263 = vsel %vm847, %v2262, %v2261
        %v2264 = vrot.slane %v2244, 2
        %v2265 = vsel %vm850, %v2264, %v2263
        %v2266 = vrot.slane %v2245, 1
        %v2267 = vsel %vm853, %v2266, %v2265
        %2269 = vst [vmem:[#allocation3 + $0x28] sm:$0xff] %v2267
        %v2270 = vld [vmem:[#allocation2 + $0x6] sm:$0x1]
        %v2271 = vld [vmem:[#allocation2 + $0xf] sm:$0x1]
        %v2272 = vld [vmem:[#allocation2 + $0x18] sm:$0x1]
        %v2273 = vadd.f32 %v495, 1.0
        %v2274 = vadd.f32 %v2273, %v2270
        %v2275 = vadd.f32 %v522, %v2271
        %v2276 = vlaneseq
        %v2277 = vshrl.u32 %v2276, 7
        %v2278 = vsub.s32 0, %v2277
        %v2279 = vrot.slane %v2274, %v2278
        %v2280 = vsub.f32 %v499, %v2279
        %v2281 = vsub.f32 %v500, %v2279
        %v2282 = vand.u32 2147483647, %v2280
        %v2283 = vand.u32 2147483647, %v2281
        %v2284 = vsub.f32 1.0, %v2282
        %v2285 = vsub.f32 1.0, %v2283
        %v2286 = vmax.f32 %v2284, 0.0
        %v2287 = vmax.f32 %v2285, 0.0
        %v2288 = vlaneseq
        %v2289 = vshrl.u32 %v2288, 7
        %v2290 = vsub.s32 0, %v2289
        %v2291 = vrot.slane %v2275, %v2290
        %v2292 = vsub.f32 %v499, %v2291
        %v2293 = vsub.f32 %v500, %v2291
        %v2294 = vand.u32 2147483647, %v2292
        %v2295 = vand.u32 2147483647, %v2293
        %v2296 = vsub.f32 1.0, %v2294
        %v2297 = vsub.f32 1.0, %v2295
        %v2298 = vmax.f32 %v2296, 0.0
        %v2299 = vmax.f32 %v2297, 0.0
        %2300 = vmatprep.subr.mxu0 0.0
        %2301 = vmatpush1.msra.mxu0 0.0
        %2302 = vmatprep.subr.mxu0 0.0
        %2303 = vmatpush1.msra.mxu0 0.0
        %2304 = vmatprep.subr.mxu0 0.0
        %2305 = vmatpush1.msra.mxu0 0.0
        %2306 = vmatprep.subr.mxu0 0.0
        %2307 = vmatpush1.msra.mxu0 0.0
        %2308 = vmatprep.subr.mxu0 0.0
        %2309 = vmatpush1.msra.mxu0 0.0
        %2310 = vmatprep.subr.mxu0 0.0
        %2311 = vmatpush1.msra.mxu0 0.0
        %2312 = vmatprep.subr.mxu0 0.0
        %2313 = vmatpush1.msra.mxu0 0.0
        %2314 = vmatprep.subr.mxu0 0.0
        %2315 = vmatpush1.msra.mxu0 0.0
        %2316 = vmatprep.subr.mxu0 0.0
        %2317 = vmatpush1.msra.mxu0 0.0
        %2318 = vmatprep.subr.mxu0 0.0
        %2319 = vmatpush1.msra.mxu0 0.0
        %2320 = vmatprep.subr.mxu0 0.0
        %2321 = vmatpush1.msra.mxu0 0.0
        %2322 = vmatprep.subr.mxu0 0.0
        %2323 = vmatpush1.msra.mxu0 0.0
        %2324 = vmatprep.subr.mxu0 0.0
        %2325 = vmatpush1.msra.mxu0 0.0
        %2326 = vmatprep.subr.mxu0 0.0
        %2327 = vmatpush1.msra.mxu0 0.0
        %2328 = vmatprep.subr.mxu0 0.0
        %2329 = vmatpush1.msra.mxu0 %v2299
        %2330 = vmatprep.subr.mxu0 0.0
        %2331 = vmatpush1.msra.mxu0 %v2298
        %2332 = vmatprep.subr.mxu0 0.0
        %2333 = vmatpush2.msra.mxu0 0.0
        %2334 = vmatprep.subr.mxu0 0.0
        %2335 = vmatpush2.msra.mxu0 0.0
        %2336 = vmatprep.subr.mxu0 0.0
        %2337 = vmatpush2.msra.mxu0 0.0
        %2338 = vmatprep.subr.mxu0 0.0
        %2339 = vmatpush2.msra.mxu0 0.0
        %2340 = vmatprep.subr.mxu0 0.0
        %2341 = vmatpush2.msra.mxu0 0.0
        %2342 = vmatprep.subr.mxu0 0.0
        %2343 = vmatpush2.msra.mxu0 0.0
        %2344 = vmatprep.subr.mxu0 0.0
        %2345 = vmatpush2.msra.mxu0 0.0
        %2346 = vmatprep.subr.mxu0 0.0
        %2347 = vmatpush2.msra.mxu0 0.0
        %2348 = vmatprep.subr.mxu0 0.0
        %2349 = vmatpush2.msra.mxu0 0.0
        %2350 = vmatprep.subr.mxu0 0.0
        %2351 = vmatpush2.msra.mxu0 0.0
        %2352 = vmatprep.subr.mxu0 0.0
        %2353 = vmatpush2.msra.mxu0 0.0
        %2354 = vmatprep.subr.mxu0 0.0
        %2355 = vmatpush2.msra.mxu0 0.0
        %2356 = vmatprep.subr.mxu0 0.0
        %2357 = vmatpush2.msra.mxu0 0.0
        %2358 = vmatprep.subr.mxu0 0.0
        %2359 = vmatpush2.msra.mxu0 0.0
        %2360 = vmatprep.subr.mxu0 0.0
        %2361 = vmatpush2.msra.mxu0 0.0
        %2362 = vmatprep.subr.mxu0 0.0
        %2363 = vmatpush2.msra.mxu0 0.0
        %2364 = vmatprep.mubr.f32.mxu0 0.0
        %2365 = vmatmul.mubr.f32.gmra.mxu0 %v550
        %v2366 = vpop.f32.mrf.mxu0
        %v2367 = vadd.f32 0.0, %v2366
        %v2368 = vpop.f32.mrf.mxu0
        %2369 = vmatprep.mubr.f32.mxu0 0.0
        %2370 = vmatmul.mubr.f32.gmra.mxu0 %v553
        %v2371 = vpop.f32.mrf.mxu0
        %v2372 = vadd.f32 0.0, %v2371
        %v2373 = vpop.f32.mrf.mxu0
        %2374 = vmatprep.mubr.f32.mxu0 0.0
        %2375 = vmatmul.mubr.f32.gmra.mxu0 %v556
        %v2376 = vpop.f32.mrf.mxu0
        %v2377 = vadd.f32 0.0, %v2376
        %v2378 = vpop.f32.mrf.mxu0
        %2379 = vmatprep.mubr.f32.mxu0 0.0
        %2380 = vmatmul.mubr.f32.gmra.mxu0 %v559
        %v2381 = vpop.f32.mrf.mxu0
        %v2382 = vadd.f32 0.0, %v2381
        %v2383 = vpop.f32.mrf.mxu0
        %2384 = vmatprep.mubr.f32.mxu0 0.0
        %2385 = vmatmul.mubr.f32.gmra.mxu0 %v562
        %v2386 = vpop.f32.mrf.mxu0
        %v2387 = vadd.f32 0.0, %v2386
        %v2388 = vpop.f32.mrf.mxu0
        %2389 = vmatprep.mubr.f32.mxu0 0.0
        %2390 = vmatmul.mubr.f32.gmra.mxu0 %v565
        %v2391 = vpop.f32.mrf.mxu0
        %v2392 = vadd.f32 0.0, %v2391
        %v2393 = vpop.f32.mrf.mxu0
        %2394 = vmatprep.mubr.f32.mxu0 0.0
        %2395 = vmatmul.mubr.f32.gmra.mxu0 %v568
        %v2396 = vpop.f32.mrf.mxu0
        %v2397 = vadd.f32 0.0, %v2396
        %v2398 = vpop.f32.mrf.mxu0
        %2399 = vmatprep.mubr.f32.mxu0 0.0
        %2400 = vmatmul.mubr.f32.gmra.mxu0 %v571
        %v2401 = vpop.f32.mrf.mxu0
        %v2402 = vadd.f32 0.0, %v2401
        %v2403 = vpop.f32.mrf.mxu0
        %2404 = vmatprep.mubr.f32.mxu0 0.0
        %2405 = vmatmul.mubr.f32.gmra.mxu0 %v574
        %v2406 = vpop.f32.mrf.mxu0
        %v2407 = vadd.f32 0.0, %v2406
        %v2408 = vpop.f32.mrf.mxu0
        %2409 = vmatprep.mubr.f32.mxu0 0.0
        %2410 = vmatmul.mubr.f32.gmra.mxu0 %v577
        %v2411 = vpop.f32.mrf.mxu0
        %v2412 = vadd.f32 0.0, %v2411
        %v2413 = vpop.f32.mrf.mxu0
        %2414 = vmatprep.mubr.f32.mxu0 0.0
        %2415 = vmatmul.mubr.f32.gmra.mxu0 %v580
        %v2416 = vpop.f32.mrf.mxu0
        %v2417 = vadd.f32 0.0, %v2416
        %v2418 = vpop.f32.mrf.mxu0
        %2419 = vmatprep.mubr.f32.mxu0 0.0
        %2420 = vmatmul.mubr.f32.gmra.mxu0 %v583
        %v2421 = vpop.f32.mrf.mxu0
        %v2422 = vadd.f32 0.0, %v2421
        %v2423 = vpop.f32.mrf.mxu0
        %2424 = vmatprep.mubr.f32.mxu0 0.0
        %2425 = vmatmul.mubr.f32.gmra.mxu0 %v586
        %v2426 = vpop.f32.mrf.mxu0
        %v2427 = vadd.f32 0.0, %v2426
        %v2428 = vpop.f32.mrf.mxu0
        %2429 = vmatprep.mubr.f32.mxu0 0.0
        %2430 = vmatmul.mubr.f32.gmra.mxu0 %v589
        %v2431 = vpop.f32.mrf.mxu0
        %v2432 = vadd.f32 0.0, %v2431
        %v2433 = vpop.f32.mrf.mxu0
        %2434 = vmatprep.mubr.f32.mxu0 0.0
        %2435 = vmatmul.mubr.f32.gmra.mxu0 %v592
        %v2436 = vpop.f32.mrf.mxu0
        %v2437 = vadd.f32 0.0, %v2436
        %v2438 = vpop.f32.mrf.mxu0
        %2439 = vmatprep.mubr.f32.mxu0 0.0
        %2440 = vmatmul.mubr.f32.gmra.mxu0 %v595
        %v2441 = vpop.f32.mrf.mxu0
        %v2442 = vadd.f32 0.0, %v2441
        %v2443 = vpop.f32.mrf.mxu0
        %2444 = vdwg.mxu0
        %v2445 = vmul.f32 %v2367, %v2286
        %v2446 = vmul.f32 %v2372, %v2287
        %v2447 = vmul.f32 %v2377, %v2286
        %v2448 = vmul.f32 %v2382, %v2287
        %v2449 = vmul.f32 %v2387, %v2286
        %v2450 = vmul.f32 %v2392, %v2287
        %v2451 = vmul.f32 %v2397, %v2286
        %v2452 = vmul.f32 %v2402, %v2287
        %v2453 = vmul.f32 %v2407, %v2286
        %v2454 = vmul.f32 %v2412, %v2287
        %v2455 = vmul.f32 %v2417, %v2286
        %v2456 = vmul.f32 %v2422, %v2287
        %v2457 = vmul.f32 %v2427, %v2286
        %v2458 = vmul.f32 %v2432, %v2287
        %v2459 = vmul.f32 %v2437, %v2286
        %v2460 = vmul.f32 %v2442, %v2287
        %v2461 = vadd.f32 %v2445, %v2446
        %v2462 = vrot.slane %v2461, 4
        %v2463 = vadd.f32 %v2461, %v2462
        %v2464 = vrot.slane %v2463, 2
        %v2465 = vadd.f32 %v2463, %v2464
        %v2466 = vrot.slane %v2465, 1
        %v2467 = vadd.f32 %v2465, %v2466
        %v2468 = vadd.f32 %v2447, %v2448
        %v2469 = vrot.slane %v2468, 4
        %v2470 = vadd.f32 %v2468, %v2469
        %v2471 = vrot.slane %v2470, 2
        %v2472 = vadd.f32 %v2470, %v2471
        %v2473 = vrot.slane %v2472, 1
        %v2474 = vadd.f32 %v2472, %v2473
        %v2475 = vadd.f32 %v2449, %v2450
        %v2476 = vrot.slane %v2475, 4
        %v2477 = vadd.f32 %v2475, %v2476
        %v2478 = vrot.slane %v2477, 2
        %v2479 = vadd.f32 %v2477, %v2478
        %v2480 = vrot.slane %v2479, 1
        %v2481 = vadd.f32 %v2479, %v2480
        %v2482 = vadd.f32 %v2451, %v2452
        %v2483 = vrot.slane %v2482, 4
        %v2484 = vadd.f32 %v2482, %v2483
        %v2485 = vrot.slane %v2484, 2
        %v2486 = vadd.f32 %v2484, %v2485
        %v2487 = vrot.slane %v2486, 1
        %v2488 = vadd.f32 %v2486, %v2487
        %v2489 = vadd.f32 %v2453, %v2454
        %v2490 = vrot.slane %v2489, 4
        %v2491 = vadd.f32 %v2489, %v2490
        %v2492 = vrot.slane %v2491, 2
        %v2493 = vadd.f32 %v2491, %v2492
        %v2494 = vrot.slane %v2493, 1
        %v2495 = vadd.f32 %v2493, %v2494
        %v2496 = vadd.f32 %v2455, %v2456
        %v2497 = vrot.slane %v2496, 4
        %v2498 = vadd.f32 %v2496, %v2497
        %v2499 = vrot.slane %v2498, 2
        %v2500 = vadd.f32 %v2498, %v2499
        %v2501 = vrot.slane %v2500, 1
        %v2502 = vadd.f32 %v2500, %v2501
        %v2503 = vadd.f32 %v2457, %v2458
        %v2504 = vrot.slane %v2503, 4
        %v2505 = vadd.f32 %v2503, %v2504
        %v2506 = vrot.slane %v2505, 2
        %v2507 = vadd.f32 %v2505, %v2506
        %v2508 = vrot.slane %v2507, 1
        %v2509 = vadd.f32 %v2507, %v2508
        %v2510 = vadd.f32 %v2459, %v2460
        %v2511 = vrot.slane %v2510, 4
        %v2512 = vadd.f32 %v2510, %v2511
        %v2513 = vrot.slane %v2512, 2
        %v2514 = vadd.f32 %v2512, %v2513
        %v2515 = vrot.slane %v2514, 1
        %v2516 = vadd.f32 %v2514, %v2515
        %v2517 = vlaneseq
        %v2518 = vshrl.u32 %v2517, 7
        %v2519 = vsub.s32 0, %v2518
        %v2520 = vrot.slane %v2272, %v2519
        %v2521 = vmul.f32 %v2467, %v2520
        %v2522 = vmul.f32 %v2474, %v2520
        %v2523 = vmul.f32 %v2481, %v2520
        %v2524 = vmul.f32 %v2488, %v2520
        %v2525 = vmul.f32 %v2495, %v2520
        %v2526 = vmul.f32 %v2502, %v2520
        %v2527 = vmul.f32 %v2509, %v2520
        %v2528 = vmul.f32 %v2516, %v2520
        %v2537 = vrot.slane %v2522, 7
        %v2538 = vsel %vm835, %v2537, %v2521
        %v2539 = vrot.slane %v2523, 6
        %v2540 = vsel %vm838, %v2539, %v2538
        %v2541 = vrot.slane %v2524, 5
        %v2542 = vsel %vm841, %v2541, %v2540
        %v2543 = vrot.slane %v2525, 4
        %v2544 = vsel %vm844, %v2543, %v2542
        %v2545 = vrot.slane %v2526, 3
        %v2546 = vsel %vm847, %v2545, %v2544
        %v2547 = vrot.slane %v2527, 2
        %v2548 = vsel %vm850, %v2547, %v2546
        %v2549 = vrot.slane %v2528, 1
        %v2550 = vsel %vm853, %v2549, %v2548
        %2552 = vst [vmem:[#allocation3 + $0x30] sm:$0xff] %v2550
        %v2553 = vld [vmem:[#allocation2 + $0x7] sm:$0x1]
        %v2554 = vld [vmem:[#allocation2 + $0x10] sm:$0x1]
        %v2555 = vld [vmem:[#allocation2 + $0x19] sm:$0x1]
        %v2556 = vadd.f32 %v2273, %v2553
        %v2557 = vadd.f32 %v861, %v2554
        %v2558 = vlaneseq
        %v2559 = vshrl.u32 %v2558, 7
        %v2560 = vsub.s32 0, %v2559
        %v2561 = vrot.slane %v2556, %v2560
        %v2562 = vsub.f32 %v499, %v2561
        %v2563 = vsub.f32 %v500, %v2561
        %v2564 = vand.u32 2147483647, %v2562
        %v2565 = vand.u32 2147483647, %v2563
        %v2566 = vsub.f32 1.0, %v2564
        %v2567 = vsub.f32 1.0, %v2565
        %v2568 = vmax.f32 %v2566, 0.0
        %v2569 = vmax.f32 %v2567, 0.0
        %v2570 = vlaneseq
        %v2571 = vshrl.u32 %v2570, 7
        %v2572 = vsub.s32 0, %v2571
        %v2573 = vrot.slane %v2557, %v2572
        %v2574 = vsub.f32 %v499, %v2573
        %v2575 = vsub.f32 %v500, %v2573
        %v2576 = vand.u32 2147483647, %v2574
        %v2577 = vand.u32 2147483647, %v2575
        %v2578 = vsub.f32 1.0, %v2576
        %v2579 = vsub.f32 1.0, %v2577
        %v2580 = vmax.f32 %v2578, 0.0
        %v2581 = vmax.f32 %v2579, 0.0
        %2582 = vmatprep.subr.mxu0 0.0
        %2583 = vmatpush1.msra.mxu0 0.0
        %2584 = vmatprep.subr.mxu0 0.0
        %2585 = vmatpush1.msra.mxu0 0.0
        %2586 = vmatprep.subr.mxu0 0.0
        %2587 = vmatpush1.msra.mxu0 0.0
        %2588 = vmatprep.subr.mxu0 0.0
        %2589 = vmatpush1.msra.mxu0 0.0
        %2590 = vmatprep.subr.mxu0 0.0
        %2591 = vmatpush1.msra.mxu0 0.0
        %2592 = vmatprep.subr.mxu0 0.0
        %2593 = vmatpush1.msra.mxu0 0.0
        %2594 = vmatprep.subr.mxu0 0.0
        %2595 = vmatpush1.msra.mxu0 0.0
        %2596 = vmatprep.subr.mxu0 0.0
        %2597 = vmatpush1.msra.mxu0 0.0
        %2598 = vmatprep.subr.mxu0 0.0
        %2599 = vmatpush1.msra.mxu0 0.0
        %2600 = vmatprep.subr.mxu0 0.0
        %2601 = vmatpush1.msra.mxu0 0.0
        %2602 = vmatprep.subr.mxu0 0.0
        %2603 = vmatpush1.msra.mxu0 0.0
        %2604 = vmatprep.subr.mxu0 0.0
        %2605 = vmatpush1.msra.mxu0 0.0
        %2606 = vmatprep.subr.mxu0 0.0
        %2607 = vmatpush1.msra.mxu0 0.0
        %2608 = vmatprep.subr.mxu0 0.0
        %2609 = vmatpush1.msra.mxu0 0.0
        %2610 = vmatprep.subr.mxu0 0.0
        %2611 = vmatpush1.msra.mxu0 %v2581
        %2612 = vmatprep.subr.mxu0 0.0
        %2613 = vmatpush1.msra.mxu0 %v2580
        %2614 = vmatprep.subr.mxu0 0.0
        %2615 = vmatpush2.msra.mxu0 0.0
        %2616 = vmatprep.subr.mxu0 0.0
        %2617 = vmatpush2.msra.mxu0 0.0
        %2618 = vmatprep.subr.mxu0 0.0
        %2619 = vmatpush2.msra.mxu0 0.0
        %2620 = vmatprep.subr.mxu0 0.0
        %2621 = vmatpush2.msra.mxu0 0.0
        %2622 = vmatprep.subr.mxu0 0.0
        %2623 = vmatpush2.msra.mxu0 0.0
        %2624 = vmatprep.subr.mxu0 0.0
        %2625 = vmatpush2.msra.mxu0 0.0
        %2626 = vmatprep.subr.mxu0 0.0
        %2627 = vmatpush2.msra.mxu0 0.0
        %2628 = vmatprep.subr.mxu0 0.0
        %2629 = vmatpush2.msra.mxu0 0.0
        %2630 = vmatprep.subr.mxu0 0.0
        %2631 = vmatpush2.msra.mxu0 0.0
        %2632 = vmatprep.subr.mxu0 0.0
        %2633 = vmatpush2.msra.mxu0 0.0
        %2634 = vmatprep.subr.mxu0 0.0
        %2635 = vmatpush2.msra.mxu0 0.0
        %2636 = vmatprep.subr.mxu0 0.0
        %2637 = vmatpush2.msra.mxu0 0.0
        %2638 = vmatprep.subr.mxu0 0.0
        %2639 = vmatpush2.msra.mxu0 0.0
        %2640 = vmatprep.subr.mxu0 0.0
        %2641 = vmatpush2.msra.mxu0 0.0
        %2642 = vmatprep.subr.mxu0 0.0
        %2643 = vmatpush2.msra.mxu0 0.0
        %2644 = vmatprep.subr.mxu0 0.0
        %2645 = vmatpush2.msra.mxu0 0.0
        %2646 = vmatprep.mubr.f32.mxu0 0.0
        %2647 = vmatmul.mubr.f32.gmra.mxu0 %v550
        %v2648 = vpop.f32.mrf.mxu0
        %v2649 = vadd.f32 0.0, %v2648
        %v2650 = vpop.f32.mrf.mxu0
        %2651 = vmatprep.mubr.f32.mxu0 0.0
        %2652 = vmatmul.mubr.f32.gmra.mxu0 %v553
        %v2653 = vpop.f32.mrf.mxu0
        %v2654 = vadd.f32 0.0, %v2653
        %v2655 = vpop.f32.mrf.mxu0
        %2656 = vmatprep.mubr.f32.mxu0 0.0
        %2657 = vmatmul.mubr.f32.gmra.mxu0 %v556
        %v2658 = vpop.f32.mrf.mxu0
        %v2659 = vadd.f32 0.0, %v2658
        %v2660 = vpop.f32.mrf.mxu0
        %2661 = vmatprep.mubr.f32.mxu0 0.0
        %2662 = vmatmul.mubr.f32.gmra.mxu0 %v559
        %v2663 = vpop.f32.mrf.mxu0
        %v2664 = vadd.f32 0.0, %v2663
        %v2665 = vpop.f32.mrf.mxu0
        %2666 = vmatprep.mubr.f32.mxu0 0.0
        %2667 = vmatmul.mubr.f32.gmra.mxu0 %v562
        %v2668 = vpop.f32.mrf.mxu0
        %v2669 = vadd.f32 0.0, %v2668
        %v2670 = vpop.f32.mrf.mxu0
        %2671 = vmatprep.mubr.f32.mxu0 0.0
        %2672 = vmatmul.mubr.f32.gmra.mxu0 %v565
        %v2673 = vpop.f32.mrf.mxu0
        %v2674 = vadd.f32 0.0, %v2673
        %v2675 = vpop.f32.mrf.mxu0
        %2676 = vmatprep.mubr.f32.mxu0 0.0
        %2677 = vmatmul.mubr.f32.gmra.mxu0 %v568
        %v2678 = vpop.f32.mrf.mxu0
        %v2679 = vadd.f32 0.0, %v2678
        %v2680 = vpop.f32.mrf.mxu0
        %2681 = vmatprep.mubr.f32.mxu0 0.0
        %2682 = vmatmul.mubr.f32.gmra.mxu0 %v571
        %v2683 = vpop.f32.mrf.mxu0
        %v2684 = vadd.f32 0.0, %v2683
        %v2685 = vpop.f32.mrf.mxu0
        %2686 = vmatprep.mubr.f32.mxu0 0.0
        %2687 = vmatmul.mubr.f32.gmra.mxu0 %v574
        %v2688 = vpop.f32.mrf.mxu0
        %v2689 = vadd.f32 0.0, %v2688
        %v2690 = vpop.f32.mrf.mxu0
        %2691 = vmatprep.mubr.f32.mxu0 0.0
        %2692 = vmatmul.mubr.f32.gmra.mxu0 %v577
        %v2693 = vpop.f32.mrf.mxu0
        %v2694 = vadd.f32 0.0, %v2693
        %v2695 = vpop.f32.mrf.mxu0
        %2696 = vmatprep.mubr.f32.mxu0 0.0
        %2697 = vmatmul.mubr.f32.gmra.mxu0 %v580
        %v2698 = vpop.f32.mrf.mxu0
        %v2699 = vadd.f32 0.0, %v2698
        %v2700 = vpop.f32.mrf.mxu0
        %2701 = vmatprep.mubr.f32.mxu0 0.0
        %2702 = vmatmul.mubr.f32.gmra.mxu0 %v583
        %v2703 = vpop.f32.mrf.mxu0
        %v2704 = vadd.f32 0.0, %v2703
        %v2705 = vpop.f32.mrf.mxu0
        %2706 = vmatprep.mubr.f32.mxu0 0.0
        %2707 = vmatmul.mubr.f32.gmra.mxu0 %v586
        %v2708 = vpop.f32.mrf.mxu0
        %v2709 = vadd.f32 0.0, %v2708
        %v2710 = vpop.f32.mrf.mxu0
        %2711 = vmatprep.mubr.f32.mxu0 0.0
        %2712 = vmatmul.mubr.f32.gmra.mxu0 %v589
        %v2713 = vpop.f32.mrf.mxu0
        %v2714 = vadd.f32 0.0, %v2713
        %v2715 = vpop.f32.mrf.mxu0
        %2716 = vmatprep.mubr.f32.mxu0 0.0
        %2717 = vmatmul.mubr.f32.gmra.mxu0 %v592
        %v2718 = vpop.f32.mrf.mxu0
        %v2719 = vadd.f32 0.0, %v2718
        %v2720 = vpop.f32.mrf.mxu0
        %2721 = vmatprep.mubr.f32.mxu0 0.0
        %2722 = vmatmul.mubr.f32.gmra.mxu0 %v595
        %v2723 = vpop.f32.mrf.mxu0
        %v2724 = vadd.f32 0.0, %v2723
        %v2725 = vpop.f32.mrf.mxu0
        %2726 = vdwg.mxu0
        %v2727 = vmul.f32 %v2649, %v2568
        %v2728 = vmul.f32 %v2654, %v2569
        %v2729 = vmul.f32 %v2659, %v2568
        %v2730 = vmul.f32 %v2664, %v2569
        %v2731 = vmul.f32 %v2669, %v2568
        %v2732 = vmul.f32 %v2674, %v2569
        %v2733 = vmul.f32 %v2679, %v2568
        %v2734 = vmul.f32 %v2684, %v2569
        %v2735 = vmul.f32 %v2689, %v2568
        %v2736 = vmul.f32 %v2694, %v2569
        %v2737 = vmul.f32 %v2699, %v2568
        %v2738 = vmul.f32 %v2704, %v2569
        %v2739 = vmul.f32 %v2709, %v2568
        %v2740 = vmul.f32 %v2714, %v2569
        %v2741 = vmul.f32 %v2719, %v2568
        %v2742 = vmul.f32 %v2724, %v2569
        %v2743 = vadd.f32 %v2727, %v2728
        %v2744 = vrot.slane %v2743, 4
        %v2745 = vadd.f32 %v2743, %v2744
        %v2746 = vrot.slane %v2745, 2
        %v2747 = vadd.f32 %v2745, %v2746
        %v2748 = vrot.slane %v2747, 1
        %v2749 = vadd.f32 %v2747, %v2748
        %v2750 = vadd.f32 %v2729, %v2730
        %v2751 = vrot.slane %v2750, 4
        %v2752 = vadd.f32 %v2750, %v2751
        %v2753 = vrot.slane %v2752, 2
        %v2754 = vadd.f32 %v2752, %v2753
        %v2755 = vrot.slane %v2754, 1
        %v2756 = vadd.f32 %v2754, %v2755
        %v2757 = vadd.f32 %v2731, %v2732
        %v2758 = vrot.slane %v2757, 4
        %v2759 = vadd.f32 %v2757, %v2758
        %v2760 = vrot.slane %v2759, 2
        %v2761 = vadd.f32 %v2759, %v2760
        %v2762 = vrot.slane %v2761, 1
        %v2763 = vadd.f32 %v2761, %v2762
        %v2764 = vadd.f32 %v2733, %v2734
        %v2765 = vrot.slane %v2764, 4
        %v2766 = vadd.f32 %v2764, %v2765
        %v2767 = vrot.slane %v2766, 2
        %v2768 = vadd.f32 %v2766, %v2767
        %v2769 = vrot.slane %v2768, 1
        %v2770 = vadd.f32 %v2768, %v2769
        %v2771 = vadd.f32 %v2735, %v2736
        %v2772 = vrot.slane %v2771, 4
        %v2773 = vadd.f32 %v2771, %v2772
        %v2774 = vrot.slane %v2773, 2
        %v2775 = vadd.f32 %v2773, %v2774
        %v2776 = vrot.slane %v2775, 1
        %v2777 = vadd.f32 %v2775, %v2776
        %v2778 = vadd.f32 %v2737, %v2738
        %v2779 = vrot.slane %v2778, 4
        %v2780 = vadd.f32 %v2778, %v2779
        %v2781 = vrot.slane %v2780, 2
        %v2782 = vadd.f32 %v2780, %v2781
        %v2783 = vrot.slane %v2782, 1
        %v2784 = vadd.f32 %v2782, %v2783
        %v2785 = vadd.f32 %v2739, %v2740
        %v2786 = vrot.slane %v2785, 4
        %v2787 = vadd.f32 %v2785, %v2786
        %v2788 = vrot.slane %v2787, 2
        %v2789 = vadd.f32 %v2787, %v2788
        %v2790 = vrot.slane %v2789, 1
        %v2791 = vadd.f32 %v2789, %v2790
        %v2792 = vadd.f32 %v2741, %v2742
        %v2793 = vrot.slane %v2792, 4
        %v2794 = vadd.f32 %v2792, %v2793
        %v2795 = vrot.slane %v2794, 2
        %v2796 = vadd.f32 %v2794, %v2795
        %v2797 = vrot.slane %v2796, 1
        %v2798 = vadd.f32 %v2796, %v2797
        %v2799 = vlaneseq
        %v2800 = vshrl.u32 %v2799, 7
        %v2801 = vsub.s32 0, %v2800
        %v2802 = vrot.slane %v2555, %v2801
        %v2803 = vmul.f32 %v2749, %v2802
        %v2804 = vmul.f32 %v2756, %v2802
        %v2805 = vmul.f32 %v2763, %v2802
        %v2806 = vmul.f32 %v2770, %v2802
        %v2807 = vmul.f32 %v2777, %v2802
        %v2808 = vmul.f32 %v2784, %v2802
        %v2809 = vmul.f32 %v2791, %v2802
        %v2810 = vmul.f32 %v2798, %v2802
        %v2819 = vrot.slane %v2804, 7
        %v2820 = vsel %vm835, %v2819, %v2803
        %v2821 = vrot.slane %v2805, 6
        %v2822 = vsel %vm838, %v2821, %v2820
        %v2823 = vrot.slane %v2806, 5
        %v2824 = vsel %vm841, %v2823, %v2822
        %v2825 = vrot.slane %v2807, 4
        %v2826 = vsel %vm844, %v2825, %v2824
        %v2827 = vrot.slane %v2808, 3
        %v2828 = vsel %vm847, %v2827, %v2826
        %v2829 = vrot.slane %v2809, 2
        %v2830 = vsel %vm850, %v2829, %v2828
        %v2831 = vrot.slane %v2810, 1
        %v2832 = vsel %vm853, %v2831, %v2830
        %2834 = vst [vmem:[#allocation3 + $0x38] sm:$0xff] %v2832
        %v2835 = vld [vmem:[#allocation2 + $0x8] sm:$0x1]
        %v2836 = vld [vmem:[#allocation2 + $0x11] sm:$0x1]
        %v2837 = vld [vmem:[#allocation2 + $0x1a] sm:$0x1]
        %v2838 = vadd.f32 %v2273, %v2835
        %v2839 = vadd.f32 %v1144, %v2836
        %v2840 = vlaneseq
        %v2841 = vshrl.u32 %v2840, 7
        %v2842 = vsub.s32 0, %v2841
        %v2843 = vrot.slane %v2838, %v2842
        %v2844 = vsub.f32 %v499, %v2843
        %v2845 = vsub.f32 %v500, %v2843
        %v2846 = vand.u32 2147483647, %v2844
        %v2847 = vand.u32 2147483647, %v2845
        %v2848 = vsub.f32 1.0, %v2846
        %v2849 = vsub.f32 1.0, %v2847
        %v2850 = vmax.f32 %v2848, 0.0
        %v2851 = vmax.f32 %v2849, 0.0
        %v2852 = vlaneseq
        %v2853 = vshrl.u32 %v2852, 7
        %v2854 = vsub.s32 0, %v2853
        %v2855 = vrot.slane %v2839, %v2854
        %v2856 = vsub.f32 %v499, %v2855
        %v2857 = vsub.f32 %v500, %v2855
        %v2858 = vand.u32 2147483647, %v2856
        %v2859 = vand.u32 2147483647, %v2857
        %v2860 = vsub.f32 1.0, %v2858
        %v2861 = vsub.f32 1.0, %v2859
        %v2862 = vmax.f32 %v2860, 0.0
        %v2863 = vmax.f32 %v2861, 0.0
        %2864 = vmatprep.subr.mxu0 0.0
        %2865 = vmatpush1.msra.mxu0 0.0
        %2866 = vmatprep.subr.mxu0 0.0
        %2867 = vmatpush1.msra.mxu0 0.0
        %2868 = vmatprep.subr.mxu0 0.0
        %2869 = vmatpush1.msra.mxu0 0.0
        %2870 = vmatprep.subr.mxu0 0.0
        %2871 = vmatpush1.msra.mxu0 0.0
        %2872 = vmatprep.subr.mxu0 0.0
        %2873 = vmatpush1.msra.mxu0 0.0
        %2874 = vmatprep.subr.mxu0 0.0
        %2875 = vmatpush1.msra.mxu0 0.0
        %2876 = vmatprep.subr.mxu0 0.0
        %2877 = vmatpush1.msra.mxu0 0.0
        %2878 = vmatprep.subr.mxu0 0.0
        %2879 = vmatpush1.msra.mxu0 0.0
        %2880 = vmatprep.subr.mxu0 0.0
        %2881 = vmatpush1.msra.mxu0 0.0
        %2882 = vmatprep.subr.mxu0 0.0
        %2883 = vmatpush1.msra.mxu0 0.0
        %2884 = vmatprep.subr.mxu0 0.0
        %2885 = vmatpush1.msra.mxu0 0.0
        %2886 = vmatprep.subr.mxu0 0.0
        %2887 = vmatpush1.msra.mxu0 0.0
        %2888 = vmatprep.subr.mxu0 0.0
        %2889 = vmatpush1.msra.mxu0 0.0
        %2890 = vmatprep.subr.mxu0 0.0
        %2891 = vmatpush1.msra.mxu0 0.0
        %2892 = vmatprep.subr.mxu0 0.0
        %2893 = vmatpush1.msra.mxu0 %v2863
        %2894 = vmatprep.subr.mxu0 0.0
        %2895 = vmatpush1.msra.mxu0 %v2862
        %2896 = vmatprep.subr.mxu0 0.0
        %2897 = vmatpush2.msra.mxu0 0.0
        %2898 = vmatprep.subr.mxu0 0.0
        %2899 = vmatpush2.msra.mxu0 0.0
        %2900 = vmatprep.subr.mxu0 0.0
        %2901 = vmatpush2.msra.mxu0 0.0
        %2902 = vmatprep.subr.mxu0 0.0
        %2903 = vmatpush2.msra.mxu0 0.0
        %2904 = vmatprep.subr.mxu0 0.0
        %2905 = vmatpush2.msra.mxu0 0.0
        %2906 = vmatprep.subr.mxu0 0.0
        %2907 = vmatpush2.msra.mxu0 0.0
        %2908 = vmatprep.subr.mxu0 0.0
        %2909 = vmatpush2.msra.mxu0 0.0
        %2910 = vmatprep.subr.mxu0 0.0
        %2911 = vmatpush2.msra.mxu0 0.0
        %2912 = vmatprep.subr.mxu0 0.0
        %2913 = vmatpush2.msra.mxu0 0.0
        %2914 = vmatprep.subr.mxu0 0.0
        %2915 = vmatpush2.msra.mxu0 0.0
        %2916 = vmatprep.subr.mxu0 0.0
        %2917 = vmatpush2.msra.mxu0 0.0
        %2918 = vmatprep.subr.mxu0 0.0
        %2919 = vmatpush2.msra.mxu0 0.0
        %2920 = vmatprep.subr.mxu0 0.0
        %2921 = vmatpush2.msra.mxu0 0.0
        %2922 = vmatprep.subr.mxu0 0.0
        %2923 = vmatpush2.msra.mxu0 0.0
        %2924 = vmatprep.subr.mxu0 0.0
        %2925 = vmatpush2.msra.mxu0 0.0
        %2926 = vmatprep.subr.mxu0 0.0
        %2927 = vmatpush2.msra.mxu0 0.0
        %2928 = vmatprep.mubr.f32.mxu0 0.0
        %2929 = vmatmul.mubr.f32.gmra.mxu0 %v550
        %v2930 = vpop.f32.mrf.mxu0
        %v2931 = vadd.f32 0.0, %v2930
        %v2932 = vpop.f32.mrf.mxu0
        %2933 = vmatprep.mubr.f32.mxu0 0.0
        %2934 = vmatmul.mubr.f32.gmra.mxu0 %v553
        %v2935 = vpop.f32.mrf.mxu0
        %v2936 = vadd.f32 0.0, %v2935
        %v2937 = vpop.f32.mrf.mxu0
        %2938 = vmatprep.mubr.f32.mxu0 0.0
        %2939 = vmatmul.mubr.f32.gmra.mxu0 %v556
        %v2940 = vpop.f32.mrf.mxu0
        %v2941 = vadd.f32 0.0, %v2940
        %v2942 = vpop.f32.mrf.mxu0
        %2943 = vmatprep.mubr.f32.mxu0 0.0
        %2944 = vmatmul.mubr.f32.gmra.mxu0 %v559
        %v2945 = vpop.f32.mrf.mxu0
        %v2946 = vadd.f32 0.0, %v2945
        %v2947 = vpop.f32.mrf.mxu0
        %2948 = vmatprep.mubr.f32.mxu0 0.0
        %2949 = vmatmul.mubr.f32.gmra.mxu0 %v562
        %v2950 = vpop.f32.mrf.mxu0
        %v2951 = vadd.f32 0.0, %v2950
        %v2952 = vpop.f32.mrf.mxu0
        %2953 = vmatprep.mubr.f32.mxu0 0.0
        %2954 = vmatmul.mubr.f32.gmra.mxu0 %v565
        %v2955 = vpop.f32.mrf.mxu0
        %v2956 = vadd.f32 0.0, %v2955
        %v2957 = vpop.f32.mrf.mxu0
        %2958 = vmatprep.mubr.f32.mxu0 0.0
        %2959 = vmatmul.mubr.f32.gmra.mxu0 %v568
        %v2960 = vpop.f32.mrf.mxu0
        %v2961 = vadd.f32 0.0, %v2960
        %v2962 = vpop.f32.mrf.mxu0
        %2963 = vmatprep.mubr.f32.mxu0 0.0
        %2964 = vmatmul.mubr.f32.gmra.mxu0 %v571
        %v2965 = vpop.f32.mrf.mxu0
        %v2966 = vadd.f32 0.0, %v2965
        %v2967 = vpop.f32.mrf.mxu0
        %2968 = vmatprep.mubr.f32.mxu0 0.0
        %2969 = vmatmul.mubr.f32.gmra.mxu0 %v574
        %v2970 = vpop.f32.mrf.mxu0
        %v2971 = vadd.f32 0.0, %v2970
        %v2972 = vpop.f32.mrf.mxu0
        %2973 = vmatprep.mubr.f32.mxu0 0.0
        %2974 = vmatmul.mubr.f32.gmra.mxu0 %v577
        %v2975 = vpop.f32.mrf.mxu0
        %v2976 = vadd.f32 0.0, %v2975
        %v2977 = vpop.f32.mrf.mxu0
        %2978 = vmatprep.mubr.f32.mxu0 0.0
        %2979 = vmatmul.mubr.f32.gmra.mxu0 %v580
        %v2980 = vpop.f32.mrf.mxu0
        %v2981 = vadd.f32 0.0, %v2980
        %v2982 = vpop.f32.mrf.mxu0
        %2983 = vmatprep.mubr.f32.mxu0 0.0
        %2984 = vmatmul.mubr.f32.gmra.mxu0 %v583
        %v2985 = vpop.f32.mrf.mxu0
        %v2986 = vadd.f32 0.0, %v2985
        %v2987 = vpop.f32.mrf.mxu0
        %2988 = vmatprep.mubr.f32.mxu0 0.0
        %2989 = vmatmul.mubr.f32.gmra.mxu0 %v586
        %v2990 = vpop.f32.mrf.mxu0
        %v2991 = vadd.f32 0.0, %v2990
        %v2992 = vpop.f32.mrf.mxu0
        %2993 = vmatprep.mubr.f32.mxu0 0.0
        %2994 = vmatmul.mubr.f32.gmra.mxu0 %v589
        %v2995 = vpop.f32.mrf.mxu0
        %v2996 = vadd.f32 0.0, %v2995
        %v2997 = vpop.f32.mrf.mxu0
        %2998 = vmatprep.mubr.f32.mxu0 0.0
        %2999 = vmatmul.mubr.f32.gmra.mxu0 %v592
        %v3000 = vpop.f32.mrf.mxu0
        %v3001 = vadd.f32 0.0, %v3000
        %v3002 = vpop.f32.mrf.mxu0
        %3003 = vmatprep.mubr.f32.mxu0 0.0
        %3004 = vmatmul.mubr.f32.gmra.mxu0 %v595
        %v3005 = vpop.f32.mrf.mxu0
        %v3006 = vadd.f32 0.0, %v3005
        %v3007 = vpop.f32.mrf.mxu0
        %3008 = vdwg.mxu0
        %v3009 = vmul.f32 %v2931, %v2850
        %v3010 = vmul.f32 %v2936, %v2851
        %v3011 = vmul.f32 %v2941, %v2850
        %v3012 = vmul.f32 %v2946, %v2851
        %v3013 = vmul.f32 %v2951, %v2850
        %v3014 = vmul.f32 %v2956, %v2851
        %v3015 = vmul.f32 %v2961, %v2850
        %v3016 = vmul.f32 %v2966, %v2851
        %v3017 = vmul.f32 %v2971, %v2850
        %v3018 = vmul.f32 %v2976, %v2851
        %v3019 = vmul.f32 %v2981, %v2850
        %v3020 = vmul.f32 %v2986, %v2851
        %v3021 = vmul.f32 %v2991, %v2850
        %v3022 = vmul.f32 %v2996, %v2851
        %v3023 = vmul.f32 %v3001, %v2850
        %v3024 = vmul.f32 %v3006, %v2851
        %v3025 = vadd.f32 %v3009, %v3010
        %v3026 = vrot.slane %v3025, 4
        %v3027 = vadd.f32 %v3025, %v3026
        %v3028 = vrot.slane %v3027, 2
        %v3029 = vadd.f32 %v3027, %v3028
        %v3030 = vrot.slane %v3029, 1
        %v3031 = vadd.f32 %v3029, %v3030
        %v3032 = vadd.f32 %v3011, %v3012
        %v3033 = vrot.slane %v3032, 4
        %v3034 = vadd.f32 %v3032, %v3033
        %v3035 = vrot.slane %v3034, 2
        %v3036 = vadd.f32 %v3034, %v3035
        %v3037 = vrot.slane %v3036, 1
        %v3038 = vadd.f32 %v3036, %v3037
        %v3039 = vadd.f32 %v3013, %v3014
        %v3040 = vrot.slane %v3039, 4
        %v3041 = vadd.f32 %v3039, %v3040
        %v3042 = vrot.slane %v3041, 2
        %v3043 = vadd.f32 %v3041, %v3042
        %v3044 = vrot.slane %v3043, 1
        %v3045 = vadd.f32 %v3043, %v3044
        %v3046 = vadd.f32 %v3015, %v3016
        %v3047 = vrot.slane %v3046, 4
        %v3048 = vadd.f32 %v3046, %v3047
        %v3049 = vrot.slane %v3048, 2
        %v3050 = vadd.f32 %v3048, %v3049
        %v3051 = vrot.slane %v3050, 1
        %v3052 = vadd.f32 %v3050, %v3051
        %v3053 = vadd.f32 %v3017, %v3018
        %v3054 = vrot.slane %v3053, 4
        %v3055 = vadd.f32 %v3053, %v3054
        %v3056 = vrot.slane %v3055, 2
        %v3057 = vadd.f32 %v3055, %v3056
        %v3058 = vrot.slane %v3057, 1
        %v3059 = vadd.f32 %v3057, %v3058
        %v3060 = vadd.f32 %v3019, %v3020
        %v3061 = vrot.slane %v3060, 4
        %v3062 = vadd.f32 %v3060, %v3061
        %v3063 = vrot.slane %v3062, 2
        %v3064 = vadd.f32 %v3062, %v3063
        %v3065 = vrot.slane %v3064, 1
        %v3066 = vadd.f32 %v3064, %v3065
        %v3067 = vadd.f32 %v3021, %v3022
        %v3068 = vrot.slane %v3067, 4
        %v3069 = vadd.f32 %v3067, %v3068
        %v3070 = vrot.slane %v3069, 2
        %v3071 = vadd.f32 %v3069, %v3070
        %v3072 = vrot.slane %v3071, 1
        %v3073 = vadd.f32 %v3071, %v3072
        %v3074 = vadd.f32 %v3023, %v3024
        %v3075 = vrot.slane %v3074, 4
        %v3076 = vadd.f32 %v3074, %v3075
        %v3077 = vrot.slane %v3076, 2
        %v3078 = vadd.f32 %v3076, %v3077
        %v3079 = vrot.slane %v3078, 1
        %v3080 = vadd.f32 %v3078, %v3079
        %v3081 = vlaneseq
        %v3082 = vshrl.u32 %v3081, 7
        %v3083 = vsub.s32 0, %v3082
        %v3084 = vrot.slane %v2837, %v3083
        %v3085 = vmul.f32 %v3031, %v3084
        %v3086 = vmul.f32 %v3038, %v3084
        %v3087 = vmul.f32 %v3045, %v3084
        %v3088 = vmul.f32 %v3052, %v3084
        %v3089 = vmul.f32 %v3059, %v3084
        %v3090 = vmul.f32 %v3066, %v3084
        %v3091 = vmul.f32 %v3073, %v3084
        %v3092 = vmul.f32 %v3080, %v3084
        %v3101 = vrot.slane %v3086, 7
        %v3102 = vsel %vm835, %v3101, %v3085
        %v3103 = vrot.slane %v3087, 6
        %v3104 = vsel %vm838, %v3103, %v3102
        %v3105 = vrot.slane %v3088, 5
        %v3106 = vsel %vm841, %v3105, %v3104
        %v3107 = vrot.slane %v3089, 4
        %v3108 = vsel %vm844, %v3107, %v3106
        %v3109 = vrot.slane %v3090, 3
        %v3110 = vsel %vm847, %v3109, %v3108
        %v3111 = vrot.slane %v3091, 2
        %v3112 = vsel %vm850, %v3111, %v3110
        %v3113 = vrot.slane %v3092, 1
        %v3114 = vsel %vm853, %v3113, %v3112
        %3116 = vst [vmem:[#allocation3 + $0x40] sm:$0xff] %v3114
        %v3117 = vld [vmem:[%s4] sm:$0xff]
        %v3118 = vld [vmem:[#allocation3] sm:$0xff]
        %v3119 = vld [vmem:[#allocation3 + $0x8] sm:$0xff]
        %v3120 = vld [vmem:[#allocation3 + $0x10] sm:$0xff]
        %v3121 = vld [vmem:[#allocation3 + $0x18] sm:$0xff]
        %v3122 = vld [vmem:[#allocation3 + $0x20] sm:$0xff]
        %v3123 = vld [vmem:[#allocation3 + $0x28] sm:$0xff]
        %v3124 = vld [vmem:[#allocation3 + $0x30] sm:$0xff]
        %v3125 = vld [vmem:[#allocation3 + $0x38] sm:$0xff]
        %v3126 = vld [vmem:[#allocation3 + $0x40] sm:$0xff]
        %v3127 = vld [vmem:[%s5] sm:$0xff]
        %3129 = vset.pattern.permute.xlu0 0
        %3130 = vperm.xlu0 %3129, %v3127
        %v3131 = vpop.permute.xlu0 %3130
        %vm3133 = vcmask 588800
        %v3135 = vsel %vm3133, %v3117, 0
        %3137 = vmatprep.subr.mxu0 0.0
        %3138 = vmatpush1.msra.mxu0 0.0
        %3139 = vmatprep.subr.mxu0 0.0
        %3140 = vmatpush1.msra.mxu0 0.0
        %3141 = vmatprep.subr.mxu0 0.0
        %3142 = vmatpush1.msra.mxu0 0.0
        %3143 = vmatprep.subr.mxu0 0.0
        %3144 = vmatpush1.msra.mxu0 0.0
        %3145 = vmatprep.subr.mxu0 0.0
        %3146 = vmatpush1.msra.mxu0 0.0
        %3147 = vmatprep.subr.mxu0 0.0
        %3148 = vmatpush1.msra.mxu0 0.0
        %3149 = vmatprep.subr.mxu0 0.0
        %3150 = vmatpush1.msra.mxu0 0.0
        %3151 = vmatprep.subr.mxu0 0.0
        %3152 = vmatpush1.msra.mxu0 %v3126
        %3153 = vmatprep.subr.mxu0 0.0
        %3154 = vmatpush1.msra.mxu0 %v3125
        %3155 = vmatprep.subr.mxu0 0.0
        %3156 = vmatpush1.msra.mxu0 %v3124
        %3157 = vmatprep.subr.mxu0 0.0
        %3158 = vmatpush1.msra.mxu0 %v3123
        %3159 = vmatprep.subr.mxu0 0.0
        %3160 = vmatpush1.msra.mxu0 %v3122
        %3161 = vmatprep.subr.mxu0 0.0
        %3162 = vmatpush1.msra.mxu0 %v3121
        %3163 = vmatprep.subr.mxu0 0.0
        %3164 = vmatpush1.msra.mxu0 %v3120
        %3165 = vmatprep.subr.mxu0 0.0
        %3166 = vmatpush1.msra.mxu0 %v3119
        %3167 = vmatprep.subr.mxu0 0.0
        %3168 = vmatpush1.msra.mxu0 %v3118
        %3169 = vmatprep.subr.mxu0 0.0
        %3170 = vmatpush2.msra.mxu0 0.0
        %3171 = vmatprep.subr.mxu0 0.0
        %3172 = vmatpush2.msra.mxu0 0.0
        %3173 = vmatprep.subr.mxu0 0.0
        %3174 = vmatpush2.msra.mxu0 0.0
        %3175 = vmatprep.subr.mxu0 0.0
        %3176 = vmatpush2.msra.mxu0 0.0
        %3177 = vmatprep.subr.mxu0 0.0
        %3178 = vmatpush2.msra.mxu0 0.0
        %3179 = vmatprep.subr.mxu0 0.0
        %3180 = vmatpush2.msra.mxu0 0.0
        %3181 = vmatprep.subr.mxu0 0.0
        %3182 = vmatpush2.msra.mxu0 0.0
        %3183 = vmatprep.subr.mxu0 0.0
        %3184 = vmatpush2.msra.mxu0 0.0
        %3185 = vmatprep.subr.mxu0 0.0
        %3186 = vmatpush2.msra.mxu0 0.0
        %3187 = vmatprep.subr.mxu0 0.0
        %3188 = vmatpush2.msra.mxu0 0.0
        %3189 = vmatprep.subr.mxu0 0.0
        %3190 = vmatpush2.msra.mxu0 0.0
        %3191 = vmatprep.subr.mxu0 0.0
        %3192 = vmatpush2.msra.mxu0 0.0
        %3193 = vmatprep.subr.mxu0 0.0
        %3194 = vmatpush2.msra.mxu0 0.0
        %3195 = vmatprep.subr.mxu0 0.0
        %3196 = vmatpush2.msra.mxu0 0.0
        %3197 = vmatprep.subr.mxu0 0.0
        %3198 = vmatpush2.msra.mxu0 0.0
        %3199 = vmatprep.subr.mxu0 0.0
        %3200 = vmatpush2.msra.mxu0 0.0
        %3201 = vmatprep.mubr.f32.mxu0 0.0
        %3202 = vmatmul.mubr.f32.gmra.mxu0 %v3135
        %v3203 = vpop.f32.mrf.mxu0
        %v3204 = vadd.f32 %v3131, %v3203
        %v3205 = vpop.f32.mrf.mxu0
        %3206 = vdwg.mxu0
        %3207 = vst [vmem:[%s273] sm:$0xff] %v3204
        %s3208 = sand.u32 %s178, 1
        %s3209 = scalar_lea.sflag [#allocation5], %s3208
        %s3210 = sand.u32 %s178, 1
        %s3211 = smul.addr %s3210, 8
        %s3212 = scalar_lea.vmem [#allocation4], %s3211
        // Predicated region
        $region45: #{tpu_custom_call.1} parent=43 // pred_check
          %p3213 = pneg %p188
        $region46: #{tpu_custom_call.1} parent=43 // pred_check_branch
          %3215 = sbr.rel (%p3213) target = $region48
        $region47: #{tpu_custom_call.1} parent=43 // pred_region
          %s3217 = ssub.s32 128, 128
          %3218 = vsyncadd %s3209, %s3217
          %s3219 = smul.addr %s24, 2
          %s3220 = sadd.s32 %s25, %s3219
          %s3221 = smul.addr %s3220, 128
          %s3222 = scalar_lea.hbm %s6, %s3221
          %s3224 = sshll.u32 %s3212, 4
          %s3225 = int_to_ptr.vmem [resolvable:$true] %s3224
          %3227 = dma.vmem_to_hbm [thread:$0]  %s3225, 128, %s3222, %s3209
        $region48: #{tpu_custom_call.1} parent=43 // pred_fallthru
          _
      $region44: #{tpu_custom_call.1} parent=5 // pred_fallthru
        _
      %p3228 = scmp.le.s32.totalorder 2, %s15
      // Predicated region
      $region49: #{tpu_custom_call.1} parent=5 // pred_check
        %p3229 = pneg %p3228
      $region50: #{tpu_custom_call.1} parent=5 // pred_check_branch
        %3231 = sbr.rel (%p3229) target = $region52
      $region51: #{tpu_custom_call.1} parent=5 // pred_region
        %s3232 = ssub.s32 %s15, 2
        // Predicated region
        $region53: #{tpu_custom_call.1} parent=51 // pred_check
          %p3233 = pneg %p194
        $region54: #{tpu_custom_call.1} parent=51 // pred_check_branch
          %3235 = sbr.rel (%p3233) target = $region56
        $region55: #{tpu_custom_call.1} parent=51 // pred_region
          %s3236 = sand.u32 %s179, 1
          %s3237 = scalar_lea.sflag [#allocation5], %s3236
          %s3238 = sand.u32 %s179, 1
          %s3239 = smul.addr %s3238, 8
          %s3240 = scalar_lea.vmem [#allocation4], %s3239
          %3241 = dma.done %s3237, 128
        $region56: #{tpu_custom_call.1} parent=51 // pred_fallthru
          _
      $region52: #{tpu_custom_call.1} parent=5 // pred_fallthru
        _
    $region6: #{tpu_custom_call.1} parent=1 // loop_footer
      %s19 = sadd.s32 1, %s15
    $region7: #{tpu_custom_call.1} parent=1 // loop_footer_branch
      %14 = sbr.rel target = $region3
    $region8: #{tpu_custom_call.1} parent=1 // loop_exit
      _
    %3242 = vsyncpa [#allocation5], 1
    %s3243 = scalar_lea.sflag [#allocation5], 1
    %3244 = vsyncpa %s3243, 1

</llo_original>
